<compile_context>
chip_gen: v6e
topology: v6e:2x2x1
jax: 0.10.0
libtpu: 0.0.40
codegen_flags: <defaults>
</compile_context>

<pallas_src>
import functools
import math

import jax
import jax.numpy as jnp
from jax.experimental import pallas as pl
from jax.experimental.pallas import tpu as pltpu

# TODO(synk): dropout layers are treated as inference-mode identity (no RNG masking).
# TODO(synk): for very large D / d_ff on v7x (64 MiB VMEM) the resident bf16 weights
#             should be single-buffered (pipeline_mode=pl.Buffered(1)) or streamed
#             from HBM (memory_space=pl.ANY + pltpu.emit_pipeline); unnecessary here.
# TODO(synk): for very long L, tile the key axis with an online-softmax inner loop
#             and row-chunk the qi==0 QKV projection to bound VMEM independent of L.

_EPS = 1e-6
_NEG_INF = -1e18


def _layer_norm(x, gamma, beta):
    # x: (R, D) f32; gamma/beta: (1, D) f32. Matches torch.nn.LayerNorm (biased var).
    mean = jnp.mean(x, axis=-1, keepdims=True)
    var = jnp.mean((x - mean) ** 2, axis=-1, keepdims=True)
    return (x - mean) * jax.lax.rsqrt(var + _EPS) * gamma + beta


def encoder_layer_kernel(
    x_ref, bias_ref,
    g1_ref, be1_ref,
    wqkv_ref, bqkv_ref, wo_ref, bo_ref,
    g2_ref, be2_ref,
    w1_ref, b1_ref, w2_ref, b2_ref,
    o_ref,
    q_scr, k_scr, v_scr,
    *, heads,
):
    qi = pl.program_id(1)
    D = x_ref.shape[-1]
    dh = D // heads
    tl = o_ref.shape[1]

    # ---- Once per batch row (qi == 0): LayerNorm1 + fused QKV projection over
    #      the full sequence, cached in bf16 VMEM scratch for all query blocks.
    @pl.when(qi == 0)
    def _():
        x_full = x_ref[0].astype(jnp.float32)                      # (Lp, D)
        ln1 = _layer_norm(x_full, g1_ref[...], be1_ref[...])
        qkv = jnp.dot(ln1.astype(jnp.bfloat16), wqkv_ref[...],
                      preferred_element_type=jnp.float32) + bqkv_ref[...]
        q_scr[...] = qkv[:, :D].astype(jnp.bfloat16)               # 1/sqrt(dh) folded in
        k_scr[...] = qkv[:, D:2 * D].astype(jnp.bfloat16)
        v_scr[...] = qkv[:, 2 * D:].astype(jnp.bfloat16)

    row0 = pl.multiple_of(qi * tl, tl)
    x_q = x_ref[0, pl.ds(row0, tl), :].astype(jnp.float32)         # (tl, D)
    bias = bias_ref[0].astype(jnp.float32)                         # (tl, Lp) additive

    # ---- Per-head attention; softmax normalization deferred to the context.
    ctx_heads = []
    for h in range(heads):                      # heads is small & static -> unrolled
        lo = h * dh
        qh = q_scr[pl.ds(row0, tl), lo:lo + dh]                    # (tl, dh) bf16
        kh = k_scr[:, lo:lo + dh]                                  # (Lp, dh) bf16
        vh = v_scr[:, lo:lo + dh]                                  # (Lp, dh) bf16
        scores = jax.lax.dot_general(                              # (tl, Lp) f32
            qh, kh, (((1,), (1,)), ((), ())),
            preferred_element_type=jnp.float32) + bias
        m = jnp.max(scores, axis=-1, keepdims=True)
        e = jnp.exp(scores - m)
        denom = jnp.sum(e, axis=-1, keepdims=True)
        ctx_h = jnp.dot(e.astype(jnp.bfloat16), vh,                # (tl, dh) f32
                        preferred_element_type=jnp.float32)
        ctx_heads.append(ctx_h * pl.reciprocal(denom, approx=True))

    if dh % 128 == 0:
        # Lane-aligned head concat + one full-K output projection.
        ctx = jnp.concatenate(ctx_heads, axis=-1).astype(jnp.bfloat16)   # (tl, D)
        context = jnp.dot(ctx, wo_ref[...], preferred_element_type=jnp.float32)
    else:
        # Fallback: accumulate each head through its row-slice of Wo.
        context = None
        for h, ctx_h in enumerate(ctx_heads):
            lo = h * dh
            term = jnp.dot(ctx_h.astype(jnp.bfloat16), wo_ref[lo:lo + dh, :],
                           preferred_element_type=jnp.float32)
            context = term if context is None else context + term
    context = context + bo_ref[...]

    # ---- residual (dropout = identity) ----
    out = context + x_q

    # ---- PositionwiseFeedForward: out + W2(relu(W1(LN(out)) + b1)) + b2 ----
    ln2 = _layer_norm(out, g2_ref[...], be2_ref[...])
    inter = jnp.dot(ln2.astype(jnp.bfloat16), w1_ref[...],
                    preferred_element_type=jnp.float32) + b1_ref[...]
    inter = jnp.maximum(inter, 0.0)
    ffn = jnp.dot(inter.astype(jnp.bfloat16), w2_ref[...],
                  preferred_element_type=jnp.float32) + b2_ref[...]

    o_ref[0] = (ffn + out).astype(o_ref.dtype)


def _vmem_limit_bytes(Lp, tl, D, d_ff):
    bf16, f32 = 2, 4
    weights = bf16 * (4 * D * D + 2 * D * d_ff)                  # Wqkv + Wo + W1 + W2
    biases = f32 * (8 * D + d_ff)
    io_blocks = bf16 * (Lp * D + tl * Lp) + f32 * tl * D         # x, bias, out tiles
    scratch = bf16 * 3 * Lp * D                                  # cached q/k/v
    temps = f32 * (5 * Lp * D + 3 * tl * Lp + 4 * tl * D + 2 * tl * d_ff)
    est = 2 * (weights + io_blocks) + biases + scratch + temps   # 2x: double buffering
    try:
        cap = int(pltpu.get_tpu_info().vmem_capacity_bytes * 0.85)
    except Exception:
        cap = 54 * (1 << 20)   # conservative: ~85% of v7x's 64 MiB per TensorCore
    return int(min(cap, max(32 * (1 << 20), 2 * est)))


def transformer_encoder_layer(x, mask, params, heads, q_block=256):
    """x: (B, L, D) float; mask: (B, L, L) int, nonzero == masked key position."""
    B, L, D = x.shape
    d_ff = params["w1"].shape[1]
    assert D % heads == 0
    dh = D // heads

    # Query-row tile. Default 256; v6e (128 MiB VMEM) can sweep up to 512,
    # keep 128-256 on v7x (64 MiB VMEM).
    if L <= q_block:
        tl, Lp = L, L
    else:
        tl = max(8, (q_block // 8) * 8)
        Lp = int(pl.cdiv(L, tl)) * tl
    nq = Lp // tl

    f32, bf16 = jnp.float32, jnp.bfloat16
    out_dtype = x.dtype

    # Mask -> additive bias once in the wrapper (bf16: half the DMA of int32,
    # no per-head select). Pad a non-divisible L; padded keys get -1e18.
    bias = jnp.where(mask != 0, jnp.float32(_NEG_INF), jnp.float32(0.0))
    xp = x
    if Lp != L:
        pad = Lp - L
        xp = jnp.pad(x, ((0, 0), (0, pad), (0, 0)))
        bias = jnp.pad(bias, ((0, 0), (0, pad), (0, pad)), constant_values=_NEG_INF)
    xp = xp.astype(bf16)
    bias = bias.astype(bf16)

    # Fold 1/sqrt(dh) into Wq/bq; fuse Wq|Wk|Wv into one (D, 3D) bf16 matrix.
    scale = jnp.float32(1.0 / math.sqrt(dh))
    wqkv = jnp.concatenate(
        [params["wq"].astype(f32) * scale,
         params["wk"].astype(f32),
         params["wv"].astype(f32)], axis=1).astype(bf16)
    bqkv = jnp.concatenate(
        [params["bq"].astype(f32) * scale,
         params["bk"].astype(f32),
         params["bv"].astype(f32)], axis=1)

    args = (
        xp, bias,
        params["g1"].astype(f32), params["be1"].astype(f32),
        wqkv, bqkv,
        params["wo"].astype(bf16), params["bo"].astype(f32),
        params["g2"].astype(f32), params["be2"].astype(f32),
        params["w1"].astype(bf16), params["b1"].astype(f32),
        params["w2"].astype(bf16), params["b2"].astype(f32),
    )

    def shared(shape):
        zeros = (0,) * len(shape)
        return pl.BlockSpec(shape, lambda b, qi: zeros)

    in_specs = [
        pl.BlockSpec((1, Lp, D), lambda b, qi: (b, 0, 0)),    # x (full sequence, bf16)
        pl.BlockSpec((1, tl, Lp), lambda b, qi: (b, qi, 0)),  # additive mask bias rows
        shared((1, D)), shared((1, D)),                       # ln1 gamma / beta
        shared((D, 3 * D)), shared((1, 3 * D)),               # fused Wqkv (scaled), bqkv
        shared((D, D)), shared((1, D)),                       # Wo, bo
        shared((1, D)), shared((1, D)),                       # ln2 gamma / beta
        shared((D, d_ff)), shared((1, d_ff)),                 # W1, b1
        shared((d_ff, D)), shared((1, D)),                    # W2, b2
    ]

    kernel = functools.partial(encoder_layer_kernel, heads=heads)
    out = pl.pallas_call(
        kernel,
        out_shape=jax.ShapeDtypeStruct((B, Lp, D), out_dtype),
        grid=(B, nq),
        in_specs=in_specs,
        out_specs=pl.BlockSpec((1, tl, D), lambda b, qi: (b, qi, 0)),
        scratch_shapes=[pltpu.VMEM((Lp, D), jnp.bfloat16)] * 3,   # q / k / v cache
        compiler_params=pltpu.CompilerParams(
            dimension_semantics=("parallel", "arbitrary"),
            vmem_limit_bytes=_vmem_limit_bytes(Lp, tl, D, d_ff)),
    )(*args)
    if Lp != L:
        out = out[:, :L, :]
    return out


def reference(x, mask, params, heads):
    """Pure-JAX f32 reference mirroring the PyTorch forward (eval mode)."""
    B, L, D = x.shape
    dh = D // heads

    def ln(y, g, b):
        mu = jnp.mean(y, axis=-1, keepdims=True)
        var = jnp.mean((y - mu) ** 2, axis=-1, keepdims=True)
        return (y - mu) / jnp.sqrt(var + _EPS) * g + b

    ln1 = ln(x, params["g1"], params["be1"])
    q = ln1 @ params["wq"] + params["bq"]
    k = ln1 @ params["wk"] + params["bk"]
    v = ln1 @ params["wv"] + params["bv"]
    q = q.reshape(B, L, heads, dh).transpose(0, 2, 1, 3) / math.sqrt(dh)
    k = k.reshape(B, L, heads, dh).transpose(0, 2, 1, 3)
    v = v.reshape(B, L, heads, dh).transpose(0, 2, 1, 3)
    scores = jnp.einsum("bhqd,bhkd->bhqk", q, k)
    scores = jnp.where((mask != 0)[:, None, :, :], _NEG_INF, scores)
    attn = jax.nn.softmax(scores, axis=-1)
    ctx = jnp.einsum("bhqk,bhkd->bhqd", attn, v).transpose(0, 2, 1, 3).reshape(B, L, D)
    context = ctx @ params["wo"] + params["bo"]
    out = context + x
    ln2 = ln(out, params["g2"], params["be2"])
    inter = jax.nn.relu(ln2 @ params["w1"] + params["b1"])
    return inter @ params["w2"] + params["b2"] + out


def make_params(key, d_model, d_ff):
    ks = jax.random.split(key, 8)
    s = 0.05
    return {
        "g1": jnp.ones((1, d_model), jnp.float32),
        "be1": jnp.zeros((1, d_model), jnp.float32),
        "wq": s * jax.random.normal(ks[0], (d_model, d_model), jnp.float32),
        "bq": jnp.zeros((1, d_model), jnp.float32),
        "wk": s * jax.random.normal(ks[1], (d_model, d_model), jnp.float32),
        "bk": jnp.zeros((1, d_model), jnp.float32),
        "wv": s * jax.random.normal(ks[2], (d_model, d_model), jnp.float32),
        "bv": jnp.zeros((1, d_model), jnp.float32),
        "wo": s * jax.random.normal(ks[3], (d_model, d_model), jnp.float32),
        "bo": jnp.zeros((1, d_model), jnp.float32),
        "g2": jnp.ones((1, d_model), jnp.float32),
        "be2": jnp.zeros((1, d_model), jnp.float32),
        "w1": s * jax.random.normal(ks[4], (d_model, d_ff), jnp.float32),
        "b1": 0.01 * jax.random.normal(ks[5], (1, d_ff), jnp.float32),
        "w2": s * jax.random.normal(ks[6], (d_ff, d_model), jnp.float32),
        "b2": 0.01 * jax.random.normal(ks[7], (1, d_model), jnp.float32),
    }


def _padding_mask(lengths, L):
    col = jnp.arange(L)[None, None, :]
    return (col >= lengths[:, None, None]).astype(jnp.int32)


if __name__ == "__main__":
    # Small lane-dense config: D % 128 == 0 and d_head = D/H = 128 (concat Wo path).
    B, L, D, H, DFF = 2, 16, 256, 2, 512
    key = jax.random.PRNGKey(0)
    k_x, k_p, k_x2 = jax.random.split(key, 3)

    params = make_params(k_p, D, DFF)

    x = jax.random.normal(k_x, (B, L, D), jnp.float32)
    mask = jnp.broadcast_to(_padding_mask(jnp.array([L, 11], jnp.int32), L), (B, L, L))
    ref = reference(x, mask, params, H)

    # bf16 matmul operands / activations vs f32 reference -> loosened tolerance.
    rtol, atol = 3e-2, 5e-2

    # 1) single query block (tl = L)
    out = jax.block_until_ready(transformer_encoder_layer(x, mask, params, H))
    assert out.shape == (B, L, D)
    d1 = float(jnp.max(jnp.abs(out - ref)))
    assert jnp.allclose(out, ref, rtol=rtol, atol=atol), f"max abs diff {d1}"

    # 2) multiple query blocks (exercises the arbitrary qi axis + cached K/V scratch)
    out2 = jax.block_until_ready(
        transformer_encoder_layer(x, mask, params, H, q_block=8))
    d2 = float(jnp.max(jnp.abs(out2 - ref)))
    assert jnp.allclose(out2, ref, rtol=rtol, atol=atol), f"max abs diff {d2}"

    # 3) non-divisible L (exercises the padded-sequence path)
    L2 = 20
    x2 = jax.random.normal(k_x2, (B, L2, D), jnp.float32)
    mask2 = jnp.broadcast_to(_padding_mask(jnp.array([L2, 13], jnp.int32), L2),
                             (B, L2, L2))
    ref2 = reference(x2, mask2, params, H)
    out3 = jax.block_until_ready(
        transformer_encoder_layer(x2, mask2, params, H, q_block=8))
    assert out3.shape == (B, L2, D)
    d3 = float(jnp.max(jnp.abs(out3 - ref2)))
    assert jnp.allclose(out3, ref2, rtol=rtol, atol=atol), f"max abs diff {d3}"

    print("KERNEL_OK")
</pallas_src>

<mosaic_0001>
module attributes {stable_mosaic.version = 11 : i64} {
  func.func @encoder_layer_kernel(%arg0: i32, %arg1: i32, %arg2: memref<1x16x256xbf16, #tpu.memory_space<vmem>>, %arg3: memref<1x16x16xbf16, #tpu.memory_space<vmem>>, %arg4: memref<1x256xf32, #tpu.memory_space<vmem>>, %arg5: memref<1x256xf32, #tpu.memory_space<vmem>>, %arg6: memref<256x768xbf16, #tpu.memory_space<vmem>>, %arg7: memref<1x768xf32, #tpu.memory_space<vmem>>, %arg8: memref<256x256xbf16, #tpu.memory_space<vmem>>, %arg9: memref<1x256xf32, #tpu.memory_space<vmem>>, %arg10: memref<1x256xf32, #tpu.memory_space<vmem>>, %arg11: memref<1x256xf32, #tpu.memory_space<vmem>>, %arg12: memref<256x512xbf16, #tpu.memory_space<vmem>>, %arg13: memref<1x512xf32, #tpu.memory_space<vmem>>, %arg14: memref<512x256xbf16, #tpu.memory_space<vmem>>, %arg15: memref<1x256xf32, #tpu.memory_space<vmem>>, %arg16: memref<1x16x256xf32, #tpu.memory_space<vmem>>, %arg17: memref<16x256xbf16, #tpu.memory_space<vmem>>, %arg18: memref<16x256xbf16, #tpu.memory_space<vmem>>, %arg19: memref<16x256xbf16, #tpu.memory_space<vmem>>) attributes {dimension_semantics = [#tpu.dimension_semantics<parallel>, #tpu.dimension_semantics<arbitrary>], iteration_bounds = array<i64: 2, 1>, scalar_prefetch = 0 : i64, scratch_operands = 3 : i64, tpu.core_type = #tpu.core_type<tc>, window_params = [{transform_indices = @transform_0, window_bounds = array<i64: 1, 16, 256>}, {transform_indices = @transform_1, window_bounds = array<i64: 1, 16, 16>}, {pipeline_mode = #tpu.pipeline_mode<synchronous>, transform_indices = @transform_2, window_bounds = array<i64: 1, 256>}, {pipeline_mode = #tpu.pipeline_mode<synchronous>, transform_indices = @transform_3, window_bounds = array<i64: 1, 256>}, {pipeline_mode = #tpu.pipeline_mode<synchronous>, transform_indices = @transform_4, window_bounds = array<i64: 256, 768>}, {pipeline_mode = #tpu.pipeline_mode<synchronous>, transform_indices = @transform_5, window_bounds = array<i64: 1, 768>}, {pipeline_mode = #tpu.pipeline_mode<synchronous>, transform_indices = @transform_6, window_bounds = array<i64: 256, 256>}, {pipeline_mode = #tpu.pipeline_mode<synchronous>, transform_indices = @transform_7, window_bounds = array<i64: 1, 256>}, {pipeline_mode = #tpu.pipeline_mode<synchronous>, transform_indices = @transform_8, window_bounds = array<i64: 1, 256>}, {pipeline_mode = #tpu.pipeline_mode<synchronous>, transform_indices = @transform_9, window_bounds = array<i64: 1, 256>}, {pipeline_mode = #tpu.pipeline_mode<synchronous>, transform_indices = @transform_10, window_bounds = array<i64: 256, 512>}, {pipeline_mode = #tpu.pipeline_mode<synchronous>, transform_indices = @transform_11, window_bounds = array<i64: 1, 512>}, {pipeline_mode = #tpu.pipeline_mode<synchronous>, transform_indices = @transform_12, window_bounds = array<i64: 512, 256>}, {pipeline_mode = #tpu.pipeline_mode<synchronous>, transform_indices = @transform_13, window_bounds = array<i64: 1, 256>}, {transform_indices = @transform_14, window_bounds = array<i64: 1, 16, 256>}]} {
    %c0_i32 = arith.constant 0 : i32
    %0 = arith.cmpi eq, %arg1, %c0_i32 : i32
    %1 = arith.extui %0 : i1 to i32
    %c0_i32_0 = arith.constant 0 : i32
    %2 = arith.cmpi ne, %1, %c0_i32_0 : i32
    scf.if %2 {
      %c0_49 = arith.constant 0 : index
      %c0_50 = arith.constant 0 : index
      %c0_51 = arith.constant 0 : index
      %98 = vector.load %arg2[%c0_49, %c0_50, %c0_51] : memref<1x16x256xbf16, #tpu.memory_space<vmem>>, vector<1x16x256xbf16>
      %99 = vector.shape_cast %98 : vector<1x16x256xbf16> to vector<16x256xbf16>
      %100 = arith.extf %99 : vector<16x256xbf16> to vector<16x256xf32>
      %c0_52 = arith.constant 0 : index
      %c0_53 = arith.constant 0 : index
      %101 = vector.load %arg4[%c0_52, %c0_53] : memref<1x256xf32, #tpu.memory_space<vmem>>, vector<1x256xf32>
      %c0_54 = arith.constant 0 : index
      %c0_55 = arith.constant 0 : index
      %102 = vector.load %arg5[%c0_54, %c0_55] : memref<1x256xf32, #tpu.memory_space<vmem>>, vector<1x256xf32>
      %cst_56 = arith.constant dense<0.000000e+00> : vector<16xf32>
      %103 = vector.multi_reduction <add>, %100, %cst_56 [1] : vector<16x256xf32> to vector<16xf32>
      %104 = vector.shape_cast %103 : vector<16xf32> to vector<16x1xf32>
      %cst_57 = arith.constant 2.560000e+02 : f32
      %105 = vector.broadcast %cst_57 : f32 to vector<16x1xf32>
      %106 = arith.divf %104, %105 : vector<16x1xf32>
      %107 = vector.broadcast %106 : vector<16x1xf32> to vector<16x256xf32>
      %108 = arith.subf %100, %107 : vector<16x256xf32>
      %109 = arith.mulf %108, %108 : vector<16x256xf32>
      %cst_58 = arith.constant dense<0.000000e+00> : vector<16xf32>
      %110 = vector.multi_reduction <add>, %109, %cst_58 [1] : vector<16x256xf32> to vector<16xf32>
      %111 = vector.shape_cast %110 : vector<16xf32> to vector<16x1xf32>
      %cst_59 = arith.constant 2.560000e+02 : f32
      %112 = vector.broadcast %cst_59 : f32 to vector<16x1xf32>
      %113 = arith.divf %111, %112 : vector<16x1xf32>
      %114 = vector.broadcast %106 : vector<16x1xf32> to vector<16x256xf32>
      %115 = arith.subf %100, %114 : vector<16x256xf32>
      %cst_60 = arith.constant 9.99999997E-7 : f32
      %116 = vector.broadcast %cst_60 : f32 to vector<16x1xf32>
      %117 = arith.addf %113, %116 : vector<16x1xf32>
      %118 = math.rsqrt %117 : vector<16x1xf32>
      %119 = vector.broadcast %118 : vector<16x1xf32> to vector<16x256xf32>
      %120 = arith.mulf %115, %119 : vector<16x256xf32>
      %121 = vector.broadcast %101 : vector<1x256xf32> to vector<16x256xf32>
      %122 = arith.mulf %120, %121 : vector<16x256xf32>
      %123 = vector.broadcast %102 : vector<1x256xf32> to vector<16x256xf32>
      %124 = arith.addf %122, %123 : vector<16x256xf32>
      %125 = arith.truncf %124 : vector<16x256xf32> to vector<16x256xbf16>
      %c0_61 = arith.constant 0 : index
      %c0_62 = arith.constant 0 : index
      %126 = vector.load %arg6[%c0_61, %c0_62] : memref<256x768xbf16, #tpu.memory_space<vmem>>, vector<256x768xbf16>
      %cst_63 = arith.constant dense<0.000000e+00> : vector<16x768xf32>
      %127 = tpu.matmul %125, %126, %cst_63 {dimension_numbers = #tpu.dot_dimension_numbers<[1], [0], [0], [1], [0, 0, 1, 1], [], []>} : vector<16x256xbf16>, vector<256x768xbf16>, vector<16x768xf32> -> vector<16x768xf32>
      %c0_64 = arith.constant 0 : index
      %c0_65 = arith.constant 0 : index
      %128 = vector.load %arg7[%c0_64, %c0_65] : memref<1x768xf32, #tpu.memory_space<vmem>>, vector<1x768xf32>
      %129 = vector.broadcast %128 : vector<1x768xf32> to vector<16x768xf32>
      %130 = arith.addf %127, %129 : vector<16x768xf32>
      %131 = vector.extract_strided_slice %130 {offsets = [0, 0], sizes = [16, 256], strides = [1, 1]} : vector<16x768xf32> to vector<16x256xf32>
      %132 = arith.truncf %131 : vector<16x256xf32> to vector<16x256xbf16>
      %c0_66 = arith.constant 0 : index
      %c0_67 = arith.constant 0 : index
      %133 = vector.load %arg17[%c0_66, %c0_67] : memref<16x256xbf16, #tpu.memory_space<vmem>>, vector<16x256xbf16>
      tpu.vector_store %arg17[%c0_66, %c0_67], %132 {strides = array<i32>} : memref<16x256xbf16, #tpu.memory_space<vmem>>, vector<16x256xbf16>,
      %134 = vector.extract_strided_slice %130 {offsets = [0, 256], sizes = [16, 256], strides = [1, 1]} : vector<16x768xf32> to vector<16x256xf32>
      %135 = arith.truncf %134 : vector<16x256xf32> to vector<16x256xbf16>
      %c0_68 = arith.constant 0 : index
      %c0_69 = arith.constant 0 : index
      %136 = vector.load %arg18[%c0_68, %c0_69] : memref<16x256xbf16, #tpu.memory_space<vmem>>, vector<16x256xbf16>
      tpu.vector_store %arg18[%c0_68, %c0_69], %135 {strides = array<i32>} : memref<16x256xbf16, #tpu.memory_space<vmem>>, vector<16x256xbf16>,
      %137 = vector.extract_strided_slice %130 {offsets = [0, 512], sizes = [16, 256], strides = [1, 1]} : vector<16x768xf32> to vector<16x256xf32>
      %138 = arith.truncf %137 : vector<16x256xf32> to vector<16x256xbf16>
      %c0_70 = arith.constant 0 : index
      %c0_71 = arith.constant 0 : index
      %139 = vector.load %arg19[%c0_70, %c0_71] : memref<16x256xbf16, #tpu.memory_space<vmem>>, vector<16x256xbf16>
      tpu.vector_store %arg19[%c0_70, %c0_71], %138 {strides = array<i32>} : memref<16x256xbf16, #tpu.memory_space<vmem>>, vector<16x256xbf16>,
    } else {
    }
    %c16_i32 = arith.constant 16 : i32
    %3 = arith.muli %arg1, %c16_i32 : i32
    %4 = tpu.assume_multiple %3, 16 : i32
    %c0 = arith.constant 0 : index
    %5 = arith.index_cast %4 : i32 to index
    %c0_1 = arith.constant 0 : index
    %6 = vector.load %arg2[%c0, %5, %c0_1] : memref<1x16x256xbf16, #tpu.memory_space<vmem>>, vector<1x16x256xbf16>
    %7 = vector.shape_cast %6 : vector<1x16x256xbf16> to vector<16x256xbf16>
    %8 = arith.extf %7 : vector<16x256xbf16> to vector<16x256xf32>
    %c0_2 = arith.constant 0 : index
    %c0_3 = arith.constant 0 : index
    %c0_4 = arith.constant 0 : index
    %9 = vector.load %arg3[%c0_2, %c0_3, %c0_4] : memref<1x16x16xbf16, #tpu.memory_space<vmem>>, vector<1x16x16xbf16>
    %10 = vector.shape_cast %9 : vector<1x16x16xbf16> to vector<16x16xbf16>
    %11 = arith.extf %10 : vector<16x16xbf16> to vector<16x16xf32>
    %12 = arith.index_cast %4 : i32 to index
    %c0_5 = arith.constant 0 : index
    %13 = vector.load %arg17[%12, %c0_5] : memref<16x256xbf16, #tpu.memory_space<vmem>>, vector<16x128xbf16>
    %c0_6 = arith.constant 0 : index
    %c0_7 = arith.constant 0 : index
    %14 = vector.load %arg18[%c0_6, %c0_7] : memref<16x256xbf16, #tpu.memory_space<vmem>>, vector<16x128xbf16>
    %c0_8 = arith.constant 0 : index
    %c0_9 = arith.constant 0 : index
    %15 = vector.load %arg19[%c0_8, %c0_9] : memref<16x256xbf16, #tpu.memory_space<vmem>>, vector<16x128xbf16>
    %cst = arith.constant dense<0.000000e+00> : vector<16x16xf32>
    %16 = tpu.matmul %13, %14, %cst {dimension_numbers = #tpu.dot_dimension_numbers<[1], [1], [0], [0], [0, 0, 1, 0], [], []>} : vector<16x128xbf16>, vector<16x128xbf16>, vector<16x16xf32> -> vector<16x16xf32>
    %17 = arith.addf %16, %11 : vector<16x16xf32>
    %cst_10 = arith.constant dense<0xFF800000> : vector<16xf32>
    %18 = vector.multi_reduction <maximumf>, %17, %cst_10 [1] : vector<16x16xf32> to vector<16xf32>
    %19 = vector.shape_cast %18 : vector<16xf32> to vector<16x1xf32>
    %20 = vector.broadcast %19 : vector<16x1xf32> to vector<16x16xf32>
    %21 = arith.subf %17, %20 : vector<16x16xf32>
    %22 = math.exp %21 : vector<16x16xf32>
    %cst_11 = arith.constant dense<0.000000e+00> : vector<16xf32>
    %23 = vector.multi_reduction <add>, %22, %cst_11 [1] : vector<16x16xf32> to vector<16xf32>
    %24 = vector.shape_cast %23 : vector<16xf32> to vector<16x1xf32>
    %25 = arith.truncf %22 : vector<16x16xf32> to vector<16x16xbf16>
    %cst_12 = arith.constant dense<0.000000e+00> : vector<16x128xf32>
    %26 = tpu.matmul %25, %15, %cst_12 {dimension_numbers = #tpu.dot_dimension_numbers<[1], [0], [0], [1], [0, 0, 1, 1], [], []>} : vector<16x16xbf16>, vector<16x128xbf16>, vector<16x128xf32> -> vector<16x128xf32>
    %27 = tpu.reciprocal %24 {approx = true} : vector<16x1xf32> -> vector<16x1xf32>
    %28 = vector.broadcast %27 : vector<16x1xf32> to vector<16x128xf32>
    %29 = arith.mulf %26, %28 : vector<16x128xf32>
    %30 = arith.index_cast %4 : i32 to index
    %c128 = arith.constant 128 : index
    %31 = vector.load %arg17[%30, %c128] : memref<16x256xbf16, #tpu.memory_space<vmem>>, vector<16x128xbf16>
    %c0_13 = arith.constant 0 : index
    %c128_14 = arith.constant 128 : index
    %32 = vector.load %arg18[%c0_13, %c128_14] : memref<16x256xbf16, #tpu.memory_space<vmem>>, vector<16x128xbf16>
    %c0_15 = arith.constant 0 : index
    %c128_16 = arith.constant 128 : index
    %33 = vector.load %arg19[%c0_15, %c128_16] : memref<16x256xbf16, #tpu.memory_space<vmem>>, vector<16x128xbf16>
    %cst_17 = arith.constant dense<0.000000e+00> : vector<16x16xf32>
    %34 = tpu.matmul %31, %32, %cst_17 {dimension_numbers = #tpu.dot_dimension_numbers<[1], [1], [0], [0], [0, 0, 1, 0], [], []>} : vector<16x128xbf16>, vector<16x128xbf16>, vector<16x16xf32> -> vector<16x16xf32>
    %35 = arith.addf %34, %11 : vector<16x16xf32>
    %cst_18 = arith.constant dense<0xFF800000> : vector<16xf32>
    %36 = vector.multi_reduction <maximumf>, %35, %cst_18 [1] : vector<16x16xf32> to vector<16xf32>
    %37 = vector.shape_cast %36 : vector<16xf32> to vector<16x1xf32>
    %38 = vector.broadcast %37 : vector<16x1xf32> to vector<16x16xf32>
    %39 = arith.subf %35, %38 : vector<16x16xf32>
    %40 = math.exp %39 : vector<16x16xf32>
    %cst_19 = arith.constant dense<0.000000e+00> : vector<16xf32>
    %41 = vector.multi_reduction <add>, %40, %cst_19 [1] : vector<16x16xf32> to vector<16xf32>
    %42 = vector.shape_cast %41 : vector<16xf32> to vector<16x1xf32>
    %43 = arith.truncf %40 : vector<16x16xf32> to vector<16x16xbf16>
    %cst_20 = arith.constant dense<0.000000e+00> : vector<16x128xf32>
    %44 = tpu.matmul %43, %33, %cst_20 {dimension_numbers = #tpu.dot_dimension_numbers<[1], [0], [0], [1], [0, 0, 1, 1], [], []>} : vector<16x16xbf16>, vector<16x128xbf16>, vector<16x128xf32> -> vector<16x128xf32>
    %45 = tpu.reciprocal %42 {approx = true} : vector<16x1xf32> -> vector<16x1xf32>
    %46 = vector.broadcast %45 : vector<16x1xf32> to vector<16x128xf32>
    %47 = arith.mulf %44, %46 : vector<16x128xf32>
    %48 = tpu.concatenate %29, %47 in 1 : vector<16x128xf32>, vector<16x128xf32> -> vector<16x256xf32>
    %49 = arith.truncf %48 : vector<16x256xf32> to vector<16x256xbf16>
    %c0_21 = arith.constant 0 : index
    %c0_22 = arith.constant 0 : index
    %50 = vector.load %arg8[%c0_21, %c0_22] : memref<256x256xbf16, #tpu.memory_space<vmem>>, vector<256x256xbf16>
    %cst_23 = arith.constant dense<0.000000e+00> : vector<16x256xf32>
    %51 = tpu.matmul %49, %50, %cst_23 {dimension_numbers = #tpu.dot_dimension_numbers<[1], [0], [0], [1], [0, 0, 1, 1], [], []>} : vector<16x256xbf16>, vector<256x256xbf16>, vector<16x256xf32> -> vector<16x256xf32>
    %c0_24 = arith.constant 0 : index
    %c0_25 = arith.constant 0 : index
    %52 = vector.load %arg9[%c0_24, %c0_25] : memref<1x256xf32, #tpu.memory_space<vmem>>, vector<1x256xf32>
    %53 = vector.broadcast %52 : vector<1x256xf32> to vector<16x256xf32>
    %54 = arith.addf %51, %53 : vector<16x256xf32>
    %55 = arith.addf %54, %8 : vector<16x256xf32>
    %c0_26 = arith.constant 0 : index
    %c0_27 = arith.constant 0 : index
    %56 = vector.load %arg10[%c0_26, %c0_27] : memref<1x256xf32, #tpu.memory_space<vmem>>, vector<1x256xf32>
    %c0_28 = arith.constant 0 : index
    %c0_29 = arith.constant 0 : index
    %57 = vector.load %arg11[%c0_28, %c0_29] : memref<1x256xf32, #tpu.memory_space<vmem>>, vector<1x256xf32>
    %cst_30 = arith.constant dense<0.000000e+00> : vector<16xf32>
    %58 = vector.multi_reduction <add>, %55, %cst_30 [1] : vector<16x256xf32> to vector<16xf32>
    %59 = vector.shape_cast %58 : vector<16xf32> to vector<16x1xf32>
    %cst_31 = arith.constant 2.560000e+02 : f32
    %60 = vector.broadcast %cst_31 : f32 to vector<16x1xf32>
    %61 = arith.divf %59, %60 : vector<16x1xf32>
    %62 = vector.broadcast %61 : vector<16x1xf32> to vector<16x256xf32>
    %63 = arith.subf %55, %62 : vector<16x256xf32>
    %64 = arith.mulf %63, %63 : vector<16x256xf32>
    %cst_32 = arith.constant dense<0.000000e+00> : vector<16xf32>
    %65 = vector.multi_reduction <add>, %64, %cst_32 [1] : vector<16x256xf32> to vector<16xf32>
    %66 = vector.shape_cast %65 : vector<16xf32> to vector<16x1xf32>
    %cst_33 = arith.constant 2.560000e+02 : f32
    %67 = vector.broadcast %cst_33 : f32 to vector<16x1xf32>
    %68 = arith.divf %66, %67 : vector<16x1xf32>
    %69 = vector.broadcast %61 : vector<16x1xf32> to vector<16x256xf32>
    %70 = arith.subf %55, %69 : vector<16x256xf32>
    %cst_34 = arith.constant 9.99999997E-7 : f32
    %71 = vector.broadcast %cst_34 : f32 to vector<16x1xf32>
    %72 = arith.addf %68, %71 : vector<16x1xf32>
    %73 = math.rsqrt %72 : vector<16x1xf32>
    %74 = vector.broadcast %73 : vector<16x1xf32> to vector<16x256xf32>
    %75 = arith.mulf %70, %74 : vector<16x256xf32>
    %76 = vector.broadcast %56 : vector<1x256xf32> to vector<16x256xf32>
    %77 = arith.mulf %75, %76 : vector<16x256xf32>
    %78 = vector.broadcast %57 : vector<1x256xf32> to vector<16x256xf32>
    %79 = arith.addf %77, %78 : vector<16x256xf32>
    %80 = arith.truncf %79 : vector<16x256xf32> to vector<16x256xbf16>
    %c0_35 = arith.constant 0 : index
    %c0_36 = arith.constant 0 : index
    %81 = vector.load %arg12[%c0_35, %c0_36] : memref<256x512xbf16, #tpu.memory_space<vmem>>, vector<256x512xbf16>
    %cst_37 = arith.constant dense<0.000000e+00> : vector<16x512xf32>
    %82 = tpu.matmul %80, %81, %cst_37 {dimension_numbers = #tpu.dot_dimension_numbers<[1], [0], [0], [1], [0, 0, 1, 1], [], []>} : vector<16x256xbf16>, vector<256x512xbf16>, vector<16x512xf32> -> vector<16x512xf32>
    %c0_38 = arith.constant 0 : index
    %c0_39 = arith.constant 0 : index
    %83 = vector.load %arg13[%c0_38, %c0_39] : memref<1x512xf32, #tpu.memory_space<vmem>>, vector<1x512xf32>
    %84 = vector.broadcast %83 : vector<1x512xf32> to vector<16x512xf32>
    %85 = arith.addf %82, %84 : vector<16x512xf32>
    %cst_40 = arith.constant 0.000000e+00 : f32
    %86 = vector.broadcast %cst_40 : f32 to vector<16x512xf32>
    %87 = arith.maximumf %85, %86 : vector<16x512xf32>
    %88 = arith.truncf %87 : vector<16x512xf32> to vector<16x512xbf16>
    %c0_41 = arith.constant 0 : index
    %c0_42 = arith.constant 0 : index
    %89 = vector.load %arg14[%c0_41, %c0_42] : memref<512x256xbf16, #tpu.memory_space<vmem>>, vector<512x256xbf16>
    %cst_43 = arith.constant dense<0.000000e+00> : vector<16x256xf32>
    %90 = tpu.matmul %88, %89, %cst_43 {dimension_numbers = #tpu.dot_dimension_numbers<[1], [0], [0], [1], [0, 0, 1, 1], [], []>} : vector<16x512xbf16>, vector<512x256xbf16>, vector<16x256xf32> -> vector<16x256xf32>
    %c0_44 = arith.constant 0 : index
    %c0_45 = arith.constant 0 : index
    %91 = vector.load %arg15[%c0_44, %c0_45] : memref<1x256xf32, #tpu.memory_space<vmem>>, vector<1x256xf32>
    %92 = vector.broadcast %91 : vector<1x256xf32> to vector<16x256xf32>
    %93 = arith.addf %90, %92 : vector<16x256xf32>
    %94 = arith.addf %93, %55 : vector<16x256xf32>
    %c0_46 = arith.constant 0 : index
    %c0_47 = arith.constant 0 : index
    %c0_48 = arith.constant 0 : index
    %95 = vector.load %arg16[%c0_46, %c0_47, %c0_48] : memref<1x16x256xf32, #tpu.memory_space<vmem>>, vector<1x16x256xf32>
    %96 = vector.shape_cast %95 : vector<1x16x256xf32> to vector<16x256xf32>
    %97 = vector.shape_cast %94 : vector<16x256xf32> to vector<1x16x256xf32>
    tpu.vector_store %arg16[%c0_46, %c0_47, %c0_48], %97 {strides = array<i32>} : memref<1x16x256xf32, #tpu.memory_space<vmem>>, vector<1x16x256xf32>,
    return
  }
  func.func @transform_0(%arg0: i32, %arg1: i32) -> (i32, i32, i32) {
    %c0_i32 = arith.constant 0 : i32
    %c0_i32_0 = arith.constant 0 : i32
    %c0_i32_1 = arith.constant 0 : i32
    return %arg0, %c0_i32, %c0_i32_0 : i32, i32, i32
  }
  func.func @transform_1(%arg0: i32, %arg1: i32) -> (i32, i32, i32) {
    %c0_i32 = arith.constant 0 : i32
    %c0_i32_0 = arith.constant 0 : i32
    return %arg0, %arg1, %c0_i32 : i32, i32, i32
  }
  func.func @transform_2(%arg0: i32, %arg1: i32) -> (i32, i32) {
    %c0_i32 = arith.constant 0 : i32
    %c0_i32_0 = arith.constant 0 : i32
    %c0_i32_1 = arith.constant 0 : i32
    return %c0_i32, %c0_i32_0 : i32, i32
  }
  func.func @transform_3(%arg0: i32, %arg1: i32) -> (i32, i32) {
    %c0_i32 = arith.constant 0 : i32
    %c0_i32_0 = arith.constant 0 : i32
    %c0_i32_1 = arith.constant 0 : i32
    return %c0_i32, %c0_i32_0 : i32, i32
  }
  func.func @transform_4(%arg0: i32, %arg1: i32) -> (i32, i32) {
    %c0_i32 = arith.constant 0 : i32
    %c0_i32_0 = arith.constant 0 : i32
    %c0_i32_1 = arith.constant 0 : i32
    return %c0_i32, %c0_i32_0 : i32, i32
  }
  func.func @transform_5(%arg0: i32, %arg1: i32) -> (i32, i32) {
    %c0_i32 = arith.constant 0 : i32
    %c0_i32_0 = arith.constant 0 : i32
    %c0_i32_1 = arith.constant 0 : i32
    return %c0_i32, %c0_i32_0 : i32, i32
  }
  func.func @transform_6(%arg0: i32, %arg1: i32) -> (i32, i32) {
    %c0_i32 = arith.constant 0 : i32
    %c0_i32_0 = arith.constant 0 : i32
    %c0_i32_1 = arith.constant 0 : i32
    return %c0_i32, %c0_i32_0 : i32, i32
  }
  func.func @transform_7(%arg0: i32, %arg1: i32) -> (i32, i32) {
    %c0_i32 = arith.constant 0 : i32
    %c0_i32_0 = arith.constant 0 : i32
    %c0_i32_1 = arith.constant 0 : i32
    return %c0_i32, %c0_i32_0 : i32, i32
  }
  func.func @transform_8(%arg0: i32, %arg1: i32) -> (i32, i32) {
    %c0_i32 = arith.constant 0 : i32
    %c0_i32_0 = arith.constant 0 : i32
    %c0_i32_1 = arith.constant 0 : i32
    return %c0_i32, %c0_i32_0 : i32, i32
  }
  func.func @transform_9(%arg0: i32, %arg1: i32) -> (i32, i32) {
    %c0_i32 = arith.constant 0 : i32
    %c0_i32_0 = arith.constant 0 : i32
    %c0_i32_1 = arith.constant 0 : i32
    return %c0_i32, %c0_i32_0 : i32, i32
  }
  func.func @transform_10(%arg0: i32, %arg1: i32) -> (i32, i32) {
    %c0_i32 = arith.constant 0 : i32
    %c0_i32_0 = arith.constant 0 : i32
    %c0_i32_1 = arith.constant 0 : i32
    return %c0_i32, %c0_i32_0 : i32, i32
  }
  func.func @transform_11(%arg0: i32, %arg1: i32) -> (i32, i32) {
    %c0_i32 = arith.constant 0 : i32
    %c0_i32_0 = arith.constant 0 : i32
    %c0_i32_1 = arith.constant 0 : i32
    return %c0_i32, %c0_i32_0 : i32, i32
  }
  func.func @transform_12(%arg0: i32, %arg1: i32) -> (i32, i32) {
    %c0_i32 = arith.constant 0 : i32
    %c0_i32_0 = arith.constant 0 : i32
    %c0_i32_1 = arith.constant 0 : i32
    return %c0_i32, %c0_i32_0 : i32, i32
  }
  func.func @transform_13(%arg0: i32, %arg1: i32) -> (i32, i32) {
    %c0_i32 = arith.constant 0 : i32
    %c0_i32_0 = arith.constant 0 : i32
    %c0_i32_1 = arith.constant 0 : i32
    return %c0_i32, %c0_i32_0 : i32, i32
  }
  func.func @transform_14(%arg0: i32, %arg1: i32) -> (i32, i32, i32) {
    %c0_i32 = arith.constant 0 : i32
    %c0_i32_0 = arith.constant 0 : i32
    return %arg0, %arg1, %c0_i32 : i32, i32, i32
  }
}

</mosaic_0001>

<llo_original>
// kernel: tpu_custom_call.1
$region0: #{tpu_custom_call.1}
  #allocation0 [shape = 'u32[]', space=smem, size = 0x4, offset = 0x4, fixed_abs, tag = 'smem constant byte address 0x4 - core index']
  #allocation1 [shape = 'u32[144,128]{1,0:T(1,128)}', space=vmem, size = 0x12000, scoped, tag = 'internal scratch']
  #allocation2 [shape = 'bf16[16,256]{1,0:T(8,128)(2,1)}', space=vmem, size = 0x2000, scoped, tag = 'scratch operand']
  #allocation3 [shape = 'bf16[16,256]{1,0:T(8,128)(2,1)}', space=vmem, size = 0x2000, scoped, tag = 'scratch operand']
  #allocation4 [shape = 'bf16[16,256]{1,0:T(8,128)(2,1)}', space=vmem, size = 0x2000, scoped, tag = 'scratch operand']
  %s0 = inlined_call_operand.hbm [shape: bf16[2,16,256], index: 0, kind: input, shape index: {}]
  %s1 = inlined_call_operand.hbm [shape: bf16[2,16,16], index: 1, kind: input, shape index: {}]
  %s2 = inlined_call_operand.hbm [shape: f32[1,256], index: 2, kind: input, shape index: {}]
  %s3 = inlined_call_operand.hbm [shape: f32[1,256], index: 3, kind: input, shape index: {}]
  %s4 = inlined_call_operand.hbm [shape: bf16[256,768], index: 4, kind: input, shape index: {}]
  %s5 = inlined_call_operand.vmem [shape: f32[1,768], index: 5, kind: input, shape index: {}]
  %s6 = inlined_call_operand.hbm [shape: bf16[256,256], index: 6, kind: input, shape index: {}]
  %s7 = inlined_call_operand.vmem [shape: f32[1,256], index: 7, kind: input, shape index: {}]
  %s8 = inlined_call_operand.vmem [shape: f32[1,256], index: 8, kind: input, shape index: {}]
  %s9 = inlined_call_operand.vmem [shape: f32[1,256], index: 9, kind: input, shape index: {}]
  %s10 = inlined_call_operand.hbm [shape: bf16[256,512], index: 10, kind: input, shape index: {}]
  %s11 = inlined_call_operand.vmem [shape: f32[1,512], index: 11, kind: input, shape index: {}]
  %s12 = inlined_call_operand.hbm [shape: bf16[512,256], index: 12, kind: input, shape index: {}]
  %s13 = inlined_call_operand.vmem [shape: f32[1,256], index: 13, kind: input, shape index: {}]
  %s14 = inlined_call_operand.hbm [shape: f32[2,16,256], index: 14, kind: output, shape index: {}]
  %s15 = sld [smem:[#allocation0]]
  $region125: #{tpu_custom_call.1} parent=0
    _
  %s17 = ssub.s32 1, %s15
  %s18 = scalar_select 0, %s17, %s15
  $region1: #{tpu_custom_call.1} parent=0
    #allocation5 [shape = 'u8[16384]{0}', space=vmem, size = 0x4000, scoped, tag = 'input window, operand 0']
    #allocation6 [shape = 's32[2]{0}', space=sflag, size = 0x8, scoped, tag = 'scoped memory for tpu_custom_call.1']
    #allocation7 [shape = 's32[2]{0}', space=sflag, size = 0x8, scoped, tag = 'scoped memory for tpu_custom_call.1']
    #allocation8 [shape = 'u8[8192]{0}', space=vmem, size = 0x2000, scoped, tag = 'input window, operand 1']
    #allocation9 [shape = 's32[2]{0}', space=sflag, size = 0x8, scoped, tag = 'scoped memory for tpu_custom_call.1']
    #allocation10 [shape = 'u8[1024]{0}', space=vmem, size = 0x400, scoped, tag = 'input window, operand 2, single buffered']
    #allocation11 [shape = 'u8[1024]{0}', space=vmem, size = 0x400, scoped, tag = 'input window, operand 3, single buffered']
    #allocation12 [shape = 's32[1]{0}', space=sflag, size = 0x4, scoped, tag = 'scoped memory for tpu_custom_call.1']
    #allocation13 [shape = 'u8[393216]{0}', space=vmem, size = 0x60000, scoped, tag = 'input window, operand 4, single buffered']
    #allocation14 [shape = 'u8[131072]{0}', space=vmem, size = 0x20000, scoped, tag = 'input window, operand 6, single buffered']
    #allocation15 [shape = 's32[1]{0}', space=sflag, size = 0x4, scoped, tag = 'scoped memory for tpu_custom_call.1']
    #allocation16 [shape = 'u8[262144]{0}', space=vmem, size = 0x40000, scoped, tag = 'input window, operand 10, single buffered']
    #allocation17 [shape = 'u8[262144]{0}', space=vmem, size = 0x40000, scoped, tag = 'input window, operand 12, single buffered']
    #allocation18 [shape = 's32[1]{0}', space=sflag, size = 0x4, scoped, tag = 'scoped memory for tpu_custom_call.1']
    #allocation19 [shape = 'u8[32768]{0}', space=vmem, size = 0x8000, scoped, tag = 'output window, operand 0']
    %19 = vsyncpa [#allocation6], 0
    %s20 = scalar_lea.sflag [#allocation6], 1
    %21 = vsyncpa %s20, 0
    %22 = vsyncpa [#allocation9], 0
    %s23 = scalar_lea.sflag [#allocation9], 1
    %24 = vsyncpa %s23, 0
    %25 = vsyncpa [#allocation12], 0
    %26 = vsyncpa [#allocation15], 0
    %27 = vsyncpa [#allocation18], 0
    %28 = vsyncpa [#allocation7], 0
    %s29 = scalar_lea.sflag [#allocation7], 1
    %30 = vsyncpa %s29, 0
    loop: start=0, step=1, limit=4
    $region2: #{tpu_custom_call.1} parent=1 // loop_pre_header
      _
    $region3: #{tpu_custom_call.1} parent=1 // loop_header
      %s32 = sphi 0, %s36
      %p33 = scmp.ge.s32.totalorder %s32, 4
      %s39 = sphi 0, %s51
      %s40 = sphi 0, %s47
      %s41 = sphi 0, %s39
      %s42 = sphi 0, %s40
      %s43 = sphi 0, %s41
      %s44 = sphi 0, %s42
      %s54 = sphi 0, %s56
      %s57 = sphi 0, %s54
      %s58 = sphi 0, %s57
      %s74 = sphi 0, %s58
      %s82 = sphi 0, %s84
      %s85 = sphi 0, %s82
      %s86 = sphi 0, %s85
      %s102 = sphi 0, %s86
      %s106 = sphi 0, %s106
      %s108 = sphi 0, %s106
      %s109 = sphi 0, %s108
      %s123 = sphi 0, %s109
      %s127 = sphi 0, %s127
      %s129 = sphi 0, %s127
      %s130 = sphi 0, %s129
      %s144 = sphi 0, %s130
      %s148 = sphi 0, %s148
      %s150 = sphi 0, %s148
      %s151 = sphi 0, %s150
      %s165 = sphi 0, %s151
      %s169 = sphi 0, %s169
      %s171 = sphi 0, %s169
      %s172 = sphi 0, %s171
      %s186 = sphi 0, %s172
      %s190 = sphi 0, %s190
      %s192 = sphi 0, %s190
      %s193 = sphi 0, %s192
      %s207 = sphi 0, %s193
      %s211 = sphi 0, %s211
      %s213 = sphi 0, %s211
      %s214 = sphi 0, %s213
      %s228 = sphi 0, %s214
      %s232 = sphi 0, %s232
      %s234 = sphi 0, %s232
      %s235 = sphi 0, %s234
      %s249 = sphi 0, %s235
      %s253 = sphi 0, %s253
      %s255 = sphi 0, %s253
      %s256 = sphi 0, %s255
      %s270 = sphi 0, %s256
      %s274 = sphi 0, %s274
      %s276 = sphi 0, %s274
      %s277 = sphi 0, %s276
      %s291 = sphi 0, %s277
      %s295 = sphi 0, %s295
      %s297 = sphi 0, %s295
      %s298 = sphi 0, %s297
      %s312 = sphi 0, %s298
      %s316 = sphi 0, %s316
      %s318 = sphi 0, %s316
      %s319 = sphi 0, %s318
      %s333 = sphi 0, %s319
      %s337 = sphi 0, %s337
      %s339 = sphi 0, %s337
      %s340 = sphi 0, %s339
      %s354 = sphi 0, %s340
      %s362 = sphi 0, %s364
      %s365 = sphi 0, %s362
      %s366 = sphi 0, %s365
      %s382 = sphi 0, %s366
    $region4: #{tpu_custom_call.1} parent=1 // loop_header_branch
      %35 = sbr.rel (%p33) target = $region8
    $region5: #{tpu_custom_call.1} parent=1 // loop_body
      %s37 = ssub.s32 %s32, 1
      %s38 = ssub.s32 %s32, 2
      %s45 = sadd.s32 1, %s40
      %p46 = scmp.ge.s32.totalorder %s45, 1
      %s47 = scalar_select %p46, 0, %s45
      %s48 = sadd.s32 1, %s39
      %s49 = scalar_select %p46, %s48, %s39
      %p50 = scmp.ge.s32.totalorder %s49, 2
      %s51 = scalar_select %p50, 0, %s49
      %s52 = ssub.s32 %s39, %s51
      %p53 = scmp.eq.s32.totalorder %s52, 0
      %s55 = sadd.s32 %s54, 1
      %s56 = scalar_select %p53, %s54, %s55
      %p59 = pneg %p53
      %p60 = scmp.eq.s32.totalorder %s32, 1
      %p61 = por %p59, %p60
      %p62 = scmp.ne.s32.totalorder %s54, %s57
      %p63 = scmp.eq.s32.totalorder %s32, 0
      %p64 = por %p62, %p63
      %p65 = scmp.ne.s32.totalorder %s54, %s57
      %p66 = scmp.eq.s32.totalorder %s37, 1
      %p67 = por %p65, %p66
      %p68 = scmp.ne.s32.totalorder %s57, %s58
      %p69 = scmp.eq.s32.totalorder %s37, 0
      %p70 = por %p68, %p69
      %p71 = scmp.ne.s32.totalorder %s57, %s58
      %p72 = scmp.eq.s32.totalorder %s38, 1
      %p73 = por %p71, %p72
      %p75 = scmp.ne.s32.totalorder %s58, %s74
      %p76 = scmp.eq.s32.totalorder %s38, 0
      %p77 = por %p75, %p76
      %s78 = ssub.s32 %s39, %s51
      %s79 = ssub.s32 %s40, %s47
      %s80 = sor.u32 %s78, %s79
      %p81 = scmp.eq.s32.totalorder %s80, 0
      %s83 = sadd.s32 %s82, 1
      %s84 = scalar_select %p81, %s82, %s83
      %p87 = pneg %p81
      %p88 = scmp.eq.s32.totalorder %s32, 1
      %p89 = por %p87, %p88
      %p90 = scmp.ne.s32.totalorder %s82, %s85
      %p91 = scmp.eq.s32.totalorder %s32, 0
      %p92 = por %p90, %p91
      %p93 = scmp.ne.s32.totalorder %s82, %s85
      %p94 = scmp.eq.s32.totalorder %s37, 1
      %p95 = por %p93, %p94
      %p96 = scmp.ne.s32.totalorder %s85, %s86
      %p97 = scmp.eq.s32.totalorder %s37, 0
      %p98 = por %p96, %p97
      %p99 = scmp.ne.s32.totalorder %s85, %s86
      %p100 = scmp.eq.s32.totalorder %s38, 1
      %p101 = por %p99, %p100
      %p103 = scmp.ne.s32.totalorder %s86, %s102
      %p104 = scmp.eq.s32.totalorder %s38, 0
      %p105 = por %p103, %p104
      %s107 = sadd.s32 %s106, 1
      %p110 = scmp.eq.s32.totalorder %s32, 1
      %p111 = scmp.ne.s32.totalorder %s106, %s108
      %p112 = scmp.eq.s32.totalorder %s32, 0
      %p113 = por %p111, %p112
      %p114 = scmp.ne.s32.totalorder %s106, %s108
      %p115 = scmp.eq.s32.totalorder %s37, 1
      %p116 = por %p114, %p115
      %p117 = scmp.ne.s32.totalorder %s108, %s109
      %p118 = scmp.eq.s32.totalorder %s37, 0
      %p119 = por %p117, %p118
      %p120 = scmp.ne.s32.totalorder %s108, %s109
      %p121 = scmp.eq.s32.totalorder %s38, 1
      %p122 = por %p120, %p121
      %p124 = scmp.ne.s32.totalorder %s109, %s123
      %p125 = scmp.eq.s32.totalorder %s38, 0
      %p126 = por %p124, %p125
      %s128 = sadd.s32 %s127, 1
      %p131 = scmp.eq.s32.totalorder %s32, 1
      %p132 = scmp.ne.s32.totalorder %s127, %s129
      %p133 = scmp.eq.s32.totalorder %s32, 0
      %p134 = por %p132, %p133
      %p135 = scmp.ne.s32.totalorder %s127, %s129
      %p136 = scmp.eq.s32.totalorder %s37, 1
      %p137 = por %p135, %p136
      %p138 = scmp.ne.s32.totalorder %s129, %s130
      %p139 = scmp.eq.s32.totalorder %s37, 0
      %p140 = por %p138, %p139
      %p141 = scmp.ne.s32.totalorder %s129, %s130
      %p142 = scmp.eq.s32.totalorder %s38, 1
      %p143 = por %p141, %p142
      %p145 = scmp.ne.s32.totalorder %s130, %s144
      %p146 = scmp.eq.s32.totalorder %s38, 0
      %p147 = por %p145, %p146
      %s149 = sadd.s32 %s148, 1
      %p152 = scmp.eq.s32.totalorder %s32, 1
      %p153 = scmp.ne.s32.totalorder %s148, %s150
      %p154 = scmp.eq.s32.totalorder %s32, 0
      %p155 = por %p153, %p154
      %p156 = scmp.ne.s32.totalorder %s148, %s150
      %p157 = scmp.eq.s32.totalorder %s37, 1
      %p158 = por %p156, %p157
      %p159 = scmp.ne.s32.totalorder %s150, %s151
      %p160 = scmp.eq.s32.totalorder %s37, 0
      %p161 = por %p159, %p160
      %p162 = scmp.ne.s32.totalorder %s150, %s151
      %p163 = scmp.eq.s32.totalorder %s38, 1
      %p164 = por %p162, %p163
      %p166 = scmp.ne.s32.totalorder %s151, %s165
      %p167 = scmp.eq.s32.totalorder %s38, 0
      %p168 = por %p166, %p167
      %s170 = sadd.s32 %s169, 1
      %p173 = scmp.eq.s32.totalorder %s32, 1
      %p174 = scmp.ne.s32.totalorder %s169, %s171
      %p175 = scmp.eq.s32.totalorder %s32, 0
      %p176 = por %p174, %p175
      %p177 = scmp.ne.s32.totalorder %s169, %s171
      %p178 = scmp.eq.s32.totalorder %s37, 1
      %p179 = por %p177, %p178
      %p180 = scmp.ne.s32.totalorder %s171, %s172
      %p181 = scmp.eq.s32.totalorder %s37, 0
      %p182 = por %p180, %p181
      %p183 = scmp.ne.s32.totalorder %s171, %s172
      %p184 = scmp.eq.s32.totalorder %s38, 1
      %p185 = por %p183, %p184
      %p187 = scmp.ne.s32.totalorder %s172, %s186
      %p188 = scmp.eq.s32.totalorder %s38, 0
      %p189 = por %p187, %p188
      %s191 = sadd.s32 %s190, 1
      %p194 = scmp.eq.s32.totalorder %s32, 1
      %p195 = scmp.ne.s32.totalorder %s190, %s192
      %p196 = scmp.eq.s32.totalorder %s32, 0
      %p197 = por %p195, %p196
      %p198 = scmp.ne.s32.totalorder %s190, %s192
      %p199 = scmp.eq.s32.totalorder %s37, 1
      %p200 = por %p198, %p199
      %p201 = scmp.ne.s32.totalorder %s192, %s193
      %p202 = scmp.eq.s32.totalorder %s37, 0
      %p203 = por %p201, %p202
      %p204 = scmp.ne.s32.totalorder %s192, %s193
      %p205 = scmp.eq.s32.totalorder %s38, 1
      %p206 = por %p204, %p205
      %p208 = scmp.ne.s32.totalorder %s193, %s207
      %p209 = scmp.eq.s32.totalorder %s38, 0
      %p210 = por %p208, %p209
      %s212 = sadd.s32 %s211, 1
      %p215 = scmp.eq.s32.totalorder %s32, 1
      %p216 = scmp.ne.s32.totalorder %s211, %s213
      %p217 = scmp.eq.s32.totalorder %s32, 0
      %p218 = por %p216, %p217
      %p219 = scmp.ne.s32.totalorder %s211, %s213
      %p220 = scmp.eq.s32.totalorder %s37, 1
      %p221 = por %p219, %p220
      %p222 = scmp.ne.s32.totalorder %s213, %s214
      %p223 = scmp.eq.s32.totalorder %s37, 0
      %p224 = por %p222, %p223
      %p225 = scmp.ne.s32.totalorder %s213, %s214
      %p226 = scmp.eq.s32.totalorder %s38, 1
      %p227 = por %p225, %p226
      %p229 = scmp.ne.s32.totalorder %s214, %s228
      %p230 = scmp.eq.s32.totalorder %s38, 0
      %p231 = por %p229, %p230
      %s233 = sadd.s32 %s232, 1
      %p236 = scmp.eq.s32.totalorder %s32, 1
      %p237 = scmp.ne.s32.totalorder %s232, %s234
      %p238 = scmp.eq.s32.totalorder %s32, 0
      %p239 = por %p237, %p238
      %p240 = scmp.ne.s32.totalorder %s232, %s234
      %p241 = scmp.eq.s32.totalorder %s37, 1
      %p242 = por %p240, %p241
      %p243 = scmp.ne.s32.totalorder %s234, %s235
      %p244 = scmp.eq.s32.totalorder %s37, 0
      %p245 = por %p243, %p244
      %p246 = scmp.ne.s32.totalorder %s234, %s235
      %p247 = scmp.eq.s32.totalorder %s38, 1
      %p248 = por %p246, %p247
      %p250 = scmp.ne.s32.totalorder %s235, %s249
      %p251 = scmp.eq.s32.totalorder %s38, 0
      %p252 = por %p250, %p251
      %s254 = sadd.s32 %s253, 1
      %p257 = scmp.eq.s32.totalorder %s32, 1
      %p258 = scmp.ne.s32.totalorder %s253, %s255
      %p259 = scmp.eq.s32.totalorder %s32, 0
      %p260 = por %p258, %p259
      %p261 = scmp.ne.s32.totalorder %s253, %s255
      %p262 = scmp.eq.s32.totalorder %s37, 1
      %p263 = por %p261, %p262
      %p264 = scmp.ne.s32.totalorder %s255, %s256
      %p265 = scmp.eq.s32.totalorder %s37, 0
      %p266 = por %p264, %p265
      %p267 = scmp.ne.s32.totalorder %s255, %s256
      %p268 = scmp.eq.s32.totalorder %s38, 1
      %p269 = por %p267, %p268
      %p271 = scmp.ne.s32.totalorder %s256, %s270
      %p272 = scmp.eq.s32.totalorder %s38, 0
      %p273 = por %p271, %p272
      %s275 = sadd.s32 %s274, 1
      %p278 = scmp.eq.s32.totalorder %s32, 1
      %p279 = scmp.ne.s32.totalorder %s274, %s276
      %p280 = scmp.eq.s32.totalorder %s32, 0
      %p281 = por %p279, %p280
      %p282 = scmp.ne.s32.totalorder %s274, %s276
      %p283 = scmp.eq.s32.totalorder %s37, 1
      %p284 = por %p282, %p283
      %p285 = scmp.ne.s32.totalorder %s276, %s277
      %p286 = scmp.eq.s32.totalorder %s37, 0
      %p287 = por %p285, %p286
      %p288 = scmp.ne.s32.totalorder %s276, %s277
      %p289 = scmp.eq.s32.totalorder %s38, 1
      %p290 = por %p288, %p289
      %p292 = scmp.ne.s32.totalorder %s277, %s291
      %p293 = scmp.eq.s32.totalorder %s38, 0
      %p294 = por %p292, %p293
      %s296 = sadd.s32 %s295, 1
      %p299 = scmp.eq.s32.totalorder %s32, 1
      %p300 = scmp.ne.s32.totalorder %s295, %s297
      %p301 = scmp.eq.s32.totalorder %s32, 0
      %p302 = por %p300, %p301
      %p303 = scmp.ne.s32.totalorder %s295, %s297
      %p304 = scmp.eq.s32.totalorder %s37, 1
      %p305 = por %p303, %p304
      %p306 = scmp.ne.s32.totalorder %s297, %s298
      %p307 = scmp.eq.s32.totalorder %s37, 0
      %p308 = por %p306, %p307
      %p309 = scmp.ne.s32.totalorder %s297, %s298
      %p310 = scmp.eq.s32.totalorder %s38, 1
      %p311 = por %p309, %p310
      %p313 = scmp.ne.s32.totalorder %s298, %s312
      %p314 = scmp.eq.s32.totalorder %s38, 0
      %p315 = por %p313, %p314
      %s317 = sadd.s32 %s316, 1
      %p320 = scmp.eq.s32.totalorder %s32, 1
      %p321 = scmp.ne.s32.totalorder %s316, %s318
      %p322 = scmp.eq.s32.totalorder %s32, 0
      %p323 = por %p321, %p322
      %p324 = scmp.ne.s32.totalorder %s316, %s318
      %p325 = scmp.eq.s32.totalorder %s37, 1
      %p326 = por %p324, %p325
      %p327 = scmp.ne.s32.totalorder %s318, %s319
      %p328 = scmp.eq.s32.totalorder %s37, 0
      %p329 = por %p327, %p328
      %p330 = scmp.ne.s32.totalorder %s318, %s319
      %p331 = scmp.eq.s32.totalorder %s38, 1
      %p332 = por %p330, %p331
      %p334 = scmp.ne.s32.totalorder %s319, %s333
      %p335 = scmp.eq.s32.totalorder %s38, 0
      %p336 = por %p334, %p335
      %s338 = sadd.s32 %s337, 1
      %p341 = scmp.eq.s32.totalorder %s32, 1
      %p342 = scmp.ne.s32.totalorder %s337, %s339
      %p343 = scmp.eq.s32.totalorder %s32, 0
      %p344 = por %p342, %p343
      %p345 = scmp.ne.s32.totalorder %s337, %s339
      %p346 = scmp.eq.s32.totalorder %s37, 1
      %p347 = por %p345, %p346
      %p348 = scmp.ne.s32.totalorder %s339, %s340
      %p349 = scmp.eq.s32.totalorder %s37, 0
      %p350 = por %p348, %p349
      %p351 = scmp.ne.s32.totalorder %s339, %s340
      %p352 = scmp.eq.s32.totalorder %s38, 1
      %p353 = por %p351, %p352
      %p355 = scmp.ne.s32.totalorder %s340, %s354
      %p356 = scmp.eq.s32.totalorder %s38, 0
      %p357 = por %p355, %p356
      %s358 = ssub.s32 %s39, %s51
      %s359 = ssub.s32 %s40, %s47
      %s360 = sor.u32 %s358, %s359
      %p361 = scmp.eq.s32.totalorder %s360, 0
      %s363 = sadd.s32 %s362, 1
      %s364 = scalar_select %p361, %s362, %s363
      %p367 = pneg %p361
      %p368 = scmp.eq.s32.totalorder %s32, 1
      %p369 = por %p367, %p368
      %p370 = scmp.ne.s32.totalorder %s362, %s365
      %p371 = scmp.eq.s32.totalorder %s32, 0
      %p372 = por %p370, %p371
      %p373 = scmp.ne.s32.totalorder %s362, %s365
      %p374 = scmp.eq.s32.totalorder %s37, 1
      %p375 = por %p373, %p374
      %p376 = scmp.ne.s32.totalorder %s365, %s366
      %p377 = scmp.eq.s32.totalorder %s37, 0
      %p378 = por %p376, %p377
      %p379 = scmp.ne.s32.totalorder %s365, %s366
      %p380 = scmp.eq.s32.totalorder %s38, 1
      %p381 = por %p379, %p380
      %p383 = scmp.ne.s32.totalorder %s366, %s382
      %p384 = scmp.eq.s32.totalorder %s38, 0
      %p385 = por %p383, %p384
      %p386 = scmp.le.s32.totalorder 1, %s32
      %p387 = scmp.lt.s32.totalorder %s32, 3
      %p388 = pnand %p386, %p387
      %p389 = pneg %p388
      // Predicated region
      $region9: #{tpu_custom_call.1} parent=5 // pred_check
        _
      $region10: #{tpu_custom_call.1} parent=5 // pred_check_branch
        %391 = sbr.rel (%p388) target = $region12
      $region11: #{tpu_custom_call.1} parent=5 // pred_region
        %s392 = ssub.s32 %s32, 1
        // Predicated region
        $region13: #{tpu_custom_call.1} parent=11 // pred_check
          %p393 = pneg %p119
        $region14: #{tpu_custom_call.1} parent=11 // pred_check_branch
          %395 = sbr.rel (%p393) target = $region16
        $region15: #{tpu_custom_call.1} parent=11 // pred_region
          %s397 = ssub.s32 32, 32
          %398 = vsyncadd [#allocation9], %s397
          %s400 = sshll.u32 [#allocation10], 4
          %s401 = int_to_ptr.vmem [resolvable:$true] %s400
          %403 = dma.hbm_to_vmem [thread:$0]  %s2, 32, %s401, [#allocation9]
        $region16: #{tpu_custom_call.1} parent=11 // pred_fallthru
          _
        // Predicated region
        $region17: #{tpu_custom_call.1} parent=11 // pred_check
          %p404 = pneg %p140
        $region18: #{tpu_custom_call.1} parent=11 // pred_check_branch
          %406 = sbr.rel (%p404) target = $region20
        $region19: #{tpu_custom_call.1} parent=11 // pred_region
          %s408 = ssub.s32 32, 32
          %409 = vsyncadd [#allocation12], %s408
          %s411 = sshll.u32 [#allocation11], 4
          %s412 = int_to_ptr.vmem [resolvable:$true] %s411
          %414 = dma.hbm_to_vmem [thread:$0]  %s3, 32, %s412, [#allocation12]
        $region20: #{tpu_custom_call.1} parent=11 // pred_fallthru
          _
        // Predicated region
        $region21: #{tpu_custom_call.1} parent=11 // pred_check
          %p415 = pneg %p161
        $region22: #{tpu_custom_call.1} parent=11 // pred_check_branch
          %417 = sbr.rel (%p415) target = $region24
        $region23: #{tpu_custom_call.1} parent=11 // pred_region
          %s419 = ssub.s32 12288, 12288
          %420 = vsyncadd [#allocation12], %s419
          %s421 = sshll.u32 [#allocation13], 4
          %s422 = int_to_ptr.vmem [resolvable:$true] %s421
          %427 = dma.hbm_to_vmem [thread:$0]  %s4, 12288, %s422, [#allocation12], 384, 384, 24
        $region24: #{tpu_custom_call.1} parent=11 // pred_fallthru
          _
        // Predicated region
        $region25: #{tpu_custom_call.1} parent=11 // pred_check
          %p428 = pneg %p182
        $region26: #{tpu_custom_call.1} parent=11 // pred_check_branch
          %430 = sbr.rel (%p428) target = $region28
        $region27: #{tpu_custom_call.1} parent=11 // pred_region
          _
        $region28: #{tpu_custom_call.1} parent=11 // pred_fallthru
          _
        // Predicated region
        $region29: #{tpu_custom_call.1} parent=11 // pred_check
          %p431 = pneg %p203
        $region30: #{tpu_custom_call.1} parent=11 // pred_check_branch
          %433 = sbr.rel (%p431) target = $region32
        $region31: #{tpu_custom_call.1} parent=11 // pred_region
          %s435 = ssub.s32 4096, 4096
          %436 = vsyncadd [#allocation15], %s435
          %s437 = sshll.u32 [#allocation14], 4
          %s438 = int_to_ptr.vmem [resolvable:$true] %s437
          %443 = dma.hbm_to_vmem [thread:$0]  %s6, 4096, %s438, [#allocation15], 128, 128, 8
        $region32: #{tpu_custom_call.1} parent=11 // pred_fallthru
          _
        // Predicated region
        $region33: #{tpu_custom_call.1} parent=11 // pred_check
          %p444 = pneg %p224
        $region34: #{tpu_custom_call.1} parent=11 // pred_check_branch
          %446 = sbr.rel (%p444) target = $region36
        $region35: #{tpu_custom_call.1} parent=11 // pred_region
          _
        $region36: #{tpu_custom_call.1} parent=11 // pred_fallthru
          _
        // Predicated region
        $region37: #{tpu_custom_call.1} parent=11 // pred_check
          %p447 = pneg %p245
        $region38: #{tpu_custom_call.1} parent=11 // pred_check_branch
          %449 = sbr.rel (%p447) target = $region40
        $region39: #{tpu_custom_call.1} parent=11 // pred_region
          _
        $region40: #{tpu_custom_call.1} parent=11 // pred_fallthru
          _
        // Predicated region
        $region41: #{tpu_custom_call.1} parent=11 // pred_check
          %p450 = pneg %p266
        $region42: #{tpu_custom_call.1} parent=11 // pred_check_branch
          %452 = sbr.rel (%p450) target = $region44
        $region43: #{tpu_custom_call.1} parent=11 // pred_region
          _
        $region44: #{tpu_custom_call.1} parent=11 // pred_fallthru
          _
        // Predicated region
        $region45: #{tpu_custom_call.1} parent=11 // pred_check
          %p453 = pneg %p287
        $region46: #{tpu_custom_call.1} parent=11 // pred_check_branch
          %455 = sbr.rel (%p453) target = $region48
        $region47: #{tpu_custom_call.1} parent=11 // pred_region
          %s457 = ssub.s32 8192, 8192
          %458 = vsyncadd [#allocation15], %s457
          %s459 = sshll.u32 [#allocation16], 4
          %s460 = int_to_ptr.vmem [resolvable:$true] %s459
          %465 = dma.hbm_to_vmem [thread:$0]  %s10, 8192, %s460, [#allocation15], 256, 256, 16
        $region48: #{tpu_custom_call.1} parent=11 // pred_fallthru
          _
        // Predicated region
        $region49: #{tpu_custom_call.1} parent=11 // pred_check
          %p466 = pneg %p308
        $region50: #{tpu_custom_call.1} parent=11 // pred_check_branch
          %468 = sbr.rel (%p466) target = $region52
        $region51: #{tpu_custom_call.1} parent=11 // pred_region
          _
        $region52: #{tpu_custom_call.1} parent=11 // pred_fallthru
          _
        // Predicated region
        $region53: #{tpu_custom_call.1} parent=11 // pred_check
          %p469 = pneg %p329
        $region54: #{tpu_custom_call.1} parent=11 // pred_check_branch
          %471 = sbr.rel (%p469) target = $region56
        $region55: #{tpu_custom_call.1} parent=11 // pred_region
          %s473 = ssub.s32 8192, 8192
          %474 = vsyncadd [#allocation18], %s473
          %s475 = sshll.u32 [#allocation17], 4
          %s476 = int_to_ptr.vmem [resolvable:$true] %s475
          %481 = dma.hbm_to_vmem [thread:$0]  %s12, 8192, %s476, [#allocation18], 128, 128, 8
        $region56: #{tpu_custom_call.1} parent=11 // pred_fallthru
          _
        // Predicated region
        $region57: #{tpu_custom_call.1} parent=11 // pred_check
          %p482 = pneg %p350
        $region58: #{tpu_custom_call.1} parent=11 // pred_check_branch
          %484 = sbr.rel (%p482) target = $region60
        $region59: #{tpu_custom_call.1} parent=11 // pred_region
          _
        $region60: #{tpu_custom_call.1} parent=11 // pred_fallthru
          _
      $region12: #{tpu_custom_call.1} parent=5 // pred_fallthru
        _
      %p485 = scmp.lt.s32.totalorder %s32, 2
      // Predicated region
      $region61: #{tpu_custom_call.1} parent=5 // pred_check
        %p486 = pneg %p485
      $region62: #{tpu_custom_call.1} parent=5 // pred_check_branch
        %488 = sbr.rel (%p486) target = $region64
      $region63: #{tpu_custom_call.1} parent=5 // pred_region
        // Predicated region
        $region65: #{tpu_custom_call.1} parent=63 // pred_check
          %p489 = pneg %p64
        $region66: #{tpu_custom_call.1} parent=63 // pred_check_branch
          %491 = sbr.rel (%p489) target = $region68
        $region67: #{tpu_custom_call.1} parent=63 // pred_region
          %s492 = sand.u32 %s54, 1
          %s493 = scalar_lea.sflag [#allocation6], %s492
          %s494 = sand.u32 %s54, 1
          %s495 = smul.addr %s494, 16
          %s496 = scalar_lea.vmem [#allocation5], %s495
          %s498 = ssub.s32 256, 256
          %499 = vsyncadd %s493, %s498
          %s500 = smul.addr %s39, 4
          %s501 = smul.addr %s500, 64
          %s502 = scalar_lea.hbm %s0, %s501
          %s503 = sshll.u32 %s496, 4
          %s504 = int_to_ptr.vmem [resolvable:$true] %s503
          %509 = dma.hbm_to_vmem [thread:$0]  %s502, 256, %s504, %s493, 128, 128, 8
        $region68: #{tpu_custom_call.1} parent=63 // pred_fallthru
          _
        // Predicated region
        $region69: #{tpu_custom_call.1} parent=63 // pred_check
          %p510 = pneg %p92
        $region70: #{tpu_custom_call.1} parent=63 // pred_check_branch
          %512 = sbr.rel (%p510) target = $region72
        $region71: #{tpu_custom_call.1} parent=63 // pred_region
          %s513 = sand.u32 %s32, 1
          %s514 = scalar_lea.sflag [#allocation9], %s513
          %s515 = sand.u32 %s82, 1
          %s516 = smul.addr %s515, 8
          %s517 = scalar_lea.vmem [#allocation8], %s516
          %s518 = smul.u32 2, %s40
          %s520 = ssub.s32 128, 128
          %521 = vsyncadd %s514, %s520
          %s522 = smul.addr %s39, 2
          %s523 = sadd.s32 %s518, %s522
          %s524 = smul.addr %s523, 64
          %s525 = scalar_lea.hbm %s1, %s524
          %s526 = sshll.u32 %s517, 4
          %s527 = int_to_ptr.vmem [resolvable:$true] %s526
          %532 = dma.hbm_to_vmem [thread:$0]  %s525, 128, %s527, %s514, 64, 64, 4
        $region72: #{tpu_custom_call.1} parent=63 // pred_fallthru
          _
      $region64: #{tpu_custom_call.1} parent=5 // pred_fallthru
        _
      %p533 = scmp.le.s32.totalorder 1, %s32
      %p534 = scmp.lt.s32.totalorder %s32, 3
      %p535 = pnand %p533, %p534
      %p536 = pneg %p535
      // Predicated region
      $region73: #{tpu_custom_call.1} parent=5 // pred_check
        _
      $region74: #{tpu_custom_call.1} parent=5 // pred_check_branch
        %538 = sbr.rel (%p535) target = $region76
      $region75: #{tpu_custom_call.1} parent=5 // pred_region
        %s539 = ssub.s32 %s32, 1
        %s540 = sand.u32 %s57, 1
        %s541 = scalar_lea.sflag [#allocation6], %s540
        %s542 = sand.u32 %s57, 1
        %s543 = smul.addr %s542, 16
        %s544 = scalar_lea.vmem [#allocation5], %s543
        // Predicated region
        $region77: #{tpu_custom_call.1} parent=75 // pred_check
          %p545 = pneg %p70
        $region78: #{tpu_custom_call.1} parent=75 // pred_check_branch
          %547 = sbr.rel (%p545) target = $region80
        $region79: #{tpu_custom_call.1} parent=75 // pred_region
          %548 = dma.done %s541, 256
        $region80: #{tpu_custom_call.1} parent=75 // pred_fallthru
          _
        %s549 = sand.u32 %s37, 1
        %s550 = scalar_lea.sflag [#allocation9], %s549
        %s551 = sand.u32 %s85, 1
        %s552 = smul.addr %s551, 8
        %s553 = scalar_lea.vmem [#allocation8], %s552
        // Predicated region
        $region81: #{tpu_custom_call.1} parent=75 // pred_check
          %p554 = pneg %p98
        $region82: #{tpu_custom_call.1} parent=75 // pred_check_branch
          %556 = sbr.rel (%p554) target = $region84
        $region83: #{tpu_custom_call.1} parent=75 // pred_region
          %557 = dma.done %s550, 128
        $region84: #{tpu_custom_call.1} parent=75 // pred_fallthru
          _
        // Predicated region
        $region85: #{tpu_custom_call.1} parent=75 // pred_check
          %p558 = pneg %p119
        $region86: #{tpu_custom_call.1} parent=75 // pred_check_branch
          %560 = sbr.rel (%p558) target = $region88
        $region87: #{tpu_custom_call.1} parent=75 // pred_region
          %561 = dma.done [#allocation9], 32
        $region88: #{tpu_custom_call.1} parent=75 // pred_fallthru
          _
        // Predicated region
        $region89: #{tpu_custom_call.1} parent=75 // pred_check
          %p562 = pneg %p140
        $region90: #{tpu_custom_call.1} parent=75 // pred_check_branch
          %564 = sbr.rel (%p562) target = $region92
        $region91: #{tpu_custom_call.1} parent=75 // pred_region
          %565 = dma.done [#allocation12], 32
        $region92: #{tpu_custom_call.1} parent=75 // pred_fallthru
          _
        // Predicated region
        $region93: #{tpu_custom_call.1} parent=75 // pred_check
          %p566 = pneg %p161
        $region94: #{tpu_custom_call.1} parent=75 // pred_check_branch
          %568 = sbr.rel (%p566) target = $region96
        $region95: #{tpu_custom_call.1} parent=75 // pred_region
          %569 = dma.done [#allocation12], 12288
        $region96: #{tpu_custom_call.1} parent=75 // pred_fallthru
          _
        // Predicated region
        $region97: #{tpu_custom_call.1} parent=75 // pred_check
          %p570 = pneg %p203
        $region98: #{tpu_custom_call.1} parent=75 // pred_check_branch
          %572 = sbr.rel (%p570) target = $region100
        $region99: #{tpu_custom_call.1} parent=75 // pred_region
          %573 = dma.done [#allocation15], 4096
        $region100: #{tpu_custom_call.1} parent=75 // pred_fallthru
          _
        // Predicated region
        $region101: #{tpu_custom_call.1} parent=75 // pred_check
          %p574 = pneg %p287
        $region102: #{tpu_custom_call.1} parent=75 // pred_check_branch
          %576 = sbr.rel (%p574) target = $region104
        $region103: #{tpu_custom_call.1} parent=75 // pred_region
          %577 = dma.done [#allocation15], 8192
        $region104: #{tpu_custom_call.1} parent=75 // pred_fallthru
          _
        // Predicated region
        $region105: #{tpu_custom_call.1} parent=75 // pred_check
          %p578 = pneg %p329
        $region106: #{tpu_custom_call.1} parent=75 // pred_check_branch
          %580 = sbr.rel (%p578) target = $region108
        $region107: #{tpu_custom_call.1} parent=75 // pred_region
          %581 = dma.done [#allocation18], 8192
        $region108: #{tpu_custom_call.1} parent=75 // pred_fallthru
          _
        %s582 = sand.u32 %s57, 1
        %s583 = scalar_lea.sflag [#allocation6], %s582
        %s584 = sand.u32 %s57, 1
        %s585 = smul.addr %s584, 16
        %s586 = scalar_lea.vmem [#allocation5], %s585
        %p587 = pneg %p70
        %p588 = pneg %p67
        %s589 = sand.u32 %s37, 1
        %s590 = scalar_lea.sflag [#allocation9], %s589
        %s591 = sand.u32 %s85, 1
        %s592 = smul.addr %s591, 8
        %s593 = scalar_lea.vmem [#allocation8], %s592
        %p594 = pneg %p98
        %p595 = pneg %p95
        %p596 = pneg %p119
        %p597 = pneg %p116
        %p598 = pneg %p140
        %p599 = pneg %p137
        %p600 = pneg %p161
        %p601 = pneg %p158
        %p602 = pneg %p182
        %p603 = pneg %p179
        %p604 = pneg %p203
        %p605 = pneg %p200
        %p606 = pneg %p224
        %p607 = pneg %p221
        %p608 = pneg %p245
        %p609 = pneg %p242
        %p610 = pneg %p266
        %p611 = pneg %p263
        %p612 = pneg %p287
        %p613 = pneg %p284
        %p614 = pneg %p308
        %p615 = pneg %p305
        %p616 = pneg %p329
        %p617 = pneg %p326
        %p618 = pneg %p350
        %p619 = pneg %p347
        %p620 = pneg %p378
        %p621 = pneg %p375
        %s622 = sand.u32 %s365, 1
        %s623 = scalar_lea.sflag [#allocation7], %s622
        %s624 = sand.u32 %s365, 1
        %s625 = smul.addr %s624, 32
        %s626 = scalar_lea.vmem [#allocation19], %s625
        %s627 = smul.u32 2, %s42
        %s628 = smul.u32 2, %s42
        %p630 = scmp.eq.s32.totalorder %s42, 0
        // Predicated region
        $region109: #{tpu_custom_call.1} parent=75 // pred_check
          %p631 = pneg %p630
        $region110: #{tpu_custom_call.1} parent=75 // pred_check_branch
          %633 = sbr.rel (%p631) target = $region112
        $region111: #{tpu_custom_call.1} parent=75 // pred_region
          %v634 = vld [vmem:[%s544] sm:$0xff]
          %v635 = vld [vmem:[%s544 + $0x8] sm:$0xff]
          %v636 = vunpack.c.l.bf16 %v634
          %v637 = vunpack.c.h.bf16 %v634
          %v638 = vunpack.c.l.bf16 %v635
          %v639 = vunpack.c.h.bf16 %v635
          %v640 = vld [vmem:[#allocation10] sm:$0x3]
          %v641 = vld [vmem:[#allocation11] sm:$0x3]
          %v642 = vadd.f32 %v636, %v637
          %643 = vadd.xlane.f32.xlu0 %v642
          %v644 = vpop.xlane.xlu0 %643
          %v645 = vadd.f32 %v638, %v639
          %646 = vadd.xlane.f32.xlu0 %v645
          %v647 = vpop.xlane.xlu0 %646
          %v648 = vrcp.pop 256.0
          %v649 = vmul.f32 %v644, %v648
          %v650 = vmul.f32 %v647, %v648
          %v651 = vsub.f32 %v636, %v649
          %v652 = vsub.f32 %v637, %v649
          %v653 = vsub.f32 %v638, %v650
          %v654 = vsub.f32 %v639, %v650
          %v655 = vmul.f32 %v651, %v651
          %v656 = vmul.f32 %v652, %v652
          %v657 = vmul.f32 %v653, %v653
          %v658 = vmul.f32 %v654, %v654
          %v659 = vadd.f32 %v655, %v656
          %660 = vadd.xlane.f32.xlu0 %v659
          %v661 = vpop.xlane.xlu0 %660
          %v662 = vadd.f32 %v657, %v658
          %663 = vadd.xlane.f32.xlu0 %v662
          %v664 = vpop.xlane.xlu0 %663
          %v665 = vmul.f32 %v661, %v648
          %v666 = vmul.f32 %v664, %v648
          %v667 = vadd.f32 %v665, 1e-06
          %v668 = vadd.f32 %v666, 1e-06
          %v669 = vrsqrt.pop %v667
          %v670 = vrsqrt.pop %v668
          %v671 = vmul.f32 %v651, %v669
          %v672 = vmul.f32 %v652, %v669
          %v673 = vmul.f32 %v653, %v670
          %v674 = vmul.f32 %v654, %v670
          %v676 = vlaneseq
          %v677 = vshrl.u32 %v676, 7
          %v678 = vsub.s32 0, %v677
          %v679 = vrot.slane %v640, %v678
          %v680 = vlaneseq
          %v681 = vshrl.u32 %v680, 7
          %v682 = vsub.s32 1, %v681
          %v683 = vrot.slane %v640, %v682
          %v686 = vmul.f32 %v671, %v679
          %v687 = vmul.f32 %v672, %v683
          %v688 = vmul.f32 %v673, %v679
          %v689 = vmul.f32 %v674, %v683
          %v691 = vlaneseq
          %v692 = vshrl.u32 %v691, 7
          %v693 = vsub.s32 0, %v692
          %v694 = vrot.slane %v641, %v693
          %v695 = vlaneseq
          %v696 = vshrl.u32 %v695, 7
          %v697 = vsub.s32 1, %v696
          %v698 = vrot.slane %v641, %v697
          %v701 = vadd.f32 %v686, %v694
          %v702 = vadd.f32 %v687, %v698
          %v703 = vadd.f32 %v688, %v694
          %v704 = vadd.f32 %v689, %v698
          %v705 = vpack.c.bf16 %v703, %v701
          %v706 = vpack.c.bf16 %v704, %v702
          %v707 = vld [vmem:[#allocation13] sm:$0xff]
          %v708 = vld [vmem:[#allocation13 + $0x8] sm:$0xff]
          %v709 = vld [vmem:[#allocation13 + $0x10] sm:$0xff]
          %v710 = vld [vmem:[#allocation13 + $0x18] sm:$0xff]
          %v711 = vld [vmem:[#allocation13 + $0x20] sm:$0xff]
          %v712 = vld [vmem:[#allocation13 + $0x28] sm:$0xff]
          %v713 = vld [vmem:[#allocation13 + $0x30] sm:$0xff]
          %v714 = vld [vmem:[#allocation13 + $0x38] sm:$0xff]
          %v715 = vld [vmem:[#allocation13 + $0x40] sm:$0xff]
          %v716 = vld [vmem:[#allocation13 + $0x48] sm:$0xff]
          %v717 = vld [vmem:[#allocation13 + $0x50] sm:$0xff]
          %v718 = vld [vmem:[#allocation13 + $0x58] sm:$0xff]
          %v719 = vld [vmem:[#allocation13 + $0x60] sm:$0xff]
          %v720 = vld [vmem:[#allocation13 + $0x68] sm:$0xff]
          %v721 = vld [vmem:[#allocation13 + $0x70] sm:$0xff]
          %v722 = vld [vmem:[#allocation13 + $0x78] sm:$0xff]
          %v723 = vld [vmem:[#allocation13 + $0x80] sm:$0xff]
          %v724 = vld [vmem:[#allocation13 + $0x88] sm:$0xff]
          %v725 = vld [vmem:[#allocation13 + $0x90] sm:$0xff]
          %v726 = vld [vmem:[#allocation13 + $0x98] sm:$0xff]
          %v727 = vld [vmem:[#allocation13 + $0xa0] sm:$0xff]
          %v728 = vld [vmem:[#allocation13 + $0xa8] sm:$0xff]
          %v729 = vld [vmem:[#allocation13 + $0xb0] sm:$0xff]
          %v730 = vld [vmem:[#allocation13 + $0xb8] sm:$0xff]
          %v731 = vld [vmem:[#allocation13 + $0xc0] sm:$0xff]
          %v732 = vld [vmem:[#allocation13 + $0xc8] sm:$0xff]
          %v733 = vld [vmem:[#allocation13 + $0xd0] sm:$0xff]
          %v734 = vld [vmem:[#allocation13 + $0xd8] sm:$0xff]
          %v735 = vld [vmem:[#allocation13 + $0xe0] sm:$0xff]
          %v736 = vld [vmem:[#allocation13 + $0xe8] sm:$0xff]
          %v737 = vld [vmem:[#allocation13 + $0xf0] sm:$0xff]
          %v738 = vld [vmem:[#allocation13 + $0xf8] sm:$0xff]
          %v739 = vld [vmem:[#allocation13 + $0x100] sm:$0xff]
          %v740 = vld [vmem:[#allocation13 + $0x108] sm:$0xff]
          %v741 = vld [vmem:[#allocation13 + $0x110] sm:$0xff]
          %v742 = vld [vmem:[#allocation13 + $0x118] sm:$0xff]
          %v743 = vld [vmem:[#allocation13 + $0x120] sm:$0xff]
          %v744 = vld [vmem:[#allocation13 + $0x128] sm:$0xff]
          %v745 = vld [vmem:[#allocation13 + $0x130] sm:$0xff]
          %v746 = vld [vmem:[#allocation13 + $0x138] sm:$0xff]
          %v747 = vld [vmem:[#allocation13 + $0x140] sm:$0xff]
          %v748 = vld [vmem:[#allocation13 + $0x148] sm:$0xff]
          %v749 = vld [vmem:[#allocation13 + $0x150] sm:$0xff]
          %v750 = vld [vmem:[#allocation13 + $0x158] sm:$0xff]
          %v751 = vld [vmem:[#allocation13 + $0x160] sm:$0xff]
          %v752 = vld [vmem:[#allocation13 + $0x168] sm:$0xff]
          %v753 = vld [vmem:[#allocation13 + $0x170] sm:$0xff]
          %v754 = vld [vmem:[#allocation13 + $0x178] sm:$0xff]
          %v755 = vld [vmem:[#allocation13 + $0x180] sm:$0xff]
          %v756 = vld [vmem:[#allocation13 + $0x188] sm:$0xff]
          %v757 = vld [vmem:[#allocation13 + $0x190] sm:$0xff]
          %v758 = vld [vmem:[#allocation13 + $0x198] sm:$0xff]
          %v759 = vld [vmem:[#allocation13 + $0x1a0] sm:$0xff]
          %v760 = vld [vmem:[#allocation13 + $0x1a8] sm:$0xff]
          %v761 = vld [vmem:[#allocation13 + $0x1b0] sm:$0xff]
          %v762 = vld [vmem:[#allocation13 + $0x1b8] sm:$0xff]
          %v763 = vld [vmem:[#allocation13 + $0x1c0] sm:$0xff]
          %v764 = vld [vmem:[#allocation13 + $0x1c8] sm:$0xff]
          %v765 = vld [vmem:[#allocation13 + $0x1d0] sm:$0xff]
          %v766 = vld [vmem:[#allocation13 + $0x1d8] sm:$0xff]
          %v767 = vld [vmem:[#allocation13 + $0x1e0] sm:$0xff]
          %v768 = vld [vmem:[#allocation13 + $0x1e8] sm:$0xff]
          %v769 = vld [vmem:[#allocation13 + $0x1f0] sm:$0xff]
          %v770 = vld [vmem:[#allocation13 + $0x1f8] sm:$0xff]
          %v771 = vld [vmem:[#allocation13 + $0x200] sm:$0xff]
          %v772 = vld [vmem:[#allocation13 + $0x208] sm:$0xff]
          %v773 = vld [vmem:[#allocation13 + $0x210] sm:$0xff]
          %v774 = vld [vmem:[#allocation13 + $0x218] sm:$0xff]
          %v775 = vld [vmem:[#allocation13 + $0x220] sm:$0xff]
          %v776 = vld [vmem:[#allocation13 + $0x228] sm:$0xff]
          %v777 = vld [vmem:[#allocation13 + $0x230] sm:$0xff]
          %v778 = vld [vmem:[#allocation13 + $0x238] sm:$0xff]
          %v779 = vld [vmem:[#allocation13 + $0x240] sm:$0xff]
          %v780 = vld [vmem:[#allocation13 + $0x248] sm:$0xff]
          %v781 = vld [vmem:[#allocation13 + $0x250] sm:$0xff]
          %v782 = vld [vmem:[#allocation13 + $0x258] sm:$0xff]
          %v783 = vld [vmem:[#allocation13 + $0x260] sm:$0xff]
          %v784 = vld [vmem:[#allocation13 + $0x268] sm:$0xff]
          %v785 = vld [vmem:[#allocation13 + $0x270] sm:$0xff]
          %v786 = vld [vmem:[#allocation13 + $0x278] sm:$0xff]
          %v787 = vld [vmem:[#allocation13 + $0x280] sm:$0xff]
          %v788 = vld [vmem:[#allocation13 + $0x288] sm:$0xff]
          %v789 = vld [vmem:[#allocation13 + $0x290] sm:$0xff]
          %v790 = vld [vmem:[#allocation13 + $0x298] sm:$0xff]
          %v791 = vld [vmem:[#allocation13 + $0x2a0] sm:$0xff]
          %v792 = vld [vmem:[#allocation13 + $0x2a8] sm:$0xff]
          %v793 = vld [vmem:[#allocation13 + $0x2b0] sm:$0xff]
          %v794 = vld [vmem:[#allocation13 + $0x2b8] sm:$0xff]
          %v795 = vld [vmem:[#allocation13 + $0x2c0] sm:$0xff]
          %v796 = vld [vmem:[#allocation13 + $0x2c8] sm:$0xff]
          %v797 = vld [vmem:[#allocation13 + $0x2d0] sm:$0xff]
          %v798 = vld [vmem:[#allocation13 + $0x2d8] sm:$0xff]
          %v799 = vld [vmem:[#allocation13 + $0x2e0] sm:$0xff]
          %v800 = vld [vmem:[#allocation13 + $0x2e8] sm:$0xff]
          %v801 = vld [vmem:[#allocation13 + $0x2f0] sm:$0xff]
          %v802 = vld [vmem:[#allocation13 + $0x2f8] sm:$0xff]
          %v803 = vld [vmem:[%s5] sm:$0x3f]
          %v805 = vlaneseq
          %v806 = vshrl.u32 %v805, 7
          %v807 = vsub.s32 0, %v806
          %v808 = vrot.slane %v803, %v807
          %v809 = vlaneseq
          %v810 = vshrl.u32 %v809, 7
          %v811 = vsub.s32 1, %v810
          %v812 = vrot.slane %v803, %v811
          %v813 = vlaneseq
          %v814 = vshrl.u32 %v813, 7
          %v815 = vsub.s32 2, %v814
          %v816 = vrot.slane %v803, %v815
          %v817 = vlaneseq
          %v818 = vshrl.u32 %v817, 7
          %v819 = vsub.s32 3, %v818
          %v820 = vrot.slane %v803, %v819
          %v821 = vlaneseq
          %v822 = vshrl.u32 %v821, 7
          %v823 = vsub.s32 4, %v822
          %v824 = vrot.slane %v803, %v823
          %v825 = vlaneseq
          %v826 = vshrl.u32 %v825, 7
          %v827 = vsub.s32 5, %v826
          %v828 = vrot.slane %v803, %v827
          %v931 = vunpack.c.l.b16 %v707
          %v932 = vunpack.c.h.b16 %v707
          %v933 = vunpack.c.l.b16 %v708
          %v934 = vunpack.c.h.b16 %v708
          %v935 = vunpack.c.l.b16 %v709
          %v936 = vunpack.c.h.b16 %v709
          %v937 = vunpack.c.l.b16 %v710
          %v938 = vunpack.c.h.b16 %v710
          %v939 = vunpack.c.l.b16 %v711
          %v940 = vunpack.c.h.b16 %v711
          %v941 = vunpack.c.l.b16 %v712
          %v942 = vunpack.c.h.b16 %v712
          %v943 = vunpack.c.l.b16 %v713
          %v944 = vunpack.c.h.b16 %v713
          %v945 = vunpack.c.l.b16 %v714
          %v946 = vunpack.c.h.b16 %v714
          %v947 = vunpack.c.l.b16 %v715
          %v948 = vunpack.c.h.b16 %v715
          %v949 = vunpack.c.l.b16 %v716
          %v950 = vunpack.c.h.b16 %v716
          %v951 = vunpack.c.l.b16 %v717
          %v952 = vunpack.c.h.b16 %v717
          %v953 = vunpack.c.l.b16 %v718
          %v954 = vunpack.c.h.b16 %v718
          %v955 = vunpack.c.l.b16 %v719
          %v956 = vunpack.c.h.b16 %v719
          %v957 = vunpack.c.l.b16 %v720
          %v958 = vunpack.c.h.b16 %v720
          %v959 = vunpack.c.l.b16 %v721
          %v960 = vunpack.c.h.b16 %v721
          %v961 = vunpack.c.l.b16 %v722
          %v962 = vunpack.c.h.b16 %v722
          %v963 = vunpack.c.l.b16 %v723
          %v964 = vunpack.c.h.b16 %v723
          %v965 = vunpack.c.l.b16 %v724
          %v966 = vunpack.c.h.b16 %v724
          %v967 = vunpack.c.l.b16 %v725
          %v968 = vunpack.c.h.b16 %v725
          %v969 = vunpack.c.l.b16 %v726
          %v970 = vunpack.c.h.b16 %v726
          %v971 = vunpack.c.l.b16 %v727
          %v972 = vunpack.c.h.b16 %v727
          %v973 = vunpack.c.l.b16 %v728
          %v974 = vunpack.c.h.b16 %v728
          %v975 = vunpack.c.l.b16 %v729
          %v976 = vunpack.c.h.b16 %v729
          %v977 = vunpack.c.l.b16 %v730
          %v978 = vunpack.c.h.b16 %v730
          %v979 = vunpack.c.l.b16 %v731
          %v980 = vunpack.c.h.b16 %v731
          %v981 = vunpack.c.l.b16 %v732
          %v982 = vunpack.c.h.b16 %v732
          %v983 = vunpack.c.l.b16 %v733
          %v984 = vunpack.c.h.b16 %v733
          %v985 = vunpack.c.l.b16 %v734
          %v986 = vunpack.c.h.b16 %v734
          %v987 = vunpack.c.l.b16 %v735
          %v988 = vunpack.c.h.b16 %v735
          %v989 = vunpack.c.l.b16 %v736
          %v990 = vunpack.c.h.b16 %v736
          %v991 = vunpack.c.l.b16 %v737
          %v992 = vunpack.c.h.b16 %v737
          %v993 = vunpack.c.l.b16 %v738
          %v994 = vunpack.c.h.b16 %v738
          %v995 = vunpack.c.l.b16 %v739
          %v996 = vunpack.c.h.b16 %v739
          %v997 = vunpack.c.l.b16 %v740
          %v998 = vunpack.c.h.b16 %v740
          %v999 = vunpack.c.l.b16 %v741
          %v1000 = vunpack.c.h.b16 %v741
          %v1001 = vunpack.c.l.b16 %v742
          %v1002 = vunpack.c.h.b16 %v742
          %v1003 = vunpack.c.l.b16 %v743
          %v1004 = vunpack.c.h.b16 %v743
          %v1005 = vunpack.c.l.b16 %v744
          %v1006 = vunpack.c.h.b16 %v744
          %v1007 = vunpack.c.l.b16 %v745
          %v1008 = vunpack.c.h.b16 %v745
          %v1009 = vunpack.c.l.b16 %v746
          %v1010 = vunpack.c.h.b16 %v746
          %v1011 = vunpack.c.l.b16 %v747
          %v1012 = vunpack.c.h.b16 %v747
          %v1013 = vunpack.c.l.b16 %v748
          %v1014 = vunpack.c.h.b16 %v748
          %v1015 = vunpack.c.l.b16 %v749
          %v1016 = vunpack.c.h.b16 %v749
          %v1017 = vunpack.c.l.b16 %v750
          %v1018 = vunpack.c.h.b16 %v750
          %v1019 = vunpack.c.l.b16 %v751
          %v1020 = vunpack.c.h.b16 %v751
          %v1021 = vunpack.c.l.b16 %v752
          %v1022 = vunpack.c.h.b16 %v752
          %v1023 = vunpack.c.l.b16 %v753
          %v1024 = vunpack.c.h.b16 %v753
          %v1025 = vunpack.c.l.b16 %v754
          %v1026 = vunpack.c.h.b16 %v754
          %v1027 = vunpack.c.l.b16 %v755
          %v1028 = vunpack.c.h.b16 %v755
          %v1029 = vunpack.c.l.b16 %v756
          %v1030 = vunpack.c.h.b16 %v756
          %v1031 = vunpack.c.l.b16 %v757
          %v1032 = vunpack.c.h.b16 %v757
          %v1033 = vunpack.c.l.b16 %v758
          %v1034 = vunpack.c.h.b16 %v758
          %v1035 = vunpack.c.l.b16 %v759
          %v1036 = vunpack.c.h.b16 %v759
          %v1037 = vunpack.c.l.b16 %v760
          %v1038 = vunpack.c.h.b16 %v760
          %v1039 = vunpack.c.l.b16 %v761
          %v1040 = vunpack.c.h.b16 %v761
          %v1041 = vunpack.c.l.b16 %v762
          %v1042 = vunpack.c.h.b16 %v762
          %v1043 = vunpack.c.l.b16 %v763
          %v1044 = vunpack.c.h.b16 %v763
          %v1045 = vunpack.c.l.b16 %v764
          %v1046 = vunpack.c.h.b16 %v764
          %v1047 = vunpack.c.l.b16 %v765
          %v1048 = vunpack.c.h.b16 %v765
          %v1049 = vunpack.c.l.b16 %v766
          %v1050 = vunpack.c.h.b16 %v766
          %v1051 = vunpack.c.l.b16 %v767
          %v1052 = vunpack.c.h.b16 %v767
          %v1053 = vunpack.c.l.b16 %v768
          %v1054 = vunpack.c.h.b16 %v768
          %v1055 = vunpack.c.l.b16 %v769
          %v1056 = vunpack.c.h.b16 %v769
          %v1057 = vunpack.c.l.b16 %v770
          %v1058 = vunpack.c.h.b16 %v770
          %v1059 = vunpack.c.l.b16 %v771
          %v1060 = vunpack.c.h.b16 %v771
          %v1061 = vunpack.c.l.b16 %v772
          %v1062 = vunpack.c.h.b16 %v772
          %v1063 = vunpack.c.l.b16 %v773
          %v1064 = vunpack.c.h.b16 %v773
          %v1065 = vunpack.c.l.b16 %v774
          %v1066 = vunpack.c.h.b16 %v774
          %v1067 = vunpack.c.l.b16 %v775
          %v1068 = vunpack.c.h.b16 %v775
          %v1069 = vunpack.c.l.b16 %v776
          %v1070 = vunpack.c.h.b16 %v776
          %v1071 = vunpack.c.l.b16 %v777
          %v1072 = vunpack.c.h.b16 %v777
          %v1073 = vunpack.c.l.b16 %v778
          %v1074 = vunpack.c.h.b16 %v778
          %v1075 = vunpack.c.l.b16 %v779
          %v1076 = vunpack.c.h.b16 %v779
          %v1077 = vunpack.c.l.b16 %v780
          %v1078 = vunpack.c.h.b16 %v780
          %v1079 = vunpack.c.l.b16 %v781
          %v1080 = vunpack.c.h.b16 %v781
          %v1081 = vunpack.c.l.b16 %v782
          %v1082 = vunpack.c.h.b16 %v782
          %v1083 = vunpack.c.l.b16 %v783
          %v1084 = vunpack.c.h.b16 %v783
          %v1085 = vunpack.c.l.b16 %v784
          %v1086 = vunpack.c.h.b16 %v784
          %v1087 = vunpack.c.l.b16 %v785
          %v1088 = vunpack.c.h.b16 %v785
          %v1089 = vunpack.c.l.b16 %v786
          %v1090 = vunpack.c.h.b16 %v786
          %v1091 = vunpack.c.l.b16 %v787
          %v1092 = vunpack.c.h.b16 %v787
          %v1093 = vunpack.c.l.b16 %v788
          %v1094 = vunpack.c.h.b16 %v788
          %v1095 = vunpack.c.l.b16 %v789
          %v1096 = vunpack.c.h.b16 %v789
          %v1097 = vunpack.c.l.b16 %v790
          %v1098 = vunpack.c.h.b16 %v790
          %v1099 = vunpack.c.l.b16 %v791
          %v1100 = vunpack.c.h.b16 %v791
          %v1101 = vunpack.c.l.b16 %v792
          %v1102 = vunpack.c.h.b16 %v792
          %v1103 = vunpack.c.l.b16 %v793
          %v1104 = vunpack.c.h.b16 %v793
          %v1105 = vunpack.c.l.b16 %v794
          %v1106 = vunpack.c.h.b16 %v794
          %v1107 = vunpack.c.l.b16 %v795
          %v1108 = vunpack.c.h.b16 %v795
          %v1109 = vunpack.c.l.b16 %v796
          %v1110 = vunpack.c.h.b16 %v796
          %v1111 = vunpack.c.l.b16 %v797
          %v1112 = vunpack.c.h.b16 %v797
          %v1113 = vunpack.c.l.b16 %v798
          %v1114 = vunpack.c.h.b16 %v798
          %v1115 = vunpack.c.l.b16 %v799
          %v1116 = vunpack.c.h.b16 %v799
          %v1117 = vunpack.c.l.b16 %v800
          %v1118 = vunpack.c.h.b16 %v800
          %v1119 = vunpack.c.l.b16 %v801
          %v1120 = vunpack.c.h.b16 %v801
          %v1121 = vunpack.c.l.b16 %v802
          %v1122 = vunpack.c.h.b16 %v802
          %v1123 = vpack.c.b16 %v937, %v931
          %v1124 = vpack.c.b16 %v938, %v932
          %v1125 = vpack.c.b16 %v939, %v933
          %v1126 = vpack.c.b16 %v940, %v934
          %v1127 = vpack.c.b16 %v941, %v935
          %v1128 = vpack.c.b16 %v942, %v936
          %v1129 = vpack.c.b16 %v949, %v943
          %v1130 = vpack.c.b16 %v950, %v944
          %v1131 = vpack.c.b16 %v951, %v945
          %v1132 = vpack.c.b16 %v952, %v946
          %v1133 = vpack.c.b16 %v953, %v947
          %v1134 = vpack.c.b16 %v954, %v948
          %v1135 = vpack.c.b16 %v961, %v955
          %v1136 = vpack.c.b16 %v962, %v956
          %v1137 = vpack.c.b16 %v963, %v957
          %v1138 = vpack.c.b16 %v964, %v958
          %v1139 = vpack.c.b16 %v965, %v959
          %v1140 = vpack.c.b16 %v966, %v960
          %v1141 = vpack.c.b16 %v973, %v967
          %v1142 = vpack.c.b16 %v974, %v968
          %v1143 = vpack.c.b16 %v975, %v969
          %v1144 = vpack.c.b16 %v976, %v970
          %v1145 = vpack.c.b16 %v977, %v971
          %v1146 = vpack.c.b16 %v978, %v972
          %v1147 = vpack.c.b16 %v985, %v979
          %v1148 = vpack.c.b16 %v986, %v980
          %v1149 = vpack.c.b16 %v987, %v981
          %v1150 = vpack.c.b16 %v988, %v982
          %v1151 = vpack.c.b16 %v989, %v983
          %v1152 = vpack.c.b16 %v990, %v984
          %v1153 = vpack.c.b16 %v997, %v991
          %v1154 = vpack.c.b16 %v998, %v992
          %v1155 = vpack.c.b16 %v999, %v993
          %v1156 = vpack.c.b16 %v1000, %v994
          %v1157 = vpack.c.b16 %v1001, %v995
          %v1158 = vpack.c.b16 %v1002, %v996
          %v1159 = vpack.c.b16 %v1009, %v1003
          %v1160 = vpack.c.b16 %v1010, %v1004
          %v1161 = vpack.c.b16 %v1011, %v1005
          %v1162 = vpack.c.b16 %v1012, %v1006
          %v1163 = vpack.c.b16 %v1013, %v1007
          %v1164 = vpack.c.b16 %v1014, %v1008
          %v1165 = vpack.c.b16 %v1021, %v1015
          %v1166 = vpack.c.b16 %v1022, %v1016
          %v1167 = vpack.c.b16 %v1023, %v1017
          %v1168 = vpack.c.b16 %v1024, %v1018
          %v1169 = vpack.c.b16 %v1025, %v1019
          %v1170 = vpack.c.b16 %v1026, %v1020
          %v1171 = vpack.c.b16 %v1033, %v1027
          %v1172 = vpack.c.b16 %v1034, %v1028
          %v1173 = vpack.c.b16 %v1035, %v1029
          %v1174 = vpack.c.b16 %v1036, %v1030
          %v1175 = vpack.c.b16 %v1037, %v1031
          %v1176 = vpack.c.b16 %v1038, %v1032
          %v1177 = vpack.c.b16 %v1045, %v1039
          %v1178 = vpack.c.b16 %v1046, %v1040
          %v1179 = vpack.c.b16 %v1047, %v1041
          %v1180 = vpack.c.b16 %v1048, %v1042
          %v1181 = vpack.c.b16 %v1049, %v1043
          %v1182 = vpack.c.b16 %v1050, %v1044
          %v1183 = vpack.c.b16 %v1057, %v1051
          %v1184 = vpack.c.b16 %v1058, %v1052
          %v1185 = vpack.c.b16 %v1059, %v1053
          %v1186 = vpack.c.b16 %v1060, %v1054
          %v1187 = vpack.c.b16 %v1061, %v1055
          %v1188 = vpack.c.b16 %v1062, %v1056
          %v1189 = vpack.c.b16 %v1069, %v1063
          %v1190 = vpack.c.b16 %v1070, %v1064
          %v1191 = vpack.c.b16 %v1071, %v1065
          %v1192 = vpack.c.b16 %v1072, %v1066
          %v1193 = vpack.c.b16 %v1073, %v1067
          %v1194 = vpack.c.b16 %v1074, %v1068
          %v1195 = vpack.c.b16 %v1081, %v1075
          %v1196 = vpack.c.b16 %v1082, %v1076
          %v1197 = vpack.c.b16 %v1083, %v1077
          %v1198 = vpack.c.b16 %v1084, %v1078
          %v1199 = vpack.c.b16 %v1085, %v1079
          %v1200 = vpack.c.b16 %v1086, %v1080
          %v1201 = vpack.c.b16 %v1093, %v1087
          %v1202 = vpack.c.b16 %v1094, %v1088
          %v1203 = vpack.c.b16 %v1095, %v1089
          %v1204 = vpack.c.b16 %v1096, %v1090
          %v1205 = vpack.c.b16 %v1097, %v1091
          %v1206 = vpack.c.b16 %v1098, %v1092
          %v1207 = vpack.c.b16 %v1105, %v1099
          %v1208 = vpack.c.b16 %v1106, %v1100
          %v1209 = vpack.c.b16 %v1107, %v1101
          %v1210 = vpack.c.b16 %v1108, %v1102
          %v1211 = vpack.c.b16 %v1109, %v1103
          %v1212 = vpack.c.b16 %v1110, %v1104
          %v1213 = vpack.c.b16 %v1117, %v1111
          %v1214 = vpack.c.b16 %v1118, %v1112
          %v1215 = vpack.c.b16 %v1119, %v1113
          %v1216 = vpack.c.b16 %v1120, %v1114
          %v1217 = vpack.c.b16 %v1121, %v1115
          %v1218 = vpack.c.b16 %v1122, %v1116
          %1315 = vmatprep.subr.bf16.mxu0 %v1166
          %1316 = vmatpush1.bf16.msra.mxu0 %v1165
          %1317 = vmatprep.subr.bf16.mxu0 %v1160
          %1318 = vmatpush1.bf16.msra.mxu0 %v1159
          %1319 = vmatprep.subr.bf16.mxu0 %v1154
          %1320 = vmatpush1.bf16.msra.mxu0 %v1153
          %1321 = vmatprep.subr.bf16.mxu0 %v1148
          %1322 = vmatpush1.bf16.msra.mxu0 %v1147
          %1323 = vmatprep.subr.bf16.mxu0 %v1142
          %1324 = vmatpush1.bf16.msra.mxu0 %v1141
          %1325 = vmatprep.subr.bf16.mxu0 %v1136
          %1326 = vmatpush1.bf16.msra.mxu0 %v1135
          %1327 = vmatprep.subr.bf16.mxu0 %v1130
          %1328 = vmatpush1.bf16.msra.mxu0 %v1129
          %1329 = vmatprep.subr.bf16.mxu0 %v1124
          %1330 = vmatpush1.bf16.msra.mxu0 %v1123
          %1331 = vmatprep.subr.bf16.mxu0 %v1214
          %1332 = vmatpush2.bf16.msra.mxu0 %v1213
          %1333 = vmatprep.subr.bf16.mxu0 %v1208
          %1334 = vmatpush2.bf16.msra.mxu0 %v1207
          %1335 = vmatprep.subr.bf16.mxu0 %v1202
          %1336 = vmatpush2.bf16.msra.mxu0 %v1201
          %1337 = vmatprep.subr.bf16.mxu0 %v1196
          %1338 = vmatpush2.bf16.msra.mxu0 %v1195
          %1339 = vmatprep.subr.bf16.mxu0 %v1190
          %1340 = vmatpush2.bf16.msra.mxu0 %v1189
          %1341 = vmatprep.subr.bf16.mxu0 %v1184
          %1342 = vmatpush2.bf16.msra.mxu0 %v1183
          %1343 = vmatprep.subr.bf16.mxu0 %v1178
          %1344 = vmatpush2.bf16.msra.mxu0 %v1177
          %1345 = vmatprep.subr.bf16.mxu0 %v1172
          %1346 = vmatpush2.bf16.msra.mxu0 %v1171
          %1347 = vmatprep.mubr.bf16.mxu0 %v706
          %1348 = vmatmul.mubr.bf16.gmra.mxu0 %v705
          %v1349 = vpop.f32.mrf.mxu0
          %v1350 = vadd.f32 %v808, %v1349
          %v1351 = vpop.f32.mrf.mxu0
          %v1352 = vadd.f32 %v812, %v1351
          %v1353 = vpop.f32.mrf.mxu0
          %v1354 = vadd.f32 %v808, %v1353
          %v1355 = vpop.f32.mrf.mxu0
          %v1356 = vadd.f32 %v812, %v1355
          %1357 = vdwg.mxu0
          %1358 = vmatprep.subr.bf16.mxu0 %v1168
          %1359 = vmatpush1.bf16.msra.mxu0 %v1167
          %1360 = vmatprep.subr.bf16.mxu0 %v1162
          %1361 = vmatpush1.bf16.msra.mxu0 %v1161
          %1362 = vmatprep.subr.bf16.mxu0 %v1156
          %1363 = vmatpush1.bf16.msra.mxu0 %v1155
          %1364 = vmatprep.subr.bf16.mxu0 %v1150
          %1365 = vmatpush1.bf16.msra.mxu0 %v1149
          %1366 = vmatprep.subr.bf16.mxu0 %v1144
          %1367 = vmatpush1.bf16.msra.mxu0 %v1143
          %1368 = vmatprep.subr.bf16.mxu0 %v1138
          %1369 = vmatpush1.bf16.msra.mxu0 %v1137
          %1370 = vmatprep.subr.bf16.mxu0 %v1132
          %1371 = vmatpush1.bf16.msra.mxu0 %v1131
          %1372 = vmatprep.subr.bf16.mxu0 %v1126
          %1373 = vmatpush1.bf16.msra.mxu0 %v1125
          %1374 = vmatprep.subr.bf16.mxu0 %v1216
          %1375 = vmatpush2.bf16.msra.mxu0 %v1215
          %1376 = vmatprep.subr.bf16.mxu0 %v1210
          %1377 = vmatpush2.bf16.msra.mxu0 %v1209
          %1378 = vmatprep.subr.bf16.mxu0 %v1204
          %1379 = vmatpush2.bf16.msra.mxu0 %v1203
          %1380 = vmatprep.subr.bf16.mxu0 %v1198
          %1381 = vmatpush2.bf16.msra.mxu0 %v1197
          %1382 = vmatprep.subr.bf16.mxu0 %v1192
          %1383 = vmatpush2.bf16.msra.mxu0 %v1191
          %1384 = vmatprep.subr.bf16.mxu0 %v1186
          %1385 = vmatpush2.bf16.msra.mxu0 %v1185
          %1386 = vmatprep.subr.bf16.mxu0 %v1180
          %1387 = vmatpush2.bf16.msra.mxu0 %v1179
          %1388 = vmatprep.subr.bf16.mxu0 %v1174
          %1389 = vmatpush2.bf16.msra.mxu0 %v1173
          %1390 = vmatprep.mubr.bf16.mxu0 %v706
          %1391 = vmatmul.mubr.bf16.gmra.mxu0 %v705
          %v1392 = vpop.f32.mrf.mxu0
          %v1393 = vadd.f32 %v816, %v1392
          %v1394 = vpop.f32.mrf.mxu0
          %v1395 = vadd.f32 %v820, %v1394
          %v1396 = vpop.f32.mrf.mxu0
          %v1397 = vadd.f32 %v816, %v1396
          %v1398 = vpop.f32.mrf.mxu0
          %v1399 = vadd.f32 %v820, %v1398
          %1400 = vdwg.mxu0
          %1401 = vmatprep.subr.bf16.mxu0 %v1170
          %1402 = vmatpush1.bf16.msra.mxu0 %v1169
          %1403 = vmatprep.subr.bf16.mxu0 %v1164
          %1404 = vmatpush1.bf16.msra.mxu0 %v1163
          %1405 = vmatprep.subr.bf16.mxu0 %v1158
          %1406 = vmatpush1.bf16.msra.mxu0 %v1157
          %1407 = vmatprep.subr.bf16.mxu0 %v1152
          %1408 = vmatpush1.bf16.msra.mxu0 %v1151
          %1409 = vmatprep.subr.bf16.mxu0 %v1146
          %1410 = vmatpush1.bf16.msra.mxu0 %v1145
          %1411 = vmatprep.subr.bf16.mxu0 %v1140
          %1412 = vmatpush1.bf16.msra.mxu0 %v1139
          %1413 = vmatprep.subr.bf16.mxu0 %v1134
          %1414 = vmatpush1.bf16.msra.mxu0 %v1133
          %1415 = vmatprep.subr.bf16.mxu0 %v1128
          %1416 = vmatpush1.bf16.msra.mxu0 %v1127
          %1417 = vmatprep.subr.bf16.mxu0 %v1218
          %1418 = vmatpush2.bf16.msra.mxu0 %v1217
          %1419 = vmatprep.subr.bf16.mxu0 %v1212
          %1420 = vmatpush2.bf16.msra.mxu0 %v1211
          %1421 = vmatprep.subr.bf16.mxu0 %v1206
          %1422 = vmatpush2.bf16.msra.mxu0 %v1205
          %1423 = vmatprep.subr.bf16.mxu0 %v1200
          %1424 = vmatpush2.bf16.msra.mxu0 %v1199
          %1425 = vmatprep.subr.bf16.mxu0 %v1194
          %1426 = vmatpush2.bf16.msra.mxu0 %v1193
          %1427 = vmatprep.subr.bf16.mxu0 %v1188
          %1428 = vmatpush2.bf16.msra.mxu0 %v1187
          %1429 = vmatprep.subr.bf16.mxu0 %v1182
          %1430 = vmatpush2.bf16.msra.mxu0 %v1181
          %1431 = vmatprep.subr.bf16.mxu0 %v1176
          %1432 = vmatpush2.bf16.msra.mxu0 %v1175
          %1433 = vmatprep.mubr.bf16.mxu0 %v706
          %1434 = vmatmul.mubr.bf16.gmra.mxu0 %v705
          %v1435 = vpop.f32.mrf.mxu0
          %v1436 = vadd.f32 %v824, %v1435
          %v1437 = vpop.f32.mrf.mxu0
          %v1438 = vadd.f32 %v828, %v1437
          %v1439 = vpop.f32.mrf.mxu0
          %v1440 = vadd.f32 %v824, %v1439
          %v1441 = vpop.f32.mrf.mxu0
          %v1442 = vadd.f32 %v828, %v1441
          %1443 = vdwg.mxu0
          %v1444 = vpack.c.bf16 %v1354, %v1350
          %v1445 = vpack.c.bf16 %v1356, %v1352
          %v1448 = vunpack.c.l.b16 %v1444
          %v1449 = vunpack.c.l.b16 %v1445
          %v1450 = vunpack.c.h.b16 %v1444
          %v1451 = vunpack.c.h.b16 %v1445
          %v1452 = vpack.c.b16 %v1449, %v1448
          %v1453 = vpack.c.b16 %v1451, %v1450
          %1456 = vst [vmem:[#allocation2] sm:$0xff] %v1452
          %1457 = vst [vmem:[#allocation2 + $0x8] sm:$0xff] %v1453
          %v1458 = vpack.c.bf16 %v1397, %v1393
          %v1459 = vpack.c.bf16 %v1399, %v1395
          %v1462 = vunpack.c.l.b16 %v1458
          %v1463 = vunpack.c.l.b16 %v1459
          %v1464 = vunpack.c.h.b16 %v1458
          %v1465 = vunpack.c.h.b16 %v1459
          %v1466 = vpack.c.b16 %v1463, %v1462
          %v1467 = vpack.c.b16 %v1465, %v1464
          %1470 = vst [vmem:[#allocation3] sm:$0xff] %v1466
          %1471 = vst [vmem:[#allocation3 + $0x8] sm:$0xff] %v1467
          %v1472 = vpack.c.bf16 %v1440, %v1436
          %v1473 = vpack.c.bf16 %v1442, %v1438
          %v1476 = vunpack.c.l.b16 %v1472
          %v1477 = vunpack.c.l.b16 %v1473
          %v1478 = vunpack.c.h.b16 %v1472
          %v1479 = vunpack.c.h.b16 %v1473
          %v1480 = vpack.c.b16 %v1477, %v1476
          %v1481 = vpack.c.b16 %v1479, %v1478
          %1484 = vst [vmem:[#allocation4] sm:$0xff] %v1480
          %1485 = vst [vmem:[#allocation4 + $0x8] sm:$0xff] %v1481
        $region112: #{tpu_custom_call.1} parent=75 // pred_fallthru
          _
        %s1486 = smul.u32 %s42, 16
        %s1487 = sshra.s32 %s1486, 3
        %s1488 = sand.u32 %s1486, 7
        %s1489 = smul.u32 %s1487, 2
        %s1490 = smul.addr %s1489, 4
        %s1491 = scalar_lea.vmem %s544, %s1490 [#allocation5]
        %v1492 = vld [vmem:[%s1491] sm:$0xff]
        %v1493 = vld [vmem:[%s1491 + $0x8] sm:$0xff]
        %v1494 = vunpack.c.l.bf16 %v1492
        %v1495 = vunpack.c.h.bf16 %v1492
        %v1496 = vunpack.c.l.bf16 %v1493
        %v1497 = vunpack.c.h.bf16 %v1493
        %v1498 = vld [vmem:[%s553] sm:$0xf]
        %v1499 = vld [vmem:[%s553 + $0x4] sm:$0xf]
        %v1500 = vunpack.c.l.bf16 %v1498
        %v1501 = vunpack.c.l.bf16 %v1499
        %s1502 = smul.addr %s1489, 4
        %s1503 = scalar_lea.vmem [#allocation2], %s1502
        %v1504 = vld [vmem:[%s1503] sm:$0xf]
        %v1505 = vld [vmem:[%s1503 + $0x8] sm:$0xf]
        %v1506 = vld [vmem:[#allocation3] sm:$0xf]
        %v1507 = vld [vmem:[#allocation3 + $0x8] sm:$0xf]
        %v1508 = vld [vmem:[#allocation4] sm:$0xf]
        %v1509 = vld [vmem:[#allocation4 + $0x8] sm:$0xf]
        %v1512 = vunpack.c.l.b16 %v1504
        %v1513 = vunpack.c.l.b16 %v1505
        %v1514 = vpack.c.b16 %v1513, %v1512
        %v1518 = vunpack.c.l.b16 %v1506
        %v1519 = vunpack.c.l.b16 %v1507
        %v1520 = vpack.c.b16 %v1519, %v1518
        %1522 = vmatprep.subr.bf16.mxu0 0
        %1523 = vmatpush1.bf16.xpose.msra.mxu0 0
        %1524 = vmatprep.subr.bf16.mxu0 0
        %1525 = vmatpush1.bf16.xpose.msra.mxu0 0
        %1526 = vmatprep.subr.bf16.mxu0 0
        %1527 = vmatpush1.bf16.xpose.msra.mxu0 0
        %1528 = vmatprep.subr.bf16.mxu0 0
        %1529 = vmatpush1.bf16.xpose.msra.mxu0 0
        %1530 = vmatprep.subr.bf16.mxu0 0
        %1531 = vmatpush1.bf16.xpose.msra.mxu0 0
        %1532 = vmatprep.subr.bf16.mxu0 0
        %1533 = vmatpush1.bf16.xpose.msra.mxu0 0
        %1534 = vmatprep.subr.bf16.mxu0 0
        %1535 = vmatpush1.bf16.xpose.msra.mxu0 0
        %1536 = vmatprep.subr.bf16.mxu0 0
        %1537 = vmatpush1.bf16.xpose.msra.mxu0 %v1520
        %1538 = vmatprep.subr.bf16.mxu0 0
        %1539 = vmatpush2.bf16.xpose.msra.mxu0 0
        %1540 = vmatprep.subr.bf16.mxu0 0
        %1541 = vmatpush2.bf16.xpose.msra.mxu0 0
        %1542 = vmatprep.subr.bf16.mxu0 0
        %1543 = vmatpush2.bf16.xpose.msra.mxu0 0
        %1544 = vmatprep.subr.bf16.mxu0 0
        %1545 = vmatpush2.bf16.xpose.msra.mxu0 0
        %1546 = vmatprep.subr.bf16.mxu0 0
        %1547 = vmatpush2.bf16.xpose.msra.mxu0 0
        %1548 = vmatprep.subr.bf16.mxu0 0
        %1549 = vmatpush2.bf16.xpose.msra.mxu0 0
        %1550 = vmatprep.subr.bf16.mxu0 0
        %1551 = vmatpush2.bf16.xpose.msra.mxu0 0
        %1552 = vmatprep.subr.bf16.mxu0 0
        %1553 = vmatpush2.bf16.xpose.msra.mxu0 0
        %1554 = vmatprep.mubr.bf16.mxu0 0
        %1555 = vmatmul.mubr.bf16.gmra.mxu0 %v1514
        %v1556 = vpop.f32.mrf.mxu0
        %v1557 = vadd.f32 %v1500, %v1556
        %v1558 = vpop.f32.mrf.mxu0
        %v1559 = vpop.f32.mrf.mxu0
        %v1560 = vadd.f32 %v1501, %v1559
        %v1561 = vpop.f32.mrf.mxu0
        %1562 = vdwg.mxu0
        %vm1563 = vcmask 130048
        %v1564 = vsel %vm1563, %v1557, -inf
        %1565 = vmax.xlane.f32.xlu0 %v1564
        %v1566 = vpop.xlane.xlu0 %1565
        %v1567 = vsel %vm1563, %v1560, -inf
        %1568 = vmax.xlane.f32.xlu0 %v1567
        %v1569 = vpop.xlane.xlu0 %1568
        %v1570 = vsub.f32 %v1557, %v1566
        %v1571 = vsub.f32 %v1560, %v1569
        %v1572 = vmul.f32 %v1570, 1.442695
        %v1573 = vpow.pop %v1572
        %v1574 = vmul.f32 %v1571, 1.442695
        %v1575 = vpow.pop %v1574
        %v1576 = vsel %vm1563, %v1573, 0.0
        %1577 = vadd.xlane.f32.xlu0 %v1576
        %v1578 = vpop.xlane.xlu0 %1577
        %v1579 = vsel %vm1563, %v1575, 0.0
        %1580 = vadd.xlane.f32.xlu0 %v1579
        %v1581 = vpop.xlane.xlu0 %1580
        %v1582 = vpack.c.bf16 %v1575, %v1573
        %v1585 = vunpack.c.l.b16 %v1508
        %v1586 = vunpack.c.l.b16 %v1509
        %v1587 = vpack.c.b16 %v1586, %v1585
        %v1590 = vsel %vm1563, %v1582, 0
        %1592 = vmatprep.subr.bf16.mxu0 0
        %1593 = vmatpush1.bf16.msra.mxu0 0
        %1594 = vmatprep.subr.bf16.mxu0 0
        %1595 = vmatpush1.bf16.msra.mxu0 0
        %1596 = vmatprep.subr.bf16.mxu0 0
        %1597 = vmatpush1.bf16.msra.mxu0 0
        %1598 = vmatprep.subr.bf16.mxu0 0
        %1599 = vmatpush1.bf16.msra.mxu0 0
        %1600 = vmatprep.subr.bf16.mxu0 0
        %1601 = vmatpush1.bf16.msra.mxu0 0
        %1602 = vmatprep.subr.bf16.mxu0 0
        %1603 = vmatpush1.bf16.msra.mxu0 0
        %1604 = vmatprep.subr.bf16.mxu0 0
        %1605 = vmatpush1.bf16.msra.mxu0 0
        %1606 = vmatprep.subr.bf16.mxu0 0
        %1607 = vmatpush1.bf16.msra.mxu0 %v1587
        %1608 = vmatprep.subr.bf16.mxu0 0
        %1609 = vmatpush2.bf16.msra.mxu0 0
        %1610 = vmatprep.subr.bf16.mxu0 0
        %1611 = vmatpush2.bf16.msra.mxu0 0
        %1612 = vmatprep.subr.bf16.mxu0 0
        %1613 = vmatpush2.bf16.msra.mxu0 0
        %1614 = vmatprep.subr.bf16.mxu0 0
        %1615 = vmatpush2.bf16.msra.mxu0 0
        %1616 = vmatprep.subr.bf16.mxu0 0
        %1617 = vmatpush2.bf16.msra.mxu0 0
        %1618 = vmatprep.subr.bf16.mxu0 0
        %1619 = vmatpush2.bf16.msra.mxu0 0
        %1620 = vmatprep.subr.bf16.mxu0 0
        %1621 = vmatpush2.bf16.msra.mxu0 0
        %1622 = vmatprep.subr.bf16.mxu0 0
        %1623 = vmatpush2.bf16.msra.mxu0 0
        %1624 = vmatprep.mubr.bf16.mxu0 0
        %1625 = vmatmul.mubr.bf16.gmra.mxu0 %v1590
        %v1626 = vpop.f32.mrf.mxu0
        %v1627 = vadd.f32 0.0, %v1626
        %v1628 = vpop.f32.mrf.mxu0
        %v1629 = vpop.f32.mrf.mxu0
        %v1630 = vadd.f32 0.0, %v1629
        %v1631 = vpop.f32.mrf.mxu0
        %1632 = vdwg.mxu0
        %v1633 = vrcp.pop %v1578
        %v1634 = vrcp.pop %v1581
        %v1635 = vmul.f32 %v1627, %v1633
        %v1636 = vmul.f32 %v1630, %v1634
        %v1637 = vld [vmem:[%s1503 + $0x4] sm:$0xf]
        %v1638 = vld [vmem:[%s1503 + $0xc] sm:$0xf]
        %v1639 = vld [vmem:[#allocation3 + $0x4] sm:$0xf]
        %v1640 = vld [vmem:[#allocation3 + $0xc] sm:$0xf]
        %v1641 = vld [vmem:[#allocation4 + $0x4] sm:$0xf]
        %v1642 = vld [vmem:[#allocation4 + $0xc] sm:$0xf]
        %v1645 = vunpack.c.l.b16 %v1637
        %v1646 = vunpack.c.l.b16 %v1638
        %v1647 = vpack.c.b16 %v1646, %v1645
        %v1651 = vunpack.c.l.b16 %v1639
        %v1652 = vunpack.c.l.b16 %v1640
        %v1653 = vpack.c.b16 %v1652, %v1651
        %1655 = vmatprep.subr.bf16.mxu0 0
        %1656 = vmatpush1.bf16.xpose.msra.mxu0 0
        %1657 = vmatprep.subr.bf16.mxu0 0
        %1658 = vmatpush1.bf16.xpose.msra.mxu0 0
        %1659 = vmatprep.subr.bf16.mxu0 0
        %1660 = vmatpush1.bf16.xpose.msra.mxu0 0
        %1661 = vmatprep.subr.bf16.mxu0 0
        %1662 = vmatpush1.bf16.xpose.msra.mxu0 0
        %1663 = vmatprep.subr.bf16.mxu0 0
        %1664 = vmatpush1.bf16.xpose.msra.mxu0 0
        %1665 = vmatprep.subr.bf16.mxu0 0
        %1666 = vmatpush1.bf16.xpose.msra.mxu0 0
        %1667 = vmatprep.subr.bf16.mxu0 0
        %1668 = vmatpush1.bf16.xpose.msra.mxu0 0
        %1669 = vmatprep.subr.bf16.mxu0 0
        %1670 = vmatpush1.bf16.xpose.msra.mxu0 %v1653
        %1671 = vmatprep.subr.bf16.mxu0 0
        %1672 = vmatpush2.bf16.xpose.msra.mxu0 0
        %1673 = vmatprep.subr.bf16.mxu0 0
        %1674 = vmatpush2.bf16.xpose.msra.mxu0 0
        %1675 = vmatprep.subr.bf16.mxu0 0
        %1676 = vmatpush2.bf16.xpose.msra.mxu0 0
        %1677 = vmatprep.subr.bf16.mxu0 0
        %1678 = vmatpush2.bf16.xpose.msra.mxu0 0
        %1679 = vmatprep.subr.bf16.mxu0 0
        %1680 = vmatpush2.bf16.xpose.msra.mxu0 0
        %1681 = vmatprep.subr.bf16.mxu0 0
        %1682 = vmatpush2.bf16.xpose.msra.mxu0 0
        %1683 = vmatprep.subr.bf16.mxu0 0
        %1684 = vmatpush2.bf16.xpose.msra.mxu0 0
        %1685 = vmatprep.subr.bf16.mxu0 0
        %1686 = vmatpush2.bf16.xpose.msra.mxu0 0
        %1687 = vmatprep.mubr.bf16.mxu0 0
        %1688 = vmatmul.mubr.bf16.gmra.mxu0 %v1647
        %v1689 = vpop.f32.mrf.mxu0
        %v1690 = vadd.f32 %v1500, %v1689
        %v1691 = vpop.f32.mrf.mxu0
        %v1692 = vpop.f32.mrf.mxu0
        %v1693 = vadd.f32 %v1501, %v1692
        %v1694 = vpop.f32.mrf.mxu0
        %1695 = vdwg.mxu0
        %v1696 = vsel %vm1563, %v1690, -inf
        %1697 = vmax.xlane.f32.xlu0 %v1696
        %v1698 = vpop.xlane.xlu0 %1697
        %v1699 = vsel %vm1563, %v1693, -inf
        %1700 = vmax.xlane.f32.xlu0 %v1699
        %v1701 = vpop.xlane.xlu0 %1700
        %v1702 = vsub.f32 %v1690, %v1698
        %v1703 = vsub.f32 %v1693, %v1701
        %v1704 = vmul.f32 %v1702, 1.442695
        %v1705 = vpow.pop %v1704
        %v1706 = vmul.f32 %v1703, 1.442695
        %v1707 = vpow.pop %v1706
        %v1708 = vsel %vm1563, %v1705, 0.0
        %1709 = vadd.xlane.f32.xlu0 %v1708
        %v1710 = vpop.xlane.xlu0 %1709
        %v1711 = vsel %vm1563, %v1707, 0.0
        %1712 = vadd.xlane.f32.xlu0 %v1711
        %v1713 = vpop.xlane.xlu0 %1712
        %v1714 = vpack.c.bf16 %v1707, %v1705
        %v1717 = vunpack.c.l.b16 %v1641
        %v1718 = vunpack.c.l.b16 %v1642
        %v1719 = vpack.c.b16 %v1718, %v1717
        %v1722 = vsel %vm1563, %v1714, 0
        %1724 = vmatprep.subr.bf16.mxu0 0
        %1725 = vmatpush1.bf16.msra.mxu0 0
        %1726 = vmatprep.subr.bf16.mxu0 0
        %1727 = vmatpush1.bf16.msra.mxu0 0
        %1728 = vmatprep.subr.bf16.mxu0 0
        %1729 = vmatpush1.bf16.msra.mxu0 0
        %1730 = vmatprep.subr.bf16.mxu0 0
        %1731 = vmatpush1.bf16.msra.mxu0 0
        %1732 = vmatprep.subr.bf16.mxu0 0
        %1733 = vmatpush1.bf16.msra.mxu0 0
        %1734 = vmatprep.subr.bf16.mxu0 0
        %1735 = vmatpush1.bf16.msra.mxu0 0
        %1736 = vmatprep.subr.bf16.mxu0 0
        %1737 = vmatpush1.bf16.msra.mxu0 0
        %1738 = vmatprep.subr.bf16.mxu0 0
        %1739 = vmatpush1.bf16.msra.mxu0 %v1719
        %1740 = vmatprep.subr.bf16.mxu0 0
        %1741 = vmatpush2.bf16.msra.mxu0 0
        %1742 = vmatprep.subr.bf16.mxu0 0
        %1743 = vmatpush2.bf16.msra.mxu0 0
        %1744 = vmatprep.subr.bf16.mxu0 0
        %1745 = vmatpush2.bf16.msra.mxu0 0
        %1746 = vmatprep.subr.bf16.mxu0 0
        %1747 = vmatpush2.bf16.msra.mxu0 0
        %1748 = vmatprep.subr.bf16.mxu0 0
        %1749 = vmatpush2.bf16.msra.mxu0 0
        %1750 = vmatprep.subr.bf16.mxu0 0
        %1751 = vmatpush2.bf16.msra.mxu0 0
        %1752 = vmatprep.subr.bf16.mxu0 0
        %1753 = vmatpush2.bf16.msra.mxu0 0
        %1754 = vmatprep.subr.bf16.mxu0 0
        %1755 = vmatpush2.bf16.msra.mxu0 0
        %1756 = vmatprep.mubr.bf16.mxu0 0
        %1757 = vmatmul.mubr.bf16.gmra.mxu0 %v1722
        %v1758 = vpop.f32.mrf.mxu0
        %v1759 = vadd.f32 0.0, %v1758
        %v1760 = vpop.f32.mrf.mxu0
        %v1761 = vpop.f32.mrf.mxu0
        %v1762 = vadd.f32 0.0, %v1761
        %v1763 = vpop.f32.mrf.mxu0
        %1764 = vdwg.mxu0
        %v1765 = vrcp.pop %v1710
        %v1766 = vrcp.pop %v1713
        %v1767 = vmul.f32 %v1759, %v1765
        %v1768 = vmul.f32 %v1762, %v1766
        %v1769 = vpack.c.bf16 %v1636, %v1635
        %v1770 = vpack.c.bf16 %v1768, %v1767
        %v1771 = vld [vmem:[#allocation14] sm:$0xff]
        %v1772 = vld [vmem:[#allocation14 + $0x8] sm:$0xff]
        %v1773 = vld [vmem:[#allocation14 + $0x10] sm:$0xff]
        %v1774 = vld [vmem:[#allocation14 + $0x18] sm:$0xff]
        %v1775 = vld [vmem:[#allocation14 + $0x20] sm:$0xff]
        %v1776 = vld [vmem:[#allocation14 + $0x28] sm:$0xff]
        %v1777 = vld [vmem:[#allocation14 + $0x30] sm:$0xff]
        %v1778 = vld [vmem:[#allocation14 + $0x38] sm:$0xff]
        %v1779 = vld [vmem:[#allocation14 + $0x40] sm:$0xff]
        %v1780 = vld [vmem:[#allocation14 + $0x48] sm:$0xff]
        %v1781 = vld [vmem:[#allocation14 + $0x50] sm:$0xff]
        %v1782 = vld [vmem:[#allocation14 + $0x58] sm:$0xff]
        %v1783 = vld [vmem:[#allocation14 + $0x60] sm:$0xff]
        %v1784 = vld [vmem:[#allocation14 + $0x68] sm:$0xff]
        %v1785 = vld [vmem:[#allocation14 + $0x70] sm:$0xff]
        %v1786 = vld [vmem:[#allocation14 + $0x78] sm:$0xff]
        %v1787 = vld [vmem:[#allocation14 + $0x80] sm:$0xff]
        %v1788 = vld [vmem:[#allocation14 + $0x88] sm:$0xff]
        %v1789 = vld [vmem:[#allocation14 + $0x90] sm:$0xff]
        %v1790 = vld [vmem:[#allocation14 + $0x98] sm:$0xff]
        %v1791 = vld [vmem:[#allocation14 + $0xa0] sm:$0xff]
        %v1792 = vld [vmem:[#allocation14 + $0xa8] sm:$0xff]
        %v1793 = vld [vmem:[#allocation14 + $0xb0] sm:$0xff]
        %v1794 = vld [vmem:[#allocation14 + $0xb8] sm:$0xff]
        %v1795 = vld [vmem:[#allocation14 + $0xc0] sm:$0xff]
        %v1796 = vld [vmem:[#allocation14 + $0xc8] sm:$0xff]
        %v1797 = vld [vmem:[#allocation14 + $0xd0] sm:$0xff]
        %v1798 = vld [vmem:[#allocation14 + $0xd8] sm:$0xff]
        %v1799 = vld [vmem:[#allocation14 + $0xe0] sm:$0xff]
        %v1800 = vld [vmem:[#allocation14 + $0xe8] sm:$0xff]
        %v1801 = vld [vmem:[#allocation14 + $0xf0] sm:$0xff]
        %v1802 = vld [vmem:[#allocation14 + $0xf8] sm:$0xff]
        %v1803 = vld [vmem:[%s7] sm:$0x3]
        %v1805 = vlaneseq
        %v1806 = vshrl.u32 %v1805, 7
        %v1807 = vsub.s32 0, %v1806
        %v1808 = vrot.slane %v1803, %v1807
        %v1809 = vlaneseq
        %v1810 = vshrl.u32 %v1809, 7
        %v1811 = vsub.s32 1, %v1810
        %v1812 = vrot.slane %v1803, %v1811
        %v1847 = vunpack.c.l.b16 %v1771
        %v1848 = vunpack.c.h.b16 %v1771
        %v1849 = vunpack.c.l.b16 %v1772
        %v1850 = vunpack.c.h.b16 %v1772
        %v1851 = vunpack.c.l.b16 %v1773
        %v1852 = vunpack.c.h.b16 %v1773
        %v1853 = vunpack.c.l.b16 %v1774
        %v1854 = vunpack.c.h.b16 %v1774
        %v1855 = vunpack.c.l.b16 %v1775
        %v1856 = vunpack.c.h.b16 %v1775
        %v1857 = vunpack.c.l.b16 %v1776
        %v1858 = vunpack.c.h.b16 %v1776
        %v1859 = vunpack.c.l.b16 %v1777
        %v1860 = vunpack.c.h.b16 %v1777
        %v1861 = vunpack.c.l.b16 %v1778
        %v1862 = vunpack.c.h.b16 %v1778
        %v1863 = vunpack.c.l.b16 %v1779
        %v1864 = vunpack.c.h.b16 %v1779
        %v1865 = vunpack.c.l.b16 %v1780
        %v1866 = vunpack.c.h.b16 %v1780
        %v1867 = vunpack.c.l.b16 %v1781
        %v1868 = vunpack.c.h.b16 %v1781
        %v1869 = vunpack.c.l.b16 %v1782
        %v1870 = vunpack.c.h.b16 %v1782
        %v1871 = vunpack.c.l.b16 %v1783
        %v1872 = vunpack.c.h.b16 %v1783
        %v1873 = vunpack.c.l.b16 %v1784
        %v1874 = vunpack.c.h.b16 %v1784
        %v1875 = vunpack.c.l.b16 %v1785
        %v1876 = vunpack.c.h.b16 %v1785
        %v1877 = vunpack.c.l.b16 %v1786
        %v1878 = vunpack.c.h.b16 %v1786
        %v1879 = vunpack.c.l.b16 %v1787
        %v1880 = vunpack.c.h.b16 %v1787
        %v1881 = vunpack.c.l.b16 %v1788
        %v1882 = vunpack.c.h.b16 %v1788
        %v1883 = vunpack.c.l.b16 %v1789
        %v1884 = vunpack.c.h.b16 %v1789
        %v1885 = vunpack.c.l.b16 %v1790
        %v1886 = vunpack.c.h.b16 %v1790
        %v1887 = vunpack.c.l.b16 %v1791
        %v1888 = vunpack.c.h.b16 %v1791
        %v1889 = vunpack.c.l.b16 %v1792
        %v1890 = vunpack.c.h.b16 %v1792
        %v1891 = vunpack.c.l.b16 %v1793
        %v1892 = vunpack.c.h.b16 %v1793
        %v1893 = vunpack.c.l.b16 %v1794
        %v1894 = vunpack.c.h.b16 %v1794
        %v1895 = vunpack.c.l.b16 %v1795
        %v1896 = vunpack.c.h.b16 %v1795
        %v1897 = vunpack.c.l.b16 %v1796
        %v1898 = vunpack.c.h.b16 %v1796
        %v1899 = vunpack.c.l.b16 %v1797
        %v1900 = vunpack.c.h.b16 %v1797
        %v1901 = vunpack.c.l.b16 %v1798
        %v1902 = vunpack.c.h.b16 %v1798
        %v1903 = vunpack.c.l.b16 %v1799
        %v1904 = vunpack.c.h.b16 %v1799
        %v1905 = vunpack.c.l.b16 %v1800
        %v1906 = vunpack.c.h.b16 %v1800
        %v1907 = vunpack.c.l.b16 %v1801
        %v1908 = vunpack.c.h.b16 %v1801
        %v1909 = vunpack.c.l.b16 %v1802
        %v1910 = vunpack.c.h.b16 %v1802
        %v1911 = vpack.c.b16 %v1849, %v1847
        %v1912 = vpack.c.b16 %v1850, %v1848
        %v1913 = vpack.c.b16 %v1853, %v1851
        %v1914 = vpack.c.b16 %v1854, %v1852
        %v1915 = vpack.c.b16 %v1857, %v1855
        %v1916 = vpack.c.b16 %v1858, %v1856
        %v1917 = vpack.c.b16 %v1861, %v1859
        %v1918 = vpack.c.b16 %v1862, %v1860
        %v1919 = vpack.c.b16 %v1865, %v1863
        %v1920 = vpack.c.b16 %v1866, %v1864
        %v1921 = vpack.c.b16 %v1869, %v1867
        %v1922 = vpack.c.b16 %v1870, %v1868
        %v1923 = vpack.c.b16 %v1873, %v1871
        %v1924 = vpack.c.b16 %v1874, %v1872
        %v1925 = vpack.c.b16 %v1877, %v1875
        %v1926 = vpack.c.b16 %v1878, %v1876
        %v1927 = vpack.c.b16 %v1881, %v1879
        %v1928 = vpack.c.b16 %v1882, %v1880
        %v1929 = vpack.c.b16 %v1885, %v1883
        %v1930 = vpack.c.b16 %v1886, %v1884
        %v1931 = vpack.c.b16 %v1889, %v1887
        %v1932 = vpack.c.b16 %v1890, %v1888
        %v1933 = vpack.c.b16 %v1893, %v1891
        %v1934 = vpack.c.b16 %v1894, %v1892
        %v1935 = vpack.c.b16 %v1897, %v1895
        %v1936 = vpack.c.b16 %v1898, %v1896
        %v1937 = vpack.c.b16 %v1901, %v1899
        %v1938 = vpack.c.b16 %v1902, %v1900
        %v1939 = vpack.c.b16 %v1905, %v1903
        %v1940 = vpack.c.b16 %v1906, %v1904
        %v1941 = vpack.c.b16 %v1909, %v1907
        %v1942 = vpack.c.b16 %v1910, %v1908
        %1975 = vmatprep.subr.bf16.mxu0 %v1926
        %1976 = vmatpush1.bf16.msra.mxu0 %v1925
        %1977 = vmatprep.subr.bf16.mxu0 %v1924
        %1978 = vmatpush1.bf16.msra.mxu0 %v1923
        %1979 = vmatprep.subr.bf16.mxu0 %v1922
        %1980 = vmatpush1.bf16.msra.mxu0 %v1921
        %1981 = vmatprep.subr.bf16.mxu0 %v1920
        %1982 = vmatpush1.bf16.msra.mxu0 %v1919
        %1983 = vmatprep.subr.bf16.mxu0 %v1918
        %1984 = vmatpush1.bf16.msra.mxu0 %v1917
        %1985 = vmatprep.subr.bf16.mxu0 %v1916
        %1986 = vmatpush1.bf16.msra.mxu0 %v1915
        %1987 = vmatprep.subr.bf16.mxu0 %v1914
        %1988 = vmatpush1.bf16.msra.mxu0 %v1913
        %1989 = vmatprep.subr.bf16.mxu0 %v1912
        %1990 = vmatpush1.bf16.msra.mxu0 %v1911
        %1991 = vmatprep.subr.bf16.mxu0 %v1942
        %1992 = vmatpush2.bf16.msra.mxu0 %v1941
        %1993 = vmatprep.subr.bf16.mxu0 %v1940
        %1994 = vmatpush2.bf16.msra.mxu0 %v1939
        %1995 = vmatprep.subr.bf16.mxu0 %v1938
        %1996 = vmatpush2.bf16.msra.mxu0 %v1937
        %1997 = vmatprep.subr.bf16.mxu0 %v1936
        %1998 = vmatpush2.bf16.msra.mxu0 %v1935
        %1999 = vmatprep.subr.bf16.mxu0 %v1934
        %2000 = vmatpush2.bf16.msra.mxu0 %v1933
        %2001 = vmatprep.subr.bf16.mxu0 %v1932
        %2002 = vmatpush2.bf16.msra.mxu0 %v1931
        %2003 = vmatprep.subr.bf16.mxu0 %v1930
        %2004 = vmatpush2.bf16.msra.mxu0 %v1929
        %2005 = vmatprep.subr.bf16.mxu0 %v1928
        %2006 = vmatpush2.bf16.msra.mxu0 %v1927
        %2007 = vmatprep.mubr.bf16.mxu0 %v1770
        %2008 = vmatmul.mubr.bf16.gmra.mxu0 %v1769
        %v2009 = vpop.f32.mrf.mxu0
        %v2010 = vadd.f32 %v1808, %v2009
        %v2011 = vpop.f32.mrf.mxu0
        %v2012 = vadd.f32 %v1812, %v2011
        %v2013 = vpop.f32.mrf.mxu0
        %v2014 = vadd.f32 %v1808, %v2013
        %v2015 = vpop.f32.mrf.mxu0
        %v2016 = vadd.f32 %v1812, %v2015
        %2017 = vdwg.mxu0
        %v2018 = vadd.f32 %v2010, %v1494
        %v2019 = vadd.f32 %v2012, %v1495
        %v2020 = vadd.f32 %v2014, %v1496
        %v2021 = vadd.f32 %v2016, %v1497
        %v2022 = vld [vmem:[%s8] sm:$0x3]
        %v2023 = vld [vmem:[%s9] sm:$0x3]
        %v2024 = vadd.f32 %v2018, %v2019
        %2025 = vadd.xlane.f32.xlu0 %v2024
        %v2026 = vpop.xlane.xlu0 %2025
        %v2027 = vadd.f32 %v2020, %v2021
        %2028 = vadd.xlane.f32.xlu0 %v2027
        %v2029 = vpop.xlane.xlu0 %2028
        %v2030 = vrcp.pop 256.0
        %v2031 = vmul.f32 %v2026, %v2030
        %v2032 = vmul.f32 %v2029, %v2030
        %v2033 = vsub.f32 %v2018, %v2031
        %v2034 = vsub.f32 %v2019, %v2031
        %v2035 = vsub.f32 %v2020, %v2032
        %v2036 = vsub.f32 %v2021, %v2032
        %v2037 = vmul.f32 %v2033, %v2033
        %v2038 = vmul.f32 %v2034, %v2034
        %v2039 = vmul.f32 %v2035, %v2035
        %v2040 = vmul.f32 %v2036, %v2036
        %v2041 = vadd.f32 %v2037, %v2038
        %2042 = vadd.xlane.f32.xlu0 %v2041
        %v2043 = vpop.xlane.xlu0 %2042
        %v2044 = vadd.f32 %v2039, %v2040
        %2045 = vadd.xlane.f32.xlu0 %v2044
        %v2046 = vpop.xlane.xlu0 %2045
        %v2047 = vmul.f32 %v2043, %v2030
        %v2048 = vmul.f32 %v2046, %v2030
        %v2049 = vadd.f32 %v2047, 1e-06
        %v2050 = vadd.f32 %v2048, 1e-06
        %v2051 = vrsqrt.pop %v2049
        %v2052 = vrsqrt.pop %v2050
        %v2053 = vmul.f32 %v2033, %v2051
        %v2054 = vmul.f32 %v2034, %v2051
        %v2055 = vmul.f32 %v2035, %v2052
        %v2056 = vmul.f32 %v2036, %v2052
        %v2058 = vlaneseq
        %v2059 = vshrl.u32 %v2058, 7
        %v2060 = vsub.s32 0, %v2059
        %v2061 = vrot.slane %v2022, %v2060
        %v2062 = vlaneseq
        %v2063 = vshrl.u32 %v2062, 7
        %v2064 = vsub.s32 1, %v2063
        %v2065 = vrot.slane %v2022, %v2064
        %v2068 = vmul.f32 %v2053, %v2061
        %v2069 = vmul.f32 %v2054, %v2065
        %v2070 = vmul.f32 %v2055, %v2061
        %v2071 = vmul.f32 %v2056, %v2065
        %v2073 = vlaneseq
        %v2074 = vshrl.u32 %v2073, 7
        %v2075 = vsub.s32 0, %v2074
        %v2076 = vrot.slane %v2023, %v2075
        %v2077 = vlaneseq
        %v2078 = vshrl.u32 %v2077, 7
        %v2079 = vsub.s32 1, %v2078
        %v2080 = vrot.slane %v2023, %v2079
        %v2083 = vadd.f32 %v2068, %v2076
        %v2084 = vadd.f32 %v2069, %v2080
        %v2085 = vadd.f32 %v2070, %v2076
        %v2086 = vadd.f32 %v2071, %v2080
        %v2087 = vpack.c.bf16 %v2085, %v2083
        %v2088 = vpack.c.bf16 %v2086, %v2084
        %v2089 = vld [vmem:[#allocation16] sm:$0xff]
        %v2090 = vld [vmem:[#allocation16 + $0x8] sm:$0xff]
        %v2091 = vld [vmem:[#allocation16 + $0x10] sm:$0xff]
        %v2092 = vld [vmem:[#allocation16 + $0x18] sm:$0xff]
        %v2093 = vld [vmem:[#allocation16 + $0x20] sm:$0xff]
        %v2094 = vld [vmem:[#allocation16 + $0x28] sm:$0xff]
        %v2095 = vld [vmem:[#allocation16 + $0x30] sm:$0xff]
        %v2096 = vld [vmem:[#allocation16 + $0x38] sm:$0xff]
        %v2097 = vld [vmem:[#allocation16 + $0x40] sm:$0xff]
        %v2098 = vld [vmem:[#allocation16 + $0x48] sm:$0xff]
        %v2099 = vld [vmem:[#allocation16 + $0x50] sm:$0xff]
        %v2100 = vld [vmem:[#allocation16 + $0x58] sm:$0xff]
        %v2101 = vld [vmem:[#allocation16 + $0x60] sm:$0xff]
        %v2102 = vld [vmem:[#allocation16 + $0x68] sm:$0xff]
        %v2103 = vld [vmem:[#allocation16 + $0x70] sm:$0xff]
        %v2104 = vld [vmem:[#allocation16 + $0x78] sm:$0xff]
        %v2105 = vld [vmem:[#allocation16 + $0x80] sm:$0xff]
        %v2106 = vld [vmem:[#allocation16 + $0x88] sm:$0xff]
        %v2107 = vld [vmem:[#allocation16 + $0x90] sm:$0xff]
        %v2108 = vld [vmem:[#allocation16 + $0x98] sm:$0xff]
        %v2109 = vld [vmem:[#allocation16 + $0xa0] sm:$0xff]
        %v2110 = vld [vmem:[#allocation16 + $0xa8] sm:$0xff]
        %v2111 = vld [vmem:[#allocation16 + $0xb0] sm:$0xff]
        %v2112 = vld [vmem:[#allocation16 + $0xb8] sm:$0xff]
        %v2113 = vld [vmem:[#allocation16 + $0xc0] sm:$0xff]
        %v2114 = vld [vmem:[#allocation16 + $0xc8] sm:$0xff]
        %v2115 = vld [vmem:[#allocation16 + $0xd0] sm:$0xff]
        %v2116 = vld [vmem:[#allocation16 + $0xd8] sm:$0xff]
        %v2117 = vld [vmem:[#allocation16 + $0xe0] sm:$0xff]
        %v2118 = vld [vmem:[#allocation16 + $0xe8] sm:$0xff]
        %v2119 = vld [vmem:[#allocation16 + $0xf0] sm:$0xff]
        %v2120 = vld [vmem:[#allocation16 + $0xf8] sm:$0xff]
        %v2121 = vld [vmem:[#allocation16 + $0x100] sm:$0xff]
        %v2122 = vld [vmem:[#allocation16 + $0x108] sm:$0xff]
        %v2123 = vld [vmem:[#allocation16 + $0x110] sm:$0xff]
        %v2124 = vld [vmem:[#allocation16 + $0x118] sm:$0xff]
        %v2125 = vld [vmem:[#allocation16 + $0x120] sm:$0xff]
        %v2126 = vld [vmem:[#allocation16 + $0x128] sm:$0xff]
        %v2127 = vld [vmem:[#allocation16 + $0x130] sm:$0xff]
        %v2128 = vld [vmem:[#allocation16 + $0x138] sm:$0xff]
        %v2129 = vld [vmem:[#allocation16 + $0x140] sm:$0xff]
        %v2130 = vld [vmem:[#allocation16 + $0x148] sm:$0xff]
        %v2131 = vld [vmem:[#allocation16 + $0x150] sm:$0xff]
        %v2132 = vld [vmem:[#allocation16 + $0x158] sm:$0xff]
        %v2133 = vld [vmem:[#allocation16 + $0x160] sm:$0xff]
        %v2134 = vld [vmem:[#allocation16 + $0x168] sm:$0xff]
        %v2135 = vld [vmem:[#allocation16 + $0x170] sm:$0xff]
        %v2136 = vld [vmem:[#allocation16 + $0x178] sm:$0xff]
        %v2137 = vld [vmem:[#allocation16 + $0x180] sm:$0xff]
        %v2138 = vld [vmem:[#allocation16 + $0x188] sm:$0xff]
        %v2139 = vld [vmem:[#allocation16 + $0x190] sm:$0xff]
        %v2140 = vld [vmem:[#allocation16 + $0x198] sm:$0xff]
        %v2141 = vld [vmem:[#allocation16 + $0x1a0] sm:$0xff]
        %v2142 = vld [vmem:[#allocation16 + $0x1a8] sm:$0xff]
        %v2143 = vld [vmem:[#allocation16 + $0x1b0] sm:$0xff]
        %v2144 = vld [vmem:[#allocation16 + $0x1b8] sm:$0xff]
        %v2145 = vld [vmem:[#allocation16 + $0x1c0] sm:$0xff]
        %v2146 = vld [vmem:[#allocation16 + $0x1c8] sm:$0xff]
        %v2147 = vld [vmem:[#allocation16 + $0x1d0] sm:$0xff]
        %v2148 = vld [vmem:[#allocation16 + $0x1d8] sm:$0xff]
        %v2149 = vld [vmem:[#allocation16 + $0x1e0] sm:$0xff]
        %v2150 = vld [vmem:[#allocation16 + $0x1e8] sm:$0xff]
        %v2151 = vld [vmem:[#allocation16 + $0x1f0] sm:$0xff]
        %v2152 = vld [vmem:[#allocation16 + $0x1f8] sm:$0xff]
        %v2153 = vld [vmem:[%s11] sm:$0xf]
        %v2155 = vlaneseq
        %v2156 = vshrl.u32 %v2155, 7
        %v2157 = vsub.s32 0, %v2156
        %v2158 = vrot.slane %v2153, %v2157
        %v2159 = vlaneseq
        %v2160 = vshrl.u32 %v2159, 7
        %v2161 = vsub.s32 1, %v2160
        %v2162 = vrot.slane %v2153, %v2161
        %v2163 = vlaneseq
        %v2164 = vshrl.u32 %v2163, 7
        %v2165 = vsub.s32 2, %v2164
        %v2166 = vrot.slane %v2153, %v2165
        %v2167 = vlaneseq
        %v2168 = vshrl.u32 %v2167, 7
        %v2169 = vsub.s32 3, %v2168
        %v2170 = vrot.slane %v2153, %v2169
        %v2239 = vunpack.c.l.b16 %v2089
        %v2240 = vunpack.c.h.b16 %v2089
        %v2241 = vunpack.c.l.b16 %v2090
        %v2242 = vunpack.c.h.b16 %v2090
        %v2243 = vunpack.c.l.b16 %v2091
        %v2244 = vunpack.c.h.b16 %v2091
        %v2245 = vunpack.c.l.b16 %v2092
        %v2246 = vunpack.c.h.b16 %v2092
        %v2247 = vunpack.c.l.b16 %v2093
        %v2248 = vunpack.c.h.b16 %v2093
        %v2249 = vunpack.c.l.b16 %v2094
        %v2250 = vunpack.c.h.b16 %v2094
        %v2251 = vunpack.c.l.b16 %v2095
        %v2252 = vunpack.c.h.b16 %v2095
        %v2253 = vunpack.c.l.b16 %v2096
        %v2254 = vunpack.c.h.b16 %v2096
        %v2255 = vunpack.c.l.b16 %v2097
        %v2256 = vunpack.c.h.b16 %v2097
        %v2257 = vunpack.c.l.b16 %v2098
        %v2258 = vunpack.c.h.b16 %v2098
        %v2259 = vunpack.c.l.b16 %v2099
        %v2260 = vunpack.c.h.b16 %v2099
        %v2261 = vunpack.c.l.b16 %v2100
        %v2262 = vunpack.c.h.b16 %v2100
        %v2263 = vunpack.c.l.b16 %v2101
        %v2264 = vunpack.c.h.b16 %v2101
        %v2265 = vunpack.c.l.b16 %v2102
        %v2266 = vunpack.c.h.b16 %v2102
        %v2267 = vunpack.c.l.b16 %v2103
        %v2268 = vunpack.c.h.b16 %v2103
        %v2269 = vunpack.c.l.b16 %v2104
        %v2270 = vunpack.c.h.b16 %v2104
        %v2271 = vunpack.c.l.b16 %v2105
        %v2272 = vunpack.c.h.b16 %v2105
        %v2273 = vunpack.c.l.b16 %v2106
        %v2274 = vunpack.c.h.b16 %v2106
        %v2275 = vunpack.c.l.b16 %v2107
        %v2276 = vunpack.c.h.b16 %v2107
        %v2277 = vunpack.c.l.b16 %v2108
        %v2278 = vunpack.c.h.b16 %v2108
        %v2279 = vunpack.c.l.b16 %v2109
        %v2280 = vunpack.c.h.b16 %v2109
        %v2281 = vunpack.c.l.b16 %v2110
        %v2282 = vunpack.c.h.b16 %v2110
        %v2283 = vunpack.c.l.b16 %v2111
        %v2284 = vunpack.c.h.b16 %v2111
        %v2285 = vunpack.c.l.b16 %v2112
        %v2286 = vunpack.c.h.b16 %v2112
        %v2287 = vunpack.c.l.b16 %v2113
        %v2288 = vunpack.c.h.b16 %v2113
        %v2289 = vunpack.c.l.b16 %v2114
        %v2290 = vunpack.c.h.b16 %v2114
        %v2291 = vunpack.c.l.b16 %v2115
        %v2292 = vunpack.c.h.b16 %v2115
        %v2293 = vunpack.c.l.b16 %v2116
        %v2294 = vunpack.c.h.b16 %v2116
        %v2295 = vunpack.c.l.b16 %v2117
        %v2296 = vunpack.c.h.b16 %v2117
        %v2297 = vunpack.c.l.b16 %v2118
        %v2298 = vunpack.c.h.b16 %v2118
        %v2299 = vunpack.c.l.b16 %v2119
        %v2300 = vunpack.c.h.b16 %v2119
        %v2301 = vunpack.c.l.b16 %v2120
        %v2302 = vunpack.c.h.b16 %v2120
        %v2303 = vunpack.c.l.b16 %v2121
        %v2304 = vunpack.c.h.b16 %v2121
        %v2305 = vunpack.c.l.b16 %v2122
        %v2306 = vunpack.c.h.b16 %v2122
        %v2307 = vunpack.c.l.b16 %v2123
        %v2308 = vunpack.c.h.b16 %v2123
        %v2309 = vunpack.c.l.b16 %v2124
        %v2310 = vunpack.c.h.b16 %v2124
        %v2311 = vunpack.c.l.b16 %v2125
        %v2312 = vunpack.c.h.b16 %v2125
        %v2313 = vunpack.c.l.b16 %v2126
        %v2314 = vunpack.c.h.b16 %v2126
        %v2315 = vunpack.c.l.b16 %v2127
        %v2316 = vunpack.c.h.b16 %v2127
        %v2317 = vunpack.c.l.b16 %v2128
        %v2318 = vunpack.c.h.b16 %v2128
        %v2319 = vunpack.c.l.b16 %v2129
        %v2320 = vunpack.c.h.b16 %v2129
        %v2321 = vunpack.c.l.b16 %v2130
        %v2322 = vunpack.c.h.b16 %v2130
        %v2323 = vunpack.c.l.b16 %v2131
        %v2324 = vunpack.c.h.b16 %v2131
        %v2325 = vunpack.c.l.b16 %v2132
        %v2326 = vunpack.c.h.b16 %v2132
        %v2327 = vunpack.c.l.b16 %v2133
        %v2328 = vunpack.c.h.b16 %v2133
        %v2329 = vunpack.c.l.b16 %v2134
        %v2330 = vunpack.c.h.b16 %v2134
        %v2331 = vunpack.c.l.b16 %v2135
        %v2332 = vunpack.c.h.b16 %v2135
        %v2333 = vunpack.c.l.b16 %v2136
        %v2334 = vunpack.c.h.b16 %v2136
        %v2335 = vunpack.c.l.b16 %v2137
        %v2336 = vunpack.c.h.b16 %v2137
        %v2337 = vunpack.c.l.b16 %v2138
        %v2338 = vunpack.c.h.b16 %v2138
        %v2339 = vunpack.c.l.b16 %v2139
        %v2340 = vunpack.c.h.b16 %v2139
        %v2341 = vunpack.c.l.b16 %v2140
        %v2342 = vunpack.c.h.b16 %v2140
        %v2343 = vunpack.c.l.b16 %v2141
        %v2344 = vunpack.c.h.b16 %v2141
        %v2345 = vunpack.c.l.b16 %v2142
        %v2346 = vunpack.c.h.b16 %v2142
        %v2347 = vunpack.c.l.b16 %v2143
        %v2348 = vunpack.c.h.b16 %v2143
        %v2349 = vunpack.c.l.b16 %v2144
        %v2350 = vunpack.c.h.b16 %v2144
        %v2351 = vunpack.c.l.b16 %v2145
        %v2352 = vunpack.c.h.b16 %v2145
        %v2353 = vunpack.c.l.b16 %v2146
        %v2354 = vunpack.c.h.b16 %v2146
        %v2355 = vunpack.c.l.b16 %v2147
        %v2356 = vunpack.c.h.b16 %v2147
        %v2357 = vunpack.c.l.b16 %v2148
        %v2358 = vunpack.c.h.b16 %v2148
        %v2359 = vunpack.c.l.b16 %v2149
        %v2360 = vunpack.c.h.b16 %v2149
        %v2361 = vunpack.c.l.b16 %v2150
        %v2362 = vunpack.c.h.b16 %v2150
        %v2363 = vunpack.c.l.b16 %v2151
        %v2364 = vunpack.c.h.b16 %v2151
        %v2365 = vunpack.c.l.b16 %v2152
        %v2366 = vunpack.c.h.b16 %v2152
        %v2367 = vpack.c.b16 %v2243, %v2239
        %v2368 = vpack.c.b16 %v2244, %v2240
        %v2369 = vpack.c.b16 %v2245, %v2241
        %v2370 = vpack.c.b16 %v2246, %v2242
        %v2371 = vpack.c.b16 %v2251, %v2247
        %v2372 = vpack.c.b16 %v2252, %v2248
        %v2373 = vpack.c.b16 %v2253, %v2249
        %v2374 = vpack.c.b16 %v2254, %v2250
        %v2375 = vpack.c.b16 %v2259, %v2255
        %v2376 = vpack.c.b16 %v2260, %v2256
        %v2377 = vpack.c.b16 %v2261, %v2257
        %v2378 = vpack.c.b16 %v2262, %v2258
        %v2379 = vpack.c.b16 %v2267, %v2263
        %v2380 = vpack.c.b16 %v2268, %v2264
        %v2381 = vpack.c.b16 %v2269, %v2265
        %v2382 = vpack.c.b16 %v2270, %v2266
        %v2383 = vpack.c.b16 %v2275, %v2271
        %v2384 = vpack.c.b16 %v2276, %v2272
        %v2385 = vpack.c.b16 %v2277, %v2273
        %v2386 = vpack.c.b16 %v2278, %v2274
        %v2387 = vpack.c.b16 %v2283, %v2279
        %v2388 = vpack.c.b16 %v2284, %v2280
        %v2389 = vpack.c.b16 %v2285, %v2281
        %v2390 = vpack.c.b16 %v2286, %v2282
        %v2391 = vpack.c.b16 %v2291, %v2287
        %v2392 = vpack.c.b16 %v2292, %v2288
        %v2393 = vpack.c.b16 %v2293, %v2289
        %v2394 = vpack.c.b16 %v2294, %v2290
        %v2395 = vpack.c.b16 %v2299, %v2295
        %v2396 = vpack.c.b16 %v2300, %v2296
        %v2397 = vpack.c.b16 %v2301, %v2297
        %v2398 = vpack.c.b16 %v2302, %v2298
        %v2399 = vpack.c.b16 %v2307, %v2303
        %v2400 = vpack.c.b16 %v2308, %v2304
        %v2401 = vpack.c.b16 %v2309, %v2305
        %v2402 = vpack.c.b16 %v2310, %v2306
        %v2403 = vpack.c.b16 %v2315, %v2311
        %v2404 = vpack.c.b16 %v2316, %v2312
        %v2405 = vpack.c.b16 %v2317, %v2313
        %v2406 = vpack.c.b16 %v2318, %v2314
        %v2407 = vpack.c.b16 %v2323, %v2319
        %v2408 = vpack.c.b16 %v2324, %v2320
        %v2409 = vpack.c.b16 %v2325, %v2321
        %v2410 = vpack.c.b16 %v2326, %v2322
        %v2411 = vpack.c.b16 %v2331, %v2327
        %v2412 = vpack.c.b16 %v2332, %v2328
        %v2413 = vpack.c.b16 %v2333, %v2329
        %v2414 = vpack.c.b16 %v2334, %v2330
        %v2415 = vpack.c.b16 %v2339, %v2335
        %v2416 = vpack.c.b16 %v2340, %v2336
        %v2417 = vpack.c.b16 %v2341, %v2337
        %v2418 = vpack.c.b16 %v2342, %v2338
        %v2419 = vpack.c.b16 %v2347, %v2343
        %v2420 = vpack.c.b16 %v2348, %v2344
        %v2421 = vpack.c.b16 %v2349, %v2345
        %v2422 = vpack.c.b16 %v2350, %v2346
        %v2423 = vpack.c.b16 %v2355, %v2351
        %v2424 = vpack.c.b16 %v2356, %v2352
        %v2425 = vpack.c.b16 %v2357, %v2353
        %v2426 = vpack.c.b16 %v2358, %v2354
        %v2427 = vpack.c.b16 %v2363, %v2359
        %v2428 = vpack.c.b16 %v2364, %v2360
        %v2429 = vpack.c.b16 %v2365, %v2361
        %v2430 = vpack.c.b16 %v2366, %v2362
        %2495 = vmatprep.subr.bf16.mxu0 %v2396
        %2496 = vmatpush1.bf16.msra.mxu0 %v2395
        %2497 = vmatprep.subr.bf16.mxu0 %v2392
        %2498 = vmatpush1.bf16.msra.mxu0 %v2391
        %2499 = vmatprep.subr.bf16.mxu0 %v2388
        %2500 = vmatpush1.bf16.msra.mxu0 %v2387
        %2501 = vmatprep.subr.bf16.mxu0 %v2384
        %2502 = vmatpush1.bf16.msra.mxu0 %v2383
        %2503 = vmatprep.subr.bf16.mxu0 %v2380
        %2504 = vmatpush1.bf16.msra.mxu0 %v2379
        %2505 = vmatprep.subr.bf16.mxu0 %v2376
        %2506 = vmatpush1.bf16.msra.mxu0 %v2375
        %2507 = vmatprep.subr.bf16.mxu0 %v2372
        %2508 = vmatpush1.bf16.msra.mxu0 %v2371
        %2509 = vmatprep.subr.bf16.mxu0 %v2368
        %2510 = vmatpush1.bf16.msra.mxu0 %v2367
        %2511 = vmatprep.subr.bf16.mxu0 %v2428
        %2512 = vmatpush2.bf16.msra.mxu0 %v2427
        %2513 = vmatprep.subr.bf16.mxu0 %v2424
        %2514 = vmatpush2.bf16.msra.mxu0 %v2423
        %2515 = vmatprep.subr.bf16.mxu0 %v2420
        %2516 = vmatpush2.bf16.msra.mxu0 %v2419
        %2517 = vmatprep.subr.bf16.mxu0 %v2416
        %2518 = vmatpush2.bf16.msra.mxu0 %v2415
        %2519 = vmatprep.subr.bf16.mxu0 %v2412
        %2520 = vmatpush2.bf16.msra.mxu0 %v2411
        %2521 = vmatprep.subr.bf16.mxu0 %v2408
        %2522 = vmatpush2.bf16.msra.mxu0 %v2407
        %2523 = vmatprep.subr.bf16.mxu0 %v2404
        %2524 = vmatpush2.bf16.msra.mxu0 %v2403
        %2525 = vmatprep.subr.bf16.mxu0 %v2400
        %2526 = vmatpush2.bf16.msra.mxu0 %v2399
        %2527 = vmatprep.mubr.bf16.mxu0 %v2088
        %2528 = vmatmul.mubr.bf16.gmra.mxu0 %v2087
        %v2529 = vpop.f32.mrf.mxu0
        %v2530 = vadd.f32 %v2158, %v2529
        %v2531 = vpop.f32.mrf.mxu0
        %v2532 = vadd.f32 %v2162, %v2531
        %v2533 = vpop.f32.mrf.mxu0
        %v2534 = vadd.f32 %v2158, %v2533
        %v2535 = vpop.f32.mrf.mxu0
        %v2536 = vadd.f32 %v2162, %v2535
        %2537 = vdwg.mxu0
        %2538 = vmatprep.subr.bf16.mxu0 %v2398
        %2539 = vmatpush1.bf16.msra.mxu0 %v2397
        %2540 = vmatprep.subr.bf16.mxu0 %v2394
        %2541 = vmatpush1.bf16.msra.mxu0 %v2393
        %2542 = vmatprep.subr.bf16.mxu0 %v2390
        %2543 = vmatpush1.bf16.msra.mxu0 %v2389
        %2544 = vmatprep.subr.bf16.mxu0 %v2386
        %2545 = vmatpush1.bf16.msra.mxu0 %v2385
        %2546 = vmatprep.subr.bf16.mxu0 %v2382
        %2547 = vmatpush1.bf16.msra.mxu0 %v2381
        %2548 = vmatprep.subr.bf16.mxu0 %v2378
        %2549 = vmatpush1.bf16.msra.mxu0 %v2377
        %2550 = vmatprep.subr.bf16.mxu0 %v2374
        %2551 = vmatpush1.bf16.msra.mxu0 %v2373
        %2552 = vmatprep.subr.bf16.mxu0 %v2370
        %2553 = vmatpush1.bf16.msra.mxu0 %v2369
        %2554 = vmatprep.subr.bf16.mxu0 %v2430
        %2555 = vmatpush2.bf16.msra.mxu0 %v2429
        %2556 = vmatprep.subr.bf16.mxu0 %v2426
        %2557 = vmatpush2.bf16.msra.mxu0 %v2425
        %2558 = vmatprep.subr.bf16.mxu0 %v2422
        %2559 = vmatpush2.bf16.msra.mxu0 %v2421
        %2560 = vmatprep.subr.bf16.mxu0 %v2418
        %2561 = vmatpush2.bf16.msra.mxu0 %v2417
        %2562 = vmatprep.subr.bf16.mxu0 %v2414
        %2563 = vmatpush2.bf16.msra.mxu0 %v2413
        %2564 = vmatprep.subr.bf16.mxu0 %v2410
        %2565 = vmatpush2.bf16.msra.mxu0 %v2409
        %2566 = vmatprep.subr.bf16.mxu0 %v2406
        %2567 = vmatpush2.bf16.msra.mxu0 %v2405
        %2568 = vmatprep.subr.bf16.mxu0 %v2402
        %2569 = vmatpush2.bf16.msra.mxu0 %v2401
        %2570 = vmatprep.mubr.bf16.mxu0 %v2088
        %2571 = vmatmul.mubr.bf16.gmra.mxu0 %v2087
        %v2572 = vpop.f32.mrf.mxu0
        %v2573 = vadd.f32 %v2166, %v2572
        %v2574 = vpop.f32.mrf.mxu0
        %v2575 = vadd.f32 %v2170, %v2574
        %v2576 = vpop.f32.mrf.mxu0
        %v2577 = vadd.f32 %v2166, %v2576
        %v2578 = vpop.f32.mrf.mxu0
        %v2579 = vadd.f32 %v2170, %v2578
        %2580 = vdwg.mxu0
        %v2581 = vmax.f32 %v2530, 0.0
        %v2582 = vmax.f32 %v2532, 0.0
        %v2583 = vmax.f32 %v2573, 0.0
        %v2584 = vmax.f32 %v2575, 0.0
        %v2585 = vmax.f32 %v2534, 0.0
        %v2586 = vmax.f32 %v2536, 0.0
        %v2587 = vmax.f32 %v2577, 0.0
        %v2588 = vmax.f32 %v2579, 0.0
        %v2589 = vpack.c.bf16 %v2585, %v2581
        %v2590 = vpack.c.bf16 %v2586, %v2582
        %v2591 = vpack.c.bf16 %v2587, %v2583
        %v2592 = vpack.c.bf16 %v2588, %v2584
        %v2593 = vld [vmem:[#allocation17] sm:$0xff]
        %v2594 = vld [vmem:[#allocation17 + $0x8] sm:$0xff]
        %v2595 = vld [vmem:[#allocation17 + $0x10] sm:$0xff]
        %v2596 = vld [vmem:[#allocation17 + $0x18] sm:$0xff]
        %v2597 = vld [vmem:[#allocation17 + $0x20] sm:$0xff]
        %v2598 = vld [vmem:[#allocation17 + $0x28] sm:$0xff]
        %v2599 = vld [vmem:[#allocation17 + $0x30] sm:$0xff]
        %v2600 = vld [vmem:[#allocation17 + $0x38] sm:$0xff]
        %v2601 = vld [vmem:[#allocation17 + $0x40] sm:$0xff]
        %v2602 = vld [vmem:[#allocation17 + $0x48] sm:$0xff]
        %v2603 = vld [vmem:[#allocation17 + $0x50] sm:$0xff]
        %v2604 = vld [vmem:[#allocation17 + $0x58] sm:$0xff]
        %v2605 = vld [vmem:[#allocation17 + $0x60] sm:$0xff]
        %v2606 = vld [vmem:[#allocation17 + $0x68] sm:$0xff]
        %v2607 = vld [vmem:[#allocation17 + $0x70] sm:$0xff]
        %v2608 = vld [vmem:[#allocation17 + $0x78] sm:$0xff]
        %v2609 = vld [vmem:[#allocation17 + $0x80] sm:$0xff]
        %v2610 = vld [vmem:[#allocation17 + $0x88] sm:$0xff]
        %v2611 = vld [vmem:[#allocation17 + $0x90] sm:$0xff]
        %v2612 = vld [vmem:[#allocation17 + $0x98] sm:$0xff]
        %v2613 = vld [vmem:[#allocation17 + $0xa0] sm:$0xff]
        %v2614 = vld [vmem:[#allocation17 + $0xa8] sm:$0xff]
        %v2615 = vld [vmem:[#allocation17 + $0xb0] sm:$0xff]
        %v2616 = vld [vmem:[#allocation17 + $0xb8] sm:$0xff]
        %v2617 = vld [vmem:[#allocation17 + $0xc0] sm:$0xff]
        %v2618 = vld [vmem:[#allocation17 + $0xc8] sm:$0xff]
        %v2619 = vld [vmem:[#allocation17 + $0xd0] sm:$0xff]
        %v2620 = vld [vmem:[#allocation17 + $0xd8] sm:$0xff]
        %v2621 = vld [vmem:[#allocation17 + $0xe0] sm:$0xff]
        %v2622 = vld [vmem:[#allocation17 + $0xe8] sm:$0xff]
        %v2623 = vld [vmem:[#allocation17 + $0xf0] sm:$0xff]
        %v2624 = vld [vmem:[#allocation17 + $0xf8] sm:$0xff]
        %v2625 = vld [vmem:[#allocation17 + $0x100] sm:$0xff]
        %v2626 = vld [vmem:[#allocation17 + $0x108] sm:$0xff]
        %v2627 = vld [vmem:[#allocation17 + $0x110] sm:$0xff]
        %v2628 = vld [vmem:[#allocation17 + $0x118] sm:$0xff]
        %v2629 = vld [vmem:[#allocation17 + $0x120] sm:$0xff]
        %v2630 = vld [vmem:[#allocation17 + $0x128] sm:$0xff]
        %v2631 = vld [vmem:[#allocation17 + $0x130] sm:$0xff]
        %v2632 = vld [vmem:[#allocation17 + $0x138] sm:$0xff]
        %v2633 = vld [vmem:[#allocation17 + $0x140] sm:$0xff]
        %v2634 = vld [vmem:[#allocation17 + $0x148] sm:$0xff]
        %v2635 = vld [vmem:[#allocation17 + $0x150] sm:$0xff]
        %v2636 = vld [vmem:[#allocation17 + $0x158] sm:$0xff]
        %v2637 = vld [vmem:[#allocation17 + $0x160] sm:$0xff]
        %v2638 = vld [vmem:[#allocation17 + $0x168] sm:$0xff]
        %v2639 = vld [vmem:[#allocation17 + $0x170] sm:$0xff]
        %v2640 = vld [vmem:[#allocation17 + $0x178] sm:$0xff]
        %v2641 = vld [vmem:[#allocation17 + $0x180] sm:$0xff]
        %v2642 = vld [vmem:[#allocation17 + $0x188] sm:$0xff]
        %v2643 = vld [vmem:[#allocation17 + $0x190] sm:$0xff]
        %v2644 = vld [vmem:[#allocation17 + $0x198] sm:$0xff]
        %v2645 = vld [vmem:[#allocation17 + $0x1a0] sm:$0xff]
        %v2646 = vld [vmem:[#allocation17 + $0x1a8] sm:$0xff]
        %v2647 = vld [vmem:[#allocation17 + $0x1b0] sm:$0xff]
        %v2648 = vld [vmem:[#allocation17 + $0x1b8] sm:$0xff]
        %v2649 = vld [vmem:[#allocation17 + $0x1c0] sm:$0xff]
        %v2650 = vld [vmem:[#allocation17 + $0x1c8] sm:$0xff]
        %v2651 = vld [vmem:[#allocation17 + $0x1d0] sm:$0xff]
        %v2652 = vld [vmem:[#allocation17 + $0x1d8] sm:$0xff]
        %v2653 = vld [vmem:[#allocation17 + $0x1e0] sm:$0xff]
        %v2654 = vld [vmem:[#allocation17 + $0x1e8] sm:$0xff]
        %v2655 = vld [vmem:[#allocation17 + $0x1f0] sm:$0xff]
        %v2656 = vld [vmem:[#allocation17 + $0x1f8] sm:$0xff]
        %v2657 = vld [vmem:[%s13] sm:$0x3]
        %v2659 = vlaneseq
        %v2660 = vshrl.u32 %v2659, 7
        %v2661 = vsub.s32 0, %v2660
        %v2662 = vrot.slane %v2657, %v2661
        %v2663 = vlaneseq
        %v2664 = vshrl.u32 %v2663, 7
        %v2665 = vsub.s32 1, %v2664
        %v2666 = vrot.slane %v2657, %v2665
        %v2733 = vunpack.c.l.b16 %v2593
        %v2734 = vunpack.c.h.b16 %v2593
        %v2735 = vunpack.c.l.b16 %v2594
        %v2736 = vunpack.c.h.b16 %v2594
        %v2737 = vunpack.c.l.b16 %v2595
        %v2738 = vunpack.c.h.b16 %v2595
        %v2739 = vunpack.c.l.b16 %v2596
        %v2740 = vunpack.c.h.b16 %v2596
        %v2741 = vunpack.c.l.b16 %v2597
        %v2742 = vunpack.c.h.b16 %v2597
        %v2743 = vunpack.c.l.b16 %v2598
        %v2744 = vunpack.c.h.b16 %v2598
        %v2745 = vunpack.c.l.b16 %v2599
        %v2746 = vunpack.c.h.b16 %v2599
        %v2747 = vunpack.c.l.b16 %v2600
        %v2748 = vunpack.c.h.b16 %v2600
        %v2749 = vunpack.c.l.b16 %v2601
        %v2750 = vunpack.c.h.b16 %v2601
        %v2751 = vunpack.c.l.b16 %v2602
        %v2752 = vunpack.c.h.b16 %v2602
        %v2753 = vunpack.c.l.b16 %v2603
        %v2754 = vunpack.c.h.b16 %v2603
        %v2755 = vunpack.c.l.b16 %v2604
        %v2756 = vunpack.c.h.b16 %v2604
        %v2757 = vunpack.c.l.b16 %v2605
        %v2758 = vunpack.c.h.b16 %v2605
        %v2759 = vunpack.c.l.b16 %v2606
        %v2760 = vunpack.c.h.b16 %v2606
        %v2761 = vunpack.c.l.b16 %v2607
        %v2762 = vunpack.c.h.b16 %v2607
        %v2763 = vunpack.c.l.b16 %v2608
        %v2764 = vunpack.c.h.b16 %v2608
        %v2765 = vunpack.c.l.b16 %v2609
        %v2766 = vunpack.c.h.b16 %v2609
        %v2767 = vunpack.c.l.b16 %v2610
        %v2768 = vunpack.c.h.b16 %v2610
        %v2769 = vunpack.c.l.b16 %v2611
        %v2770 = vunpack.c.h.b16 %v2611
        %v2771 = vunpack.c.l.b16 %v2612
        %v2772 = vunpack.c.h.b16 %v2612
        %v2773 = vunpack.c.l.b16 %v2613
        %v2774 = vunpack.c.h.b16 %v2613
        %v2775 = vunpack.c.l.b16 %v2614
        %v2776 = vunpack.c.h.b16 %v2614
        %v2777 = vunpack.c.l.b16 %v2615
        %v2778 = vunpack.c.h.b16 %v2615
        %v2779 = vunpack.c.l.b16 %v2616
        %v2780 = vunpack.c.h.b16 %v2616
        %v2781 = vunpack.c.l.b16 %v2617
        %v2782 = vunpack.c.h.b16 %v2617
        %v2783 = vunpack.c.l.b16 %v2618
        %v2784 = vunpack.c.h.b16 %v2618
        %v2785 = vunpack.c.l.b16 %v2619
        %v2786 = vunpack.c.h.b16 %v2619
        %v2787 = vunpack.c.l.b16 %v2620
        %v2788 = vunpack.c.h.b16 %v2620
        %v2789 = vunpack.c.l.b16 %v2621
        %v2790 = vunpack.c.h.b16 %v2621
        %v2791 = vunpack.c.l.b16 %v2622
        %v2792 = vunpack.c.h.b16 %v2622
        %v2793 = vunpack.c.l.b16 %v2623
        %v2794 = vunpack.c.h.b16 %v2623
        %v2795 = vunpack.c.l.b16 %v2624
        %v2796 = vunpack.c.h.b16 %v2624
        %v2797 = vunpack.c.l.b16 %v2625
        %v2798 = vunpack.c.h.b16 %v2625
        %v2799 = vunpack.c.l.b16 %v2626
        %v2800 = vunpack.c.h.b16 %v2626
        %v2801 = vunpack.c.l.b16 %v2627
        %v2802 = vunpack.c.h.b16 %v2627
        %v2803 = vunpack.c.l.b16 %v2628
        %v2804 = vunpack.c.h.b16 %v2628
        %v2805 = vunpack.c.l.b16 %v2629
        %v2806 = vunpack.c.h.b16 %v2629
        %v2807 = vunpack.c.l.b16 %v2630
        %v2808 = vunpack.c.h.b16 %v2630
        %v2809 = vunpack.c.l.b16 %v2631
        %v2810 = vunpack.c.h.b16 %v2631
        %v2811 = vunpack.c.l.b16 %v2632
        %v2812 = vunpack.c.h.b16 %v2632
        %v2813 = vunpack.c.l.b16 %v2633
        %v2814 = vunpack.c.h.b16 %v2633
        %v2815 = vunpack.c.l.b16 %v2634
        %v2816 = vunpack.c.h.b16 %v2634
        %v2817 = vunpack.c.l.b16 %v2635
        %v2818 = vunpack.c.h.b16 %v2635
        %v2819 = vunpack.c.l.b16 %v2636
        %v2820 = vunpack.c.h.b16 %v2636
        %v2821 = vunpack.c.l.b16 %v2637
        %v2822 = vunpack.c.h.b16 %v2637
        %v2823 = vunpack.c.l.b16 %v2638
        %v2824 = vunpack.c.h.b16 %v2638
        %v2825 = vunpack.c.l.b16 %v2639
        %v2826 = vunpack.c.h.b16 %v2639
        %v2827 = vunpack.c.l.b16 %v2640
        %v2828 = vunpack.c.h.b16 %v2640
        %v2829 = vunpack.c.l.b16 %v2641
        %v2830 = vunpack.c.h.b16 %v2641
        %v2831 = vunpack.c.l.b16 %v2642
        %v2832 = vunpack.c.h.b16 %v2642
        %v2833 = vunpack.c.l.b16 %v2643
        %v2834 = vunpack.c.h.b16 %v2643
        %v2835 = vunpack.c.l.b16 %v2644
        %v2836 = vunpack.c.h.b16 %v2644
        %v2837 = vunpack.c.l.b16 %v2645
        %v2838 = vunpack.c.h.b16 %v2645
        %v2839 = vunpack.c.l.b16 %v2646
        %v2840 = vunpack.c.h.b16 %v2646
        %v2841 = vunpack.c.l.b16 %v2647
        %v2842 = vunpack.c.h.b16 %v2647
        %v2843 = vunpack.c.l.b16 %v2648
        %v2844 = vunpack.c.h.b16 %v2648
        %v2845 = vunpack.c.l.b16 %v2649
        %v2846 = vunpack.c.h.b16 %v2649
        %v2847 = vunpack.c.l.b16 %v2650
        %v2848 = vunpack.c.h.b16 %v2650
        %v2849 = vunpack.c.l.b16 %v2651
        %v2850 = vunpack.c.h.b16 %v2651
        %v2851 = vunpack.c.l.b16 %v2652
        %v2852 = vunpack.c.h.b16 %v2652
        %v2853 = vunpack.c.l.b16 %v2653
        %v2854 = vunpack.c.h.b16 %v2653
        %v2855 = vunpack.c.l.b16 %v2654
        %v2856 = vunpack.c.h.b16 %v2654
        %v2857 = vunpack.c.l.b16 %v2655
        %v2858 = vunpack.c.h.b16 %v2655
        %v2859 = vunpack.c.l.b16 %v2656
        %v2860 = vunpack.c.h.b16 %v2656
        %v2861 = vpack.c.b16 %v2735, %v2733
        %v2862 = vpack.c.b16 %v2736, %v2734
        %v2863 = vpack.c.b16 %v2739, %v2737
        %v2864 = vpack.c.b16 %v2740, %v2738
        %v2865 = vpack.c.b16 %v2743, %v2741
        %v2866 = vpack.c.b16 %v2744, %v2742
        %v2867 = vpack.c.b16 %v2747, %v2745
        %v2868 = vpack.c.b16 %v2748, %v2746
        %v2869 = vpack.c.b16 %v2751, %v2749
        %v2870 = vpack.c.b16 %v2752, %v2750
        %v2871 = vpack.c.b16 %v2755, %v2753
        %v2872 = vpack.c.b16 %v2756, %v2754
        %v2873 = vpack.c.b16 %v2759, %v2757
        %v2874 = vpack.c.b16 %v2760, %v2758
        %v2875 = vpack.c.b16 %v2763, %v2761
        %v2876 = vpack.c.b16 %v2764, %v2762
        %v2877 = vpack.c.b16 %v2767, %v2765
        %v2878 = vpack.c.b16 %v2768, %v2766
        %v2879 = vpack.c.b16 %v2771, %v2769
        %v2880 = vpack.c.b16 %v2772, %v2770
        %v2881 = vpack.c.b16 %v2775, %v2773
        %v2882 = vpack.c.b16 %v2776, %v2774
        %v2883 = vpack.c.b16 %v2779, %v2777
        %v2884 = vpack.c.b16 %v2780, %v2778
        %v2885 = vpack.c.b16 %v2783, %v2781
        %v2886 = vpack.c.b16 %v2784, %v2782
        %v2887 = vpack.c.b16 %v2787, %v2785
        %v2888 = vpack.c.b16 %v2788, %v2786
        %v2889 = vpack.c.b16 %v2791, %v2789
        %v2890 = vpack.c.b16 %v2792, %v2790
        %v2891 = vpack.c.b16 %v2795, %v2793
        %v2892 = vpack.c.b16 %v2796, %v2794
        %v2893 = vpack.c.b16 %v2799, %v2797
        %v2894 = vpack.c.b16 %v2800, %v2798
        %v2895 = vpack.c.b16 %v2803, %v2801
        %v2896 = vpack.c.b16 %v2804, %v2802
        %v2897 = vpack.c.b16 %v2807, %v2805
        %v2898 = vpack.c.b16 %v2808, %v2806
        %v2899 = vpack.c.b16 %v2811, %v2809
        %v2900 = vpack.c.b16 %v2812, %v2810
        %v2901 = vpack.c.b16 %v2815, %v2813
        %v2902 = vpack.c.b16 %v2816, %v2814
        %v2903 = vpack.c.b16 %v2819, %v2817
        %v2904 = vpack.c.b16 %v2820, %v2818
        %v2905 = vpack.c.b16 %v2823, %v2821
        %v2906 = vpack.c.b16 %v2824, %v2822
        %v2907 = vpack.c.b16 %v2827, %v2825
        %v2908 = vpack.c.b16 %v2828, %v2826
        %v2909 = vpack.c.b16 %v2831, %v2829
        %v2910 = vpack.c.b16 %v2832, %v2830
        %v2911 = vpack.c.b16 %v2835, %v2833
        %v2912 = vpack.c.b16 %v2836, %v2834
        %v2913 = vpack.c.b16 %v2839, %v2837
        %v2914 = vpack.c.b16 %v2840, %v2838
        %v2915 = vpack.c.b16 %v2843, %v2841
        %v2916 = vpack.c.b16 %v2844, %v2842
        %v2917 = vpack.c.b16 %v2847, %v2845
        %v2918 = vpack.c.b16 %v2848, %v2846
        %v2919 = vpack.c.b16 %v2851, %v2849
        %v2920 = vpack.c.b16 %v2852, %v2850
        %v2921 = vpack.c.b16 %v2855, %v2853
        %v2922 = vpack.c.b16 %v2856, %v2854
        %v2923 = vpack.c.b16 %v2859, %v2857
        %v2924 = vpack.c.b16 %v2860, %v2858
        %2989 = vmatprep.subr.bf16.mxu0 %v2876
        %2990 = vmatpush1.bf16.msra.mxu0 %v2875
        %2991 = vmatprep.subr.bf16.mxu0 %v2874
        %2992 = vmatpush1.bf16.msra.mxu0 %v2873
        %2993 = vmatprep.subr.bf16.mxu0 %v2872
        %2994 = vmatpush1.bf16.msra.mxu0 %v2871
        %2995 = vmatprep.subr.bf16.mxu0 %v2870
        %2996 = vmatpush1.bf16.msra.mxu0 %v2869
        %2997 = vmatprep.subr.bf16.mxu0 %v2868
        %2998 = vmatpush1.bf16.msra.mxu0 %v2867
        %2999 = vmatprep.subr.bf16.mxu0 %v2866
        %3000 = vmatpush1.bf16.msra.mxu0 %v2865
        %3001 = vmatprep.subr.bf16.mxu0 %v2864
        %3002 = vmatpush1.bf16.msra.mxu0 %v2863
        %3003 = vmatprep.subr.bf16.mxu0 %v2862
        %3004 = vmatpush1.bf16.msra.mxu0 %v2861
        %3005 = vmatprep.subr.bf16.mxu0 %v2892
        %3006 = vmatpush2.bf16.msra.mxu0 %v2891
        %3007 = vmatprep.subr.bf16.mxu0 %v2890
        %3008 = vmatpush2.bf16.msra.mxu0 %v2889
        %3009 = vmatprep.subr.bf16.mxu0 %v2888
        %3010 = vmatpush2.bf16.msra.mxu0 %v2887
        %3011 = vmatprep.subr.bf16.mxu0 %v2886
        %3012 = vmatpush2.bf16.msra.mxu0 %v2885
        %3013 = vmatprep.subr.bf16.mxu0 %v2884
        %3014 = vmatpush2.bf16.msra.mxu0 %v2883
        %3015 = vmatprep.subr.bf16.mxu0 %v2882
        %3016 = vmatpush2.bf16.msra.mxu0 %v2881
        %3017 = vmatprep.subr.bf16.mxu0 %v2880
        %3018 = vmatpush2.bf16.msra.mxu0 %v2879
        %3019 = vmatprep.subr.bf16.mxu0 %v2878
        %3020 = vmatpush2.bf16.msra.mxu0 %v2877
        %3021 = vmatprep.mubr.bf16.mxu0 %v2590
        %3022 = vmatmul.mubr.bf16.gmra.mxu0 %v2589
        %v3023 = vpop.f32.mrf.mxu0
        %v3024 = vadd.f32 %v2662, %v3023
        %v3025 = vpop.f32.mrf.mxu0
        %v3026 = vadd.f32 %v2666, %v3025
        %v3027 = vpop.f32.mrf.mxu0
        %v3028 = vadd.f32 %v2662, %v3027
        %v3029 = vpop.f32.mrf.mxu0
        %v3030 = vadd.f32 %v2666, %v3029
        %3031 = vdwg.mxu0
        %3032 = vmatprep.subr.bf16.mxu0 %v2908
        %3033 = vmatpush1.bf16.msra.mxu0 %v2907
        %3034 = vmatprep.subr.bf16.mxu0 %v2906
        %3035 = vmatpush1.bf16.msra.mxu0 %v2905
        %3036 = vmatprep.subr.bf16.mxu0 %v2904
        %3037 = vmatpush1.bf16.msra.mxu0 %v2903
        %3038 = vmatprep.subr.bf16.mxu0 %v2902
        %3039 = vmatpush1.bf16.msra.mxu0 %v2901
        %3040 = vmatprep.subr.bf16.mxu0 %v2900
        %3041 = vmatpush1.bf16.msra.mxu0 %v2899
        %3042 = vmatprep.subr.bf16.mxu0 %v2898
        %3043 = vmatpush1.bf16.msra.mxu0 %v2897
        %3044 = vmatprep.subr.bf16.mxu0 %v2896
        %3045 = vmatpush1.bf16.msra.mxu0 %v2895
        %3046 = vmatprep.subr.bf16.mxu0 %v2894
        %3047 = vmatpush1.bf16.msra.mxu0 %v2893
        %3048 = vmatprep.subr.bf16.mxu0 %v2924
        %3049 = vmatpush2.bf16.msra.mxu0 %v2923
        %3050 = vmatprep.subr.bf16.mxu0 %v2922
        %3051 = vmatpush2.bf16.msra.mxu0 %v2921
        %3052 = vmatprep.subr.bf16.mxu0 %v2920
        %3053 = vmatpush2.bf16.msra.mxu0 %v2919
        %3054 = vmatprep.subr.bf16.mxu0 %v2918
        %3055 = vmatpush2.bf16.msra.mxu0 %v2917
        %3056 = vmatprep.subr.bf16.mxu0 %v2916
        %3057 = vmatpush2.bf16.msra.mxu0 %v2915
        %3058 = vmatprep.subr.bf16.mxu0 %v2914
        %3059 = vmatpush2.bf16.msra.mxu0 %v2913
        %3060 = vmatprep.subr.bf16.mxu0 %v2912
        %3061 = vmatpush2.bf16.msra.mxu0 %v2911
        %3062 = vmatprep.subr.bf16.mxu0 %v2910
        %3063 = vmatpush2.bf16.msra.mxu0 %v2909
        %3064 = vmatprep.mubr.bf16.mxu0 %v2592
        %3065 = vmatmul.mubr.bf16.gmra.mxu0 %v2591
        %v3066 = vpop.f32.mrf.mxu0
        %v3067 = vadd.f32 %v3024, %v3066
        %v3068 = vpop.f32.mrf.mxu0
        %v3069 = vadd.f32 %v3026, %v3068
        %v3070 = vpop.f32.mrf.mxu0
        %v3071 = vadd.f32 %v3028, %v3070
        %v3072 = vpop.f32.mrf.mxu0
        %v3073 = vadd.f32 %v3030, %v3072
        %3074 = vdwg.mxu0
        %v3075 = vadd.f32 %v3067, %v2018
        %v3076 = vadd.f32 %v3069, %v2019
        %v3077 = vadd.f32 %v3071, %v2020
        %v3078 = vadd.f32 %v3073, %v2021
        %3079 = vst [vmem:[%s626] sm:$0xff] %v3075
        %3080 = vst [vmem:[%s626 + $0x8] sm:$0xff] %v3076
        %3081 = vst [vmem:[%s626 + $0x10] sm:$0xff] %v3077
        %3082 = vst [vmem:[%s626 + $0x18] sm:$0xff] %v3078
        %s3083 = sand.u32 %s365, 1
        %s3084 = scalar_lea.sflag [#allocation7], %s3083
        %s3085 = sand.u32 %s365, 1
        %s3086 = smul.addr %s3085, 32
        %s3087 = scalar_lea.vmem [#allocation19], %s3086
        // Predicated region
        $region113: #{tpu_custom_call.1} parent=75 // pred_check
          %p3088 = pneg %p375
        $region114: #{tpu_custom_call.1} parent=75 // pred_check_branch
          %3090 = sbr.rel (%p3088) target = $region116
        $region115: #{tpu_custom_call.1} parent=75 // pred_region
          %s3091 = smul.u32 2, %s42
          %s3093 = ssub.s32 512, 512
          %3094 = vsyncadd %s3084, %s3093
          %s3095 = smul.addr %s3091, 2
          %s3096 = smul.addr %s41, 4
          %s3097 = sadd.s32 %s3095, %s3096
          %s3098 = smul.addr %s3097, 128
          %s3099 = scalar_lea.hbm %s14, %s3098
          %s3100 = sshll.u32 %s3087, 4
          %s3101 = int_to_ptr.vmem [resolvable:$true] %s3100
          %3106 = dma.vmem_to_hbm [thread:$0]  %s3101, 512, %s3099, %s3084, 256, 256, 16
        $region116: #{tpu_custom_call.1} parent=75 // pred_fallthru
          _
      $region76: #{tpu_custom_call.1} parent=5 // pred_fallthru
        _
      %p3107 = scmp.le.s32.totalorder 2, %s32
      // Predicated region
      $region117: #{tpu_custom_call.1} parent=5 // pred_check
        %p3108 = pneg %p3107
      $region118: #{tpu_custom_call.1} parent=5 // pred_check_branch
        %3110 = sbr.rel (%p3108) target = $region120
      $region119: #{tpu_custom_call.1} parent=5 // pred_region
        %s3111 = ssub.s32 %s32, 2
        // Predicated region
        $region121: #{tpu_custom_call.1} parent=119 // pred_check
          %p3112 = pneg %p381
        $region122: #{tpu_custom_call.1} parent=119 // pred_check_branch
          %3114 = sbr.rel (%p3112) target = $region124
        $region123: #{tpu_custom_call.1} parent=119 // pred_region
          %s3115 = sand.u32 %s366, 1
          %s3116 = scalar_lea.sflag [#allocation7], %s3115
          %s3117 = sand.u32 %s366, 1
          %s3118 = smul.addr %s3117, 32
          %s3119 = scalar_lea.vmem [#allocation19], %s3118
          %3120 = dma.done %s3116, 512
        $region124: #{tpu_custom_call.1} parent=119 // pred_fallthru
          _
      $region120: #{tpu_custom_call.1} parent=5 // pred_fallthru
        _
    $region6: #{tpu_custom_call.1} parent=1 // loop_footer
      %s36 = sadd.s32 1, %s32
    $region7: #{tpu_custom_call.1} parent=1 // loop_footer_branch
      %31 = sbr.rel target = $region3
    $region8: #{tpu_custom_call.1} parent=1 // loop_exit
      _
    %3121 = vsyncpa [#allocation6], 1
    %s3122 = scalar_lea.sflag [#allocation6], 1
    %3123 = vsyncpa %s3122, 1
    %3124 = vsyncpa [#allocation9], 1
    %s3125 = scalar_lea.sflag [#allocation9], 1
    %3126 = vsyncpa %s3125, 1
    %3127 = vsyncpa [#allocation12], 1
    %3128 = vsyncpa [#allocation15], 1
    %3129 = vsyncpa [#allocation18], 1
    %3130 = vsyncpa [#allocation7], 1
    %s3131 = scalar_lea.sflag [#allocation7], 1
    %3132 = vsyncpa %s3131, 1

</llo_original>
